<compile_context>
chip_gen: v7x
topology: tpu7x:2x2x1
jax: 0.10.0
libtpu: 0.0.40
codegen_flags: <defaults>
</compile_context>

<pallas_src>
import functools

import jax
import jax.numpy as jnp
from jax import lax
from jax.experimental import pallas as pl
from jax.experimental.pallas import tpu as pltpu

VMEM_LIMIT = 64 * 1024 * 1024  # explicit limit; sized for v7x's smaller VMEM as well


def _pick_tile(dim, preferred, align):
    """Largest multiple of `align` that divides `dim` and is <= preferred; else full dim."""
    if dim <= preferred:
        return dim
    t = (preferred // align) * align
    while t >= align:
        if dim % t == 0:
            return t
        t -= align
    return dim


# --------------------- fused rmsnorm + linear (QKV projection) ---------------------

def _norm_linear_kernel(x_ref, g_ref, w_ref, o_ref, *, eps):
    x = x_ref[...].astype(jnp.float32)
    var = jnp.mean(x * x, axis=-1, keepdims=True)
    xn = (x * lax.rsqrt(var + eps) * g_ref[...].astype(jnp.float32)).astype(w_ref.dtype)
    o_ref[...] = jnp.dot(xn, w_ref[...],
                         preferred_element_type=jnp.float32).astype(o_ref.dtype)


def norm_linear(x, g, w, eps=1e-6):
    M, H = x.shape
    H2, N = w.shape
    assert H == H2
    tm = _pick_tile(M, 256, 8)
    tn = _pick_tile(N, 512, 128)
    cost = pl.CostEstimate(flops=2 * M * H * N, transcendentals=M,
                           bytes_accessed=(M * H + H * N + M * N) * 2)
    return pl.pallas_call(
        functools.partial(_norm_linear_kernel, eps=eps),
        out_shape=jax.ShapeDtypeStruct((M, N), x.dtype),
        grid=(M // tm, N // tn),
        in_specs=[pl.BlockSpec((tm, H), lambda i, j: (i, 0)),
                  pl.BlockSpec((1, H), lambda i, j: (0, 0)),
                  pl.BlockSpec((H, tn), lambda i, j: (0, j))],
        out_specs=pl.BlockSpec((tm, tn), lambda i, j: (i, j)),
        compiler_params=pltpu.CompilerParams(
            dimension_semantics=("parallel", "parallel"),
            vmem_limit_bytes=VMEM_LIMIT),
        cost_estimate=cost,
    )(x, g.reshape(1, H), w)


# --------------------- fused output projection + residual add ---------------------

def _linear_residual_kernel(x_ref, w_ref, r_ref, o_ref):
    acc = jnp.dot(x_ref[...], w_ref[...], preferred_element_type=jnp.float32)
    o_ref[...] = (acc + r_ref[...].astype(jnp.float32)).astype(o_ref.dtype)


def linear_residual(x, w, r):
    M, K = x.shape
    K2, N = w.shape
    assert K == K2 and r.shape == (M, N)
    tm = _pick_tile(M, 256, 8)
    tn = _pick_tile(N, 512, 128)
    cost = pl.CostEstimate(flops=2 * M * K * N, transcendentals=0,
                           bytes_accessed=(M * K + K * N + 2 * M * N) * 2)
    return pl.pallas_call(
        _linear_residual_kernel,
        out_shape=jax.ShapeDtypeStruct((M, N), x.dtype),
        grid=(M // tm, N // tn),
        in_specs=[pl.BlockSpec((tm, K), lambda i, j: (i, 0)),
                  pl.BlockSpec((K, tn), lambda i, j: (0, j)),
                  pl.BlockSpec((tm, tn), lambda i, j: (i, j))],
        out_specs=pl.BlockSpec((tm, tn), lambda i, j: (i, j)),
        compiler_params=pltpu.CompilerParams(
            dimension_semantics=("parallel", "parallel"),
            vmem_limit_bytes=VMEM_LIMIT),
        cost_estimate=cost,
    )(x, w, r)


# ------------- flash attention with fused RoPE over the packed QKV slab -------------

def _flash_attn_kernel(q_ref, k_ref, v_ref, cq_ref, sq_ref, ck_ref, sk_ref,
                       o_ref, qr_sc, m_sc, l_sc, acc_sc, *, scale, tq, tk, head_dim):
    qi = pl.program_id(2)
    ki = pl.program_id(3)
    nk = pl.num_programs(3)

    @pl.when(ki == 0)
    def _():
        m_sc[...] = jnp.full_like(m_sc, -jnp.inf)
        l_sc[...] = jnp.zeros_like(l_sc)
        acc_sc[...] = jnp.zeros_like(acc_sc)
        q = q_ref[...].astype(jnp.float32)
        # RoPE (rotate-half folded into a sign-adjusted sin table) + softmax scale.
        qr_sc[...] = (q * cq_ref[...] +
                      pltpu.roll(q, head_dim // 2, 1) * sq_ref[...]) * scale

    # Causal block skip: only KV tiles intersecting the lower triangle do work.
    @pl.when(ki * tk <= qi * tq + (tq - 1))
    def _():
        k = k_ref[...].astype(jnp.float32)
        k = k * ck_ref[...] + pltpu.roll(k, head_dim // 2, 1) * sk_ref[...]
        s = lax.dot_general(qr_sc[...], k, (((1,), (1,)), ((), ())),
                            preferred_element_type=jnp.float32)
        row = qi * tq + lax.broadcasted_iota(jnp.int32, (tq, tk), 0)
        col = ki * tk + lax.broadcasted_iota(jnp.int32, (tq, tk), 1)
        s = jnp.where(row >= col, s, -1e30)
        m_prev = m_sc[...]
        m_new = jnp.maximum(m_prev, jnp.max(s, axis=-1, keepdims=True))
        alpha = jnp.exp(m_prev - m_new)
        p = jnp.exp(s - m_new)
        l_sc[...] = alpha * l_sc[...] + jnp.sum(p, axis=-1, keepdims=True)
        acc_sc[...] = alpha * acc_sc[...] + jnp.dot(
            p.astype(v_ref.dtype), v_ref[...], preferred_element_type=jnp.float32)
        m_sc[...] = m_new

    @pl.when(ki == nk - 1)
    def _():
        o_ref[...] = (acc_sc[...] *
                      pl.reciprocal(l_sc[...], approx=True)).astype(o_ref.dtype)


def flash_attention(qkv, cos, ssin, *, batch, seq, n_heads, head_dim):
    M, three_h = qkv.shape
    H = n_heads * head_dim
    assert three_h == 3 * H and M == batch * seq
    assert head_dim % 128 == 0, "head_dim must be a multiple of 128 for packed-QKV blocks"
    tq = _pick_tile(seq, 256, 8)
    tk = _pick_tile(seq, 256, 8)
    nq, nk = seq // tq, seq // tk
    nH = n_heads
    scale = 1.0 / (head_dim ** 0.5)
    cost = pl.CostEstimate(flops=2 * batch * nH * seq * seq * head_dim,
                           transcendentals=batch * nH * seq * seq // 2,
                           bytes_accessed=(3 * M * H + M * H) * 2)
    kernel = functools.partial(_flash_attn_kernel, scale=scale, tq=tq, tk=tk,
                               head_dim=head_dim)
    return pl.pallas_call(
        kernel,
        out_shape=jax.ShapeDtypeStruct((M, H), qkv.dtype),
        grid=(batch, nH, nq, nk),
        in_specs=[
            # Q / K / V sliced straight out of the packed (M, 3H) projection output.
            pl.BlockSpec((tq, head_dim), lambda b, h, qi, ki: (b * nq + qi, h)),
            pl.BlockSpec((tk, head_dim), lambda b, h, qi, ki: (b * nk + ki, nH + h)),
            pl.BlockSpec((tk, head_dim), lambda b, h, qi, ki: (b * nk + ki, 2 * nH + h)),
            # RoPE tables for the Q rows and K rows of this tile.
            pl.BlockSpec((tq, head_dim), lambda b, h, qi, ki: (qi, 0)),
            pl.BlockSpec((tq, head_dim), lambda b, h, qi, ki: (qi, 0)),
            pl.BlockSpec((tk, head_dim), lambda b, h, qi, ki: (ki, 0)),
            pl.BlockSpec((tk, head_dim), lambda b, h, qi, ki: (ki, 0)),
        ],
        out_specs=pl.BlockSpec((tq, head_dim), lambda b, h, qi, ki: (b * nq + qi, h)),
        scratch_shapes=[
            pltpu.VMEM((tq, head_dim), jnp.float32),  # RoPE'd, pre-scaled Q tile
            pltpu.VMEM((tq, 1), jnp.float32),         # running max
            pltpu.VMEM((tq, 1), jnp.float32),         # running denominator
            pltpu.VMEM((tq, head_dim), jnp.float32),  # output accumulator
        ],
        compiler_params=pltpu.CompilerParams(
            dimension_semantics=("parallel", "parallel", "parallel", "arbitrary"),
            vmem_limit_bytes=VMEM_LIMIT),
        cost_estimate=cost,
    )(qkv, qkv, qkv, cos, ssin, cos, ssin)


# --------------- fused rmsnorm + SwiGLU MLP + residual (I-dim tiled) ---------------

def _norm_mlp_kernel(x_ref, g_ref, wg_ref, wu_ref, wd_ref, o_ref, xn_ref, acc_ref, *, eps):
    j = pl.program_id(1)

    @pl.when(j == 0)
    def _():
        x = x_ref[...].astype(jnp.float32)
        var = jnp.mean(x * x, axis=-1, keepdims=True)
        xn_ref[...] = (x * lax.rsqrt(var + eps) *
                       g_ref[...].astype(jnp.float32)).astype(xn_ref.dtype)
        acc_ref[...] = jnp.zeros_like(acc_ref)

    xn = xn_ref[...]
    gate = jnp.dot(xn, wg_ref[...], preferred_element_type=jnp.float32)
    up = jnp.dot(xn, wu_ref[...], preferred_element_type=jnp.float32)
    h = ((gate * jax.nn.sigmoid(gate)) * up).astype(wd_ref.dtype)   # SiLU(gate) * up, bf16
    acc_ref[...] += jnp.dot(h, wd_ref[...], preferred_element_type=jnp.float32)

    @pl.when(j == pl.num_programs(1) - 1)
    def _():
        o_ref[...] = (acc_ref[...] + x_ref[...].astype(jnp.float32)).astype(o_ref.dtype)


def norm_mlp_residual(x, g, wg, wu, wd, eps=1e-6):
    M, H = x.shape
    H2, I = wg.shape
    assert H == H2 and wd.shape == (I, H)
    tm = _pick_tile(M, 256, 8)
    ti = _pick_tile(I, 512, 128)
    cost = pl.CostEstimate(flops=6 * M * H * I, transcendentals=M * I + M,
                           bytes_accessed=(2 * M * H + 3 * H * I) * 2)
    return pl.pallas_call(
        functools.partial(_norm_mlp_kernel, eps=eps),
        out_shape=jax.ShapeDtypeStruct((M, H), x.dtype),
        grid=(M // tm, I // ti),
        in_specs=[pl.BlockSpec((tm, H), lambda i, j: (i, 0)),
                  pl.BlockSpec((1, H), lambda i, j: (0, 0)),
                  pl.BlockSpec((H, ti), lambda i, j: (0, j)),
                  pl.BlockSpec((H, ti), lambda i, j: (0, j)),
                  pl.BlockSpec((ti, H), lambda i, j: (j, 0))],
        out_specs=pl.BlockSpec((tm, H), lambda i, j: (i, 0)),
        scratch_shapes=[pltpu.VMEM((tm, H), x.dtype),      # cached normalized x tile
                        pltpu.VMEM((tm, H), jnp.float32)], # down-projection accumulator
        compiler_params=pltpu.CompilerParams(
            dimension_semantics=("parallel", "arbitrary"),
            vmem_limit_bytes=VMEM_LIMIT),
        cost_estimate=cost,
    )(x, g.reshape(1, H), wg, wu, wd)


# ------------------------------ final rmsnorm (row-tiled) ------------------------------

def _rmsnorm_kernel(x_ref, g_ref, o_ref, *, eps):
    x = x_ref[...].astype(jnp.float32)
    var = jnp.mean(x * x, axis=-1, keepdims=True)
    o_ref[...] = (x * lax.rsqrt(var + eps) *
                  g_ref[...].astype(jnp.float32)).astype(o_ref.dtype)


def rmsnorm(x, g, eps=1e-6):
    M, H = x.shape
    tm = _pick_tile(M, 512, 8)
    return pl.pallas_call(
        functools.partial(_rmsnorm_kernel, eps=eps),
        out_shape=jax.ShapeDtypeStruct((M, H), x.dtype),
        grid=(M // tm,),
        in_specs=[pl.BlockSpec((tm, H), lambda i: (i, 0)),
                  pl.BlockSpec((1, H), lambda i: (0, 0))],
        out_specs=pl.BlockSpec((tm, H), lambda i: (i, 0)),
        compiler_params=pltpu.CompilerParams(
            dimension_semantics=("parallel",),
            vmem_limit_bytes=VMEM_LIMIT),
    )(x, g.reshape(1, H))


# ------------------------------ glue (plain JAX) ------------------------------

def rope_tables(seq, head_dim, base=10000.0):
    half = head_dim // 2
    inv_freq = 1.0 / (base ** (jnp.arange(0, head_dim, 2, dtype=jnp.float32) / head_dim))
    t = jnp.arange(seq, dtype=jnp.float32)
    freqs = jnp.outer(t, inv_freq)                      # (S, D/2)
    emb = jnp.concatenate([freqs, freqs], axis=-1)      # (S, D)
    cos = jnp.cos(emb)
    sin = jnp.sin(emb)
    # Fold the rotate-half sign into sin so the kernel only needs pltpu.roll:
    #   rope(x) = x*cos + roll(x, D/2)*ssin   with ssin = [-sin_firsthalf, +sin_secondhalf]
    sign = jnp.concatenate([-jnp.ones((half,), jnp.float32),
                            jnp.ones((half,), jnp.float32)])
    return cos, sin * sign


def init_params(key, cfg):
    V, H, I = cfg["vocab"], cfg["hidden"], cfg["inter"]
    wdt = jnp.bfloat16
    keys = jax.random.split(key, 1 + cfg["n_layers"])
    params = {
        "embedding": (jax.random.normal(keys[0], (V, H), jnp.float32) * 0.02).astype(wdt),
        "norm_w": jnp.ones((H,), jnp.float32),
        "layers": [],
    }
    for l in range(cfg["n_layers"]):
        ks = jax.random.split(keys[1 + l], 5)
        params["layers"].append({
            "norm1_w": jnp.ones((H,), jnp.float32),
            "norm2_w": jnp.ones((H,), jnp.float32),
            "w_qkv": (jax.random.normal(ks[0], (H, 3 * H), jnp.float32) * 0.02).astype(wdt),
            "w_o": (jax.random.normal(ks[1], (H, H), jnp.float32) * 0.02).astype(wdt),
            "w_gate": (jax.random.normal(ks[2], (H, I), jnp.float32) * 0.02).astype(wdt),
            "w_up": (jax.random.normal(ks[3], (H, I), jnp.float32) * 0.02).astype(wdt),
            "w_down": (jax.random.normal(ks[4], (I, H), jnp.float32) * 0.02).astype(wdt),
        })
    return params


def llama_like_forward(params, input_ids, cfg):
    B, S = input_ids.shape
    H, nH, D = cfg["hidden"], cfg["n_heads"], cfg["head_dim"]
    assert nH * D == H
    M = B * S

    # Embedding gather left to XLA (jnp.take); everything else runs in Pallas kernels.
    h = jnp.take(params["embedding"], input_ids, axis=0).reshape(M, H)
    cos, ssin = rope_tables(S, D)

    for lp in params["layers"]:
        # --- attention sub-block: h = h + o_proj(attn(rope(qkv(rmsnorm1(h))))) ---
        qkv = norm_linear(h, lp["norm1_w"], lp["w_qkv"])               # (M, 3H)
        attn = flash_attention(qkv, cos, ssin, batch=B, seq=S,
                               n_heads=nH, head_dim=D)                 # (M, H), lane-dense
        h = linear_residual(attn, lp["w_o"], h)                        # residual fused
        # --- MLP sub-block: h = h + down(silu(gate(rms2(h))) * up(rms2(h))) ---
        h = norm_mlp_residual(h, lp["norm2_w"], lp["w_gate"], lp["w_up"], lp["w_down"])

    out = rmsnorm(h, params["norm_w"])
    return out.reshape(B, S, H)                                        # last_hidden_state


if __name__ == "__main__":
    cfg = dict(vocab=64, n_layers=2, hidden=256, n_heads=2, head_dim=128, inter=512)
    key = jax.random.PRNGKey(0)
    k_params, k_ids = jax.random.split(key)
    params = init_params(k_params, cfg)
    input_ids = jax.random.randint(k_ids, (2, 16), 0, cfg["vocab"])    # (batch=2, seq=16)

    fwd = jax.jit(functools.partial(llama_like_forward, cfg=cfg))
    out = jax.block_until_ready(fwd(params, input_ids))
    assert out.shape == (2, 16, cfg["hidden"])
    assert bool(jnp.all(jnp.isfinite(out.astype(jnp.float32))))
    print("KERNEL_OK")
</pallas_src>

<mosaic_0001>
module attributes {stable_mosaic.version = 11 : i64} {
  func.func @_norm_linear_kernel(%arg0: i32, %arg1: i32, %arg2: memref<32x256xbf16, #tpu.memory_space<vmem>>, %arg3: memref<1x256xf32, #tpu.memory_space<vmem>>, %arg4: memref<256x384xbf16, #tpu.memory_space<vmem>>, %arg5: memref<32x384xbf16, #tpu.memory_space<vmem>>) attributes {dimension_semantics = [#tpu.dimension_semantics<parallel>, #tpu.dimension_semantics<parallel>], iteration_bounds = array<i64: 1, 2>, scalar_prefetch = 0 : i64, scratch_operands = 0 : i64, tpu.core_type = #tpu.core_type<tc>, window_params = [{transform_indices = @transform_0, window_bounds = array<i64: 32, 256>}, {pipeline_mode = #tpu.pipeline_mode<synchronous>, transform_indices = @transform_1, window_bounds = array<i64: 1, 256>}, {transform_indices = @transform_2, window_bounds = array<i64: 256, 384>}, {transform_indices = @transform_3, window_bounds = array<i64: 32, 384>}]} {
    %c0 = arith.constant 0 : index
    %c0_0 = arith.constant 0 : index
    %0 = vector.load %arg2[%c0, %c0_0] : memref<32x256xbf16, #tpu.memory_space<vmem>>, vector<32x256xbf16>
    %1 = arith.extf %0 : vector<32x256xbf16> to vector<32x256xf32>
    %2 = arith.mulf %1, %1 : vector<32x256xf32>
    %cst = arith.constant dense<0.000000e+00> : vector<32xf32>
    %3 = vector.multi_reduction <add>, %2, %cst [1] : vector<32x256xf32> to vector<32xf32>
    %4 = vector.shape_cast %3 : vector<32xf32> to vector<32x1xf32>
    %cst_1 = arith.constant 2.560000e+02 : f32
    %5 = vector.broadcast %cst_1 : f32 to vector<32x1xf32>
    %6 = arith.divf %4, %5 : vector<32x1xf32>
    %cst_2 = arith.constant 9.99999997E-7 : f32
    %7 = vector.broadcast %cst_2 : f32 to vector<32x1xf32>
    %8 = arith.addf %6, %7 : vector<32x1xf32>
    %9 = math.rsqrt %8 : vector<32x1xf32>
    %10 = vector.broadcast %9 : vector<32x1xf32> to vector<32x256xf32>
    %11 = arith.mulf %1, %10 : vector<32x256xf32>
    %c0_3 = arith.constant 0 : index
    %c0_4 = arith.constant 0 : index
    %12 = vector.load %arg3[%c0_3, %c0_4] : memref<1x256xf32, #tpu.memory_space<vmem>>, vector<1x256xf32>
    %13 = vector.broadcast %12 : vector<1x256xf32> to vector<32x256xf32>
    %14 = arith.mulf %11, %13 : vector<32x256xf32>
    %15 = arith.truncf %14 : vector<32x256xf32> to vector<32x256xbf16>
    %c0_5 = arith.constant 0 : index
    %c0_6 = arith.constant 0 : index
    %16 = vector.load %arg4[%c0_5, %c0_6] : memref<256x384xbf16, #tpu.memory_space<vmem>>, vector<256x384xbf16>
    %cst_7 = arith.constant dense<0.000000e+00> : vector<32x384xf32>
    %17 = tpu.matmul %15, %16, %cst_7 {dimension_numbers = #tpu.dot_dimension_numbers<[1], [0], [0], [1], [0, 0, 1, 1], [], []>} : vector<32x256xbf16>, vector<256x384xbf16>, vector<32x384xf32> -> vector<32x384xf32>
    %18 = arith.truncf %17 : vector<32x384xf32> to vector<32x384xbf16>
    %c0_8 = arith.constant 0 : index
    %c0_9 = arith.constant 0 : index
    %19 = vector.load %arg5[%c0_8, %c0_9] : memref<32x384xbf16, #tpu.memory_space<vmem>>, vector<32x384xbf16>
    tpu.vector_store %arg5[%c0_8, %c0_9], %18 {strides = array<i32>} : memref<32x384xbf16, #tpu.memory_space<vmem>>, vector<32x384xbf16>,
    return
  }
  func.func @transform_0(%arg0: i32, %arg1: i32) -> (i32, i32) {
    %c0_i32 = arith.constant 0 : i32
    %c0_i32_0 = arith.constant 0 : i32
    return %arg0, %c0_i32 : i32, i32
  }
  func.func @transform_1(%arg0: i32, %arg1: i32) -> (i32, i32) {
    %c0_i32 = arith.constant 0 : i32
    %c0_i32_0 = arith.constant 0 : i32
    %c0_i32_1 = arith.constant 0 : i32
    return %c0_i32, %c0_i32_0 : i32, i32
  }
  func.func @transform_2(%arg0: i32, %arg1: i32) -> (i32, i32) {
    %c0_i32 = arith.constant 0 : i32
    %c0_i32_0 = arith.constant 0 : i32
    return %c0_i32, %arg1 : i32, i32
  }
  func.func @transform_3(%arg0: i32, %arg1: i32) -> (i32, i32) {
    %c0_i32 = arith.constant 0 : i32
    return %arg0, %arg1 : i32, i32
  }
}

module attributes {stable_mosaic.version = 11 : i64} {
  func.func @_flash_attn_kernel(%arg0: i32, %arg1: i32, %arg2: i32, %arg3: i32, %arg4: memref<16x128xbf16, #tpu.memory_space<vmem>>, %arg5: memref<16x128xbf16, #tpu.memory_space<vmem>>, %arg6: memref<16x128xbf16, #tpu.memory_space<vmem>>, %arg7: memref<16x128xf32, #tpu.memory_space<vmem>>, %arg8: memref<16x128xf32, #tpu.memory_space<vmem>>, %arg9: memref<16x128xf32, #tpu.memory_space<vmem>>, %arg10: memref<16x128xf32, #tpu.memory_space<vmem>>, %arg11: memref<16x128xbf16, #tpu.memory_space<vmem>>, %arg12: memref<16x128xf32, #tpu.memory_space<vmem>>, %arg13: memref<16x1xf32, #tpu.memory_space<vmem>>, %arg14: memref<16x1xf32, #tpu.memory_space<vmem>>, %arg15: memref<16x128xf32, #tpu.memory_space<vmem>>) attributes {dimension_semantics = [#tpu.dimension_semantics<parallel>, #tpu.dimension_semantics<parallel>, #tpu.dimension_semantics<parallel>, #tpu.dimension_semantics<arbitrary>], iteration_bounds = array<i64: 2, 2, 1, 1>, scalar_prefetch = 0 : i64, scratch_operands = 4 : i64, tpu.core_type = #tpu.core_type<tc>, window_params = [{transform_indices = @transform_0, window_bounds = array<i64: 16, 128>}, {transform_indices = @transform_1, window_bounds = array<i64: 16, 128>}, {transform_indices = @transform_2, window_bounds = array<i64: 16, 128>}, {transform_indices = @transform_3, window_bounds = array<i64: 16, 128>}, {transform_indices = @transform_4, window_bounds = array<i64: 16, 128>}, {transform_indices = @transform_5, window_bounds = array<i64: 16, 128>}, {transform_indices = @transform_6, window_bounds = array<i64: 16, 128>}, {transform_indices = @transform_7, window_bounds = array<i64: 16, 128>}]} {
    %c0_i32 = arith.constant 0 : i32
    %0 = arith.cmpi eq, %arg3, %c0_i32 : i32
    %1 = arith.extui %0 : i1 to i32
    %c0_i32_0 = arith.constant 0 : i32
    %2 = arith.cmpi ne, %1, %c0_i32_0 : i32
    scf.if %2 {
      %cst = arith.constant 0xFF800000 : f32
      %12 = vector.broadcast %cst : f32 to vector<16x1xf32>
      %c0 = arith.constant 0 : index
      %c0_5 = arith.constant 0 : index
      %13 = vector.load %arg13[%c0, %c0_5] : memref<16x1xf32, #tpu.memory_space<vmem>>, vector<16x1xf32>
      tpu.vector_store %arg13[%c0, %c0_5], %12 {strides = array<i32>} : memref<16x1xf32, #tpu.memory_space<vmem>>, vector<16x1xf32>,
      %cst_6 = arith.constant 0.000000e+00 : f32
      %14 = vector.broadcast %cst_6 : f32 to vector<16x1xf32>
      %c0_7 = arith.constant 0 : index
      %c0_8 = arith.constant 0 : index
      %15 = vector.load %arg14[%c0_7, %c0_8] : memref<16x1xf32, #tpu.memory_space<vmem>>, vector<16x1xf32>
      tpu.vector_store %arg14[%c0_7, %c0_8], %14 {strides = array<i32>} : memref<16x1xf32, #tpu.memory_space<vmem>>, vector<16x1xf32>,
      %cst_9 = arith.constant 0.000000e+00 : f32
      %16 = vector.broadcast %cst_9 : f32 to vector<16x128xf32>
      %c0_10 = arith.constant 0 : index
      %c0_11 = arith.constant 0 : index
      %17 = vector.load %arg15[%c0_10, %c0_11] : memref<16x128xf32, #tpu.memory_space<vmem>>, vector<16x128xf32>
      tpu.vector_store %arg15[%c0_10, %c0_11], %16 {strides = array<i32>} : memref<16x128xf32, #tpu.memory_space<vmem>>, vector<16x128xf32>,
      %c0_12 = arith.constant 0 : index
      %c0_13 = arith.constant 0 : index
      %18 = vector.load %arg4[%c0_12, %c0_13] : memref<16x128xbf16, #tpu.memory_space<vmem>>, vector<16x128xbf16>
      %19 = arith.extf %18 : vector<16x128xbf16> to vector<16x128xf32>
      %c0_14 = arith.constant 0 : index
      %c0_15 = arith.constant 0 : index
      %20 = vector.load %arg7[%c0_14, %c0_15] : memref<16x128xf32, #tpu.memory_space<vmem>>, vector<16x128xf32>
      %21 = arith.mulf %19, %20 : vector<16x128xf32>
      %c64_i32 = arith.constant 64 : i32
      %22 = tpu.dynamic_rotate %19 by %c64_i32 dim 1 : vector<16x128xf32>, i32 -> vector<16x128xf32>
      %c0_16 = arith.constant 0 : index
      %c0_17 = arith.constant 0 : index
      %23 = vector.load %arg8[%c0_16, %c0_17] : memref<16x128xf32, #tpu.memory_space<vmem>>, vector<16x128xf32>
      %24 = arith.mulf %22, %23 : vector<16x128xf32>
      %25 = arith.addf %21, %24 : vector<16x128xf32>
      %cst_18 = arith.constant 0.0883883461 : f32
      %26 = vector.broadcast %cst_18 : f32 to vector<16x128xf32>
      %27 = arith.mulf %25, %26 : vector<16x128xf32>
      %c0_19 = arith.constant 0 : index
      %c0_20 = arith.constant 0 : index
      %28 = vector.load %arg12[%c0_19, %c0_20] : memref<16x128xf32, #tpu.memory_space<vmem>>, vector<16x128xf32>
      tpu.vector_store %arg12[%c0_19, %c0_20], %27 {strides = array<i32>} : memref<16x128xf32, #tpu.memory_space<vmem>>, vector<16x128xf32>,
    } else {
    }
    %c16_i32 = arith.constant 16 : i32
    %3 = arith.muli %arg3, %c16_i32 : i32
    %c16_i32_1 = arith.constant 16 : i32
    %4 = arith.muli %arg2, %c16_i32_1 : i32
    %c15_i32 = arith.constant 15 : i32
    %5 = arith.addi %4, %c15_i32 : i32
    %6 = arith.cmpi sle, %3, %5 : i32
    %7 = arith.extui %6 : i1 to i32
    %c0_i32_2 = arith.constant 0 : i32
    %8 = arith.cmpi ne, %7, %c0_i32_2 : i32
    scf.if %8 {
      %c0 = arith.constant 0 : index
      %c0_5 = arith.constant 0 : index
      %12 = vector.load %arg5[%c0, %c0_5] : memref<16x128xbf16, #tpu.memory_space<vmem>>, vector<16x128xbf16>
      %13 = arith.extf %12 : vector<16x128xbf16> to vector<16x128xf32>
      %c0_6 = arith.constant 0 : index
      %c0_7 = arith.constant 0 : index
      %14 = vector.load %arg9[%c0_6, %c0_7] : memref<16x128xf32, #tpu.memory_space<vmem>>, vector<16x128xf32>
      %15 = arith.mulf %13, %14 : vector<16x128xf32>
      %c64_i32 = arith.constant 64 : i32
      %16 = tpu.dynamic_rotate %13 by %c64_i32 dim 1 : vector<16x128xf32>, i32 -> vector<16x128xf32>
      %c0_8 = arith.constant 0 : index
      %c0_9 = arith.constant 0 : index
      %17 = vector.load %arg10[%c0_8, %c0_9] : memref<16x128xf32, #tpu.memory_space<vmem>>, vector<16x128xf32>
      %18 = arith.mulf %16, %17 : vector<16x128xf32>
      %19 = arith.addf %15, %18 : vector<16x128xf32>
      %c0_10 = arith.constant 0 : index
      %c0_11 = arith.constant 0 : index
      %20 = vector.load %arg12[%c0_10, %c0_11] : memref<16x128xf32, #tpu.memory_space<vmem>>, vector<16x128xf32>
      %cst = arith.constant dense<0.000000e+00> : vector<16x16xf32>
      %21 = tpu.matmul %20, %19, %cst {dimension_numbers = #tpu.dot_dimension_numbers<[1], [1], [0], [0], [0, 0, 1, 0], [], []>} : vector<16x128xf32>, vector<16x128xf32>, vector<16x16xf32> -> vector<16x16xf32>
      %c16_i32_12 = arith.constant 16 : i32
      %22 = arith.muli %arg2, %c16_i32_12 : i32
      %23 = tpu.iota {dimensions = array<i32: 0>} : vector<16x16xi32>
      %24 = vector.broadcast %22 : i32 to vector<16x16xi32>
      %25 = arith.addi %24, %23 : vector<16x16xi32>
      %c16_i32_13 = arith.constant 16 : i32
      %26 = arith.muli %arg3, %c16_i32_13 : i32
      %27 = tpu.iota {dimensions = array<i32: 1>} : vector<16x16xi32>
      %28 = vector.broadcast %26 : i32 to vector<16x16xi32>
      %29 = arith.addi %28, %27 : vector<16x16xi32>
      %30 = arith.cmpi sge, %25, %29 : vector<16x16xi32>
      %cst_14 = arith.constant -1.000000e+30 : f32
      %31 = vector.broadcast %cst_14 : f32 to vector<16x16xf32>
      %32 = arith.select %30, %21, %31 : vector<16x16xi1>, vector<16x16xf32>
      %c0_15 = arith.constant 0 : index
      %c0_16 = arith.constant 0 : index
      %33 = vector.load %arg13[%c0_15, %c0_16] : memref<16x1xf32, #tpu.memory_space<vmem>>, vector<16x1xf32>
      %cst_17 = arith.constant dense<0xFF800000> : vector<16xf32>
      %34 = vector.multi_reduction <maximumf>, %32, %cst_17 [1] : vector<16x16xf32> to vector<16xf32>
      %35 = vector.shape_cast %34 : vector<16xf32> to vector<16x1xf32>
      %36 = arith.maximumf %33, %35 : vector<16x1xf32>
      %37 = arith.subf %33, %36 : vector<16x1xf32>
      %38 = math.exp %37 : vector<16x1xf32>
      %39 = vector.broadcast %36 : vector<16x1xf32> to vector<16x16xf32>
      %40 = arith.subf %32, %39 : vector<16x16xf32>
      %41 = math.exp %40 : vector<16x16xf32>
      %c0_18 = arith.constant 0 : index
      %c0_19 = arith.constant 0 : index
      %42 = vector.load %arg14[%c0_18, %c0_19] : memref<16x1xf32, #tpu.memory_space<vmem>>, vector<16x1xf32>
      %43 = arith.mulf %38, %42 : vector<16x1xf32>
      %cst_20 = arith.constant dense<0.000000e+00> : vector<16xf32>
      %44 = vector.multi_reduction <add>, %41, %cst_20 [1] : vector<16x16xf32> to vector<16xf32>
      %45 = vector.shape_cast %44 : vector<16xf32> to vector<16x1xf32>
      %46 = arith.addf %43, %45 : vector<16x1xf32>
      %c0_21 = arith.constant 0 : index
      %c0_22 = arith.constant 0 : index
      %47 = vector.load %arg14[%c0_21, %c0_22] : memref<16x1xf32, #tpu.memory_space<vmem>>, vector<16x1xf32>
      tpu.vector_store %arg14[%c0_21, %c0_22], %46 {strides = array<i32>} : memref<16x1xf32, #tpu.memory_space<vmem>>, vector<16x1xf32>,
      %c0_23 = arith.constant 0 : index
      %c0_24 = arith.constant 0 : index
      %48 = vector.load %arg15[%c0_23, %c0_24] : memref<16x128xf32, #tpu.memory_space<vmem>>, vector<16x128xf32>
      %49 = vector.broadcast %38 : vector<16x1xf32> to vector<16x128xf32>
      %50 = arith.mulf %49, %48 : vector<16x128xf32>
      %51 = arith.truncf %41 : vector<16x16xf32> to vector<16x16xbf16>
      %c0_25 = arith.constant 0 : index
      %c0_26 = arith.constant 0 : index
      %52 = vector.load %arg6[%c0_25, %c0_26] : memref<16x128xbf16, #tpu.memory_space<vmem>>, vector<16x128xbf16>
      %cst_27 = arith.constant dense<0.000000e+00> : vector<16x128xf32>
      %53 = tpu.matmul %51, %52, %cst_27 {dimension_numbers = #tpu.dot_dimension_numbers<[1], [0], [0], [1], [0, 0, 1, 1], [], []>} : vector<16x16xbf16>, vector<16x128xbf16>, vector<16x128xf32> -> vector<16x128xf32>
      %54 = arith.addf %50, %53 : vector<16x128xf32>
      %c0_28 = arith.constant 0 : index
      %c0_29 = arith.constant 0 : index
      %55 = vector.load %arg15[%c0_28, %c0_29] : memref<16x128xf32, #tpu.memory_space<vmem>>, vector<16x128xf32>
      tpu.vector_store %arg15[%c0_28, %c0_29], %54 {strides = array<i32>} : memref<16x128xf32, #tpu.memory_space<vmem>>, vector<16x128xf32>,
      %c0_30 = arith.constant 0 : index
      %c0_31 = arith.constant 0 : index
      %56 = vector.load %arg13[%c0_30, %c0_31] : memref<16x1xf32, #tpu.memory_space<vmem>>, vector<16x1xf32>
      tpu.vector_store %arg13[%c0_30, %c0_31], %36 {strides = array<i32>} : memref<16x1xf32, #tpu.memory_space<vmem>>, vector<16x1xf32>,
    } else {
    }
    %c0_i32_3 = arith.constant 0 : i32
    %9 = arith.cmpi eq, %arg3, %c0_i32_3 : i32
    %10 = arith.extui %9 : i1 to i32
    %c0_i32_4 = arith.constant 0 : i32
    %11 = arith.cmpi ne, %10, %c0_i32_4 : i32
    scf.if %11 {
      %c0 = arith.constant 0 : index
      %c0_5 = arith.constant 0 : index
      %12 = vector.load %arg15[%c0, %c0_5] : memref<16x128xf32, #tpu.memory_space<vmem>>, vector<16x128xf32>
      %c0_6 = arith.constant 0 : index
      %c0_7 = arith.constant 0 : index
      %13 = vector.load %arg14[%c0_6, %c0_7] : memref<16x1xf32, #tpu.memory_space<vmem>>, vector<16x1xf32>
      %14 = tpu.reciprocal %13 {approx = true} : vector<16x1xf32> -> vector<16x1xf32>
      %15 = vector.broadcast %14 : vector<16x1xf32> to vector<16x128xf32>
      %16 = arith.mulf %12, %15 : vector<16x128xf32>
      %17 = arith.truncf %16 : vector<16x128xf32> to vector<16x128xbf16>
      %c0_8 = arith.constant 0 : index
      %c0_9 = arith.constant 0 : index
      %18 = vector.load %arg11[%c0_8, %c0_9] : memref<16x128xbf16, #tpu.memory_space<vmem>>, vector<16x128xbf16>
      tpu.vector_store %arg11[%c0_8, %c0_9], %17 {strides = array<i32>} : memref<16x128xbf16, #tpu.memory_space<vmem>>, vector<16x128xbf16>,
    } else {
    }
    return
  }
  func.func @transform_0(%arg0: i32, %arg1: i32, %arg2: i32, %arg3: i32) -> (i32, i32) {
    %c1_i32 = arith.constant 1 : i32
    %0 = arith.muli %arg0, %c1_i32 : i32
    %1 = arith.addi %0, %arg2 : i32
    %c0_i32 = arith.constant 0 : i32
    return %1, %arg1 : i32, i32
  }
  func.func @transform_1(%arg0: i32, %arg1: i32, %arg2: i32, %arg3: i32) -> (i32, i32) {
    %c1_i32 = arith.constant 1 : i32
    %0 = arith.muli %arg0, %c1_i32 : i32
    %1 = arith.addi %0, %arg3 : i32
    %c2_i32 = arith.constant 2 : i32
    %2 = arith.addi %c2_i32, %arg1 : i32
    %c0_i32 = arith.constant 0 : i32
    return %1, %2 : i32, i32
  }
  func.func @transform_2(%arg0: i32, %arg1: i32, %arg2: i32, %arg3: i32) -> (i32, i32) {
    %c1_i32 = arith.constant 1 : i32
    %0 = arith.muli %arg0, %c1_i32 : i32
    %1 = arith.addi %0, %arg3 : i32
    %c4_i32 = arith.constant 4 : i32
    %2 = arith.addi %c4_i32, %arg1 : i32
    %c0_i32 = arith.constant 0 : i32
    return %1, %2 : i32, i32
  }
  func.func @transform_3(%arg0: i32, %arg1: i32, %arg2: i32, %arg3: i32) -> (i32, i32) {
    %c0_i32 = arith.constant 0 : i32
    %c0_i32_0 = arith.constant 0 : i32
    return %arg2, %c0_i32 : i32, i32
  }
  func.func @transform_4(%arg0: i32, %arg1: i32, %arg2: i32, %arg3: i32) -> (i32, i32) {
    %c0_i32 = arith.constant 0 : i32
    %c0_i32_0 = arith.constant 0 : i32
    return %arg2, %c0_i32 : i32, i32
  }
  func.func @transform_5(%arg0: i32, %arg1: i32, %arg2: i32, %arg3: i32) -> (i32, i32) {
    %c0_i32 = arith.constant 0 : i32
    %c0_i32_0 = arith.constant 0 : i32
    return %arg3, %c0_i32 : i32, i32
  }
  func.func @transform_6(%arg0: i32, %arg1: i32, %arg2: i32, %arg3: i32) -> (i32, i32) {
    %c0_i32 = arith.constant 0 : i32
    %c0_i32_0 = arith.constant 0 : i32
    return %arg3, %c0_i32 : i32, i32
  }
  func.func @transform_7(%arg0: i32, %arg1: i32, %arg2: i32, %arg3: i32) -> (i32, i32) {
    %c1_i32 = arith.constant 1 : i32
    %0 = arith.muli %arg0, %c1_i32 : i32
    %1 = arith.addi %0, %arg2 : i32
    %c0_i32 = arith.constant 0 : i32
    return %1, %arg1 : i32, i32
  }
}

module attributes {stable_mosaic.version = 11 : i64} {
  func.func @_linear_residual_kernel(%arg0: i32, %arg1: i32, %arg2: memref<32x256xbf16, #tpu.memory_space<vmem>>, %arg3: memref<256x256xbf16, #tpu.memory_space<vmem>>, %arg4: memref<32x256xbf16, #tpu.memory_space<vmem>>, %arg5: memref<32x256xbf16, #tpu.memory_space<vmem>>) attributes {dimension_semantics = [#tpu.dimension_semantics<parallel>, #tpu.dimension_semantics<parallel>], iteration_bounds = array<i64: 1, 1>, scalar_prefetch = 0 : i64, scratch_operands = 0 : i64, tpu.core_type = #tpu.core_type<tc>, window_params = [{transform_indices = @transform_0, window_bounds = array<i64: 32, 256>}, {transform_indices = @transform_1, window_bounds = array<i64: 256, 256>}, {transform_indices = @transform_2, window_bounds = array<i64: 32, 256>}, {transform_indices = @transform_3, window_bounds = array<i64: 32, 256>}]} {
    %c0 = arith.constant 0 : index
    %c0_0 = arith.constant 0 : index
    %0 = vector.load %arg2[%c0, %c0_0] : memref<32x256xbf16, #tpu.memory_space<vmem>>, vector<32x256xbf16>
    %c0_1 = arith.constant 0 : index
    %c0_2 = arith.constant 0 : index
    %1 = vector.load %arg3[%c0_1, %c0_2] : memref<256x256xbf16, #tpu.memory_space<vmem>>, vector<256x256xbf16>
    %cst = arith.constant dense<0.000000e+00> : vector<32x256xf32>
    %2 = tpu.matmul %0, %1, %cst {dimension_numbers = #tpu.dot_dimension_numbers<[1], [0], [0], [1], [0, 0, 1, 1], [], []>} : vector<32x256xbf16>, vector<256x256xbf16>, vector<32x256xf32> -> vector<32x256xf32>
    %c0_3 = arith.constant 0 : index
    %c0_4 = arith.constant 0 : index
    %3 = vector.load %arg4[%c0_3, %c0_4] : memref<32x256xbf16, #tpu.memory_space<vmem>>, vector<32x256xbf16>
    %4 = arith.extf %3 : vector<32x256xbf16> to vector<32x256xf32>
    %5 = arith.addf %2, %4 : vector<32x256xf32>
    %6 = arith.truncf %5 : vector<32x256xf32> to vector<32x256xbf16>
    %c0_5 = arith.constant 0 : index
    %c0_6 = arith.constant 0 : index
    %7 = vector.load %arg5[%c0_5, %c0_6] : memref<32x256xbf16, #tpu.memory_space<vmem>>, vector<32x256xbf16>
    tpu.vector_store %arg5[%c0_5, %c0_6], %6 {strides = array<i32>} : memref<32x256xbf16, #tpu.memory_space<vmem>>, vector<32x256xbf16>,
    return
  }
  func.func @transform_0(%arg0: i32, %arg1: i32) -> (i32, i32) {
    %c0_i32 = arith.constant 0 : i32
    %c0_i32_0 = arith.constant 0 : i32
    return %arg0, %c0_i32 : i32, i32
  }
  func.func @transform_1(%arg0: i32, %arg1: i32) -> (i32, i32) {
    %c0_i32 = arith.constant 0 : i32
    %c0_i32_0 = arith.constant 0 : i32
    return %c0_i32, %arg1 : i32, i32
  }
  func.func @transform_2(%arg0: i32, %arg1: i32) -> (i32, i32) {
    %c0_i32 = arith.constant 0 : i32
    return %arg0, %arg1 : i32, i32
  }
  func.func @transform_3(%arg0: i32, %arg1: i32) -> (i32, i32) {
    %c0_i32 = arith.constant 0 : i32
    return %arg0, %arg1 : i32, i32
  }
}

module attributes {stable_mosaic.version = 11 : i64} {
  func.func @_norm_mlp_kernel(%arg0: i32, %arg1: i32, %arg2: memref<32x256xbf16, #tpu.memory_space<vmem>>, %arg3: memref<1x256xf32, #tpu.memory_space<vmem>>, %arg4: memref<256x512xbf16, #tpu.memory_space<vmem>>, %arg5: memref<256x512xbf16, #tpu.memory_space<vmem>>, %arg6: memref<512x256xbf16, #tpu.memory_space<vmem>>, %arg7: memref<32x256xbf16, #tpu.memory_space<vmem>>, %arg8: memref<32x256xbf16, #tpu.memory_space<vmem>>, %arg9: memref<32x256xf32, #tpu.memory_space<vmem>>) attributes {dimension_semantics = [#tpu.dimension_semantics<parallel>, #tpu.dimension_semantics<arbitrary>], iteration_bounds = array<i64: 1, 1>, scalar_prefetch = 0 : i64, scratch_operands = 2 : i64, tpu.core_type = #tpu.core_type<tc>, window_params = [{transform_indices = @transform_0, window_bounds = array<i64: 32, 256>}, {pipeline_mode = #tpu.pipeline_mode<synchronous>, transform_indices = @transform_1, window_bounds = array<i64: 1, 256>}, {transform_indices = @transform_2, window_bounds = array<i64: 256, 512>}, {transform_indices = @transform_3, window_bounds = array<i64: 256, 512>}, {transform_indices = @transform_4, window_bounds = array<i64: 512, 256>}, {transform_indices = @transform_5, window_bounds = array<i64: 32, 256>}]} {
    %c0_i32 = arith.constant 0 : i32
    %0 = arith.cmpi eq, %arg1, %c0_i32 : i32
    %1 = arith.extui %0 : i1 to i32
    %c0_i32_0 = arith.constant 0 : i32
    %2 = arith.cmpi ne, %1, %c0_i32_0 : i32
    scf.if %2 {
      %c0_17 = arith.constant 0 : index
      %c0_18 = arith.constant 0 : index
      %24 = vector.load %arg2[%c0_17, %c0_18] : memref<32x256xbf16, #tpu.memory_space<vmem>>, vector<32x256xbf16>
      %25 = arith.extf %24 : vector<32x256xbf16> to vector<32x256xf32>
      %26 = arith.mulf %25, %25 : vector<32x256xf32>
      %cst_19 = arith.constant dense<0.000000e+00> : vector<32xf32>
      %27 = vector.multi_reduction <add>, %26, %cst_19 [1] : vector<32x256xf32> to vector<32xf32>
      %28 = vector.shape_cast %27 : vector<32xf32> to vector<32x1xf32>
      %cst_20 = arith.constant 2.560000e+02 : f32
      %29 = vector.broadcast %cst_20 : f32 to vector<32x1xf32>
      %30 = arith.divf %28, %29 : vector<32x1xf32>
      %cst_21 = arith.constant 9.99999997E-7 : f32
      %31 = vector.broadcast %cst_21 : f32 to vector<32x1xf32>
      %32 = arith.addf %30, %31 : vector<32x1xf32>
      %33 = math.rsqrt %32 : vector<32x1xf32>
      %34 = vector.broadcast %33 : vector<32x1xf32> to vector<32x256xf32>
      %35 = arith.mulf %25, %34 : vector<32x256xf32>
      %c0_22 = arith.constant 0 : index
      %c0_23 = arith.constant 0 : index
      %36 = vector.load %arg3[%c0_22, %c0_23] : memref<1x256xf32, #tpu.memory_space<vmem>>, vector<1x256xf32>
      %37 = vector.broadcast %36 : vector<1x256xf32> to vector<32x256xf32>
      %38 = arith.mulf %35, %37 : vector<32x256xf32>
      %39 = arith.truncf %38 : vector<32x256xf32> to vector<32x256xbf16>
      %c0_24 = arith.constant 0 : index
      %c0_25 = arith.constant 0 : index
      %40 = vector.load %arg8[%c0_24, %c0_25] : memref<32x256xbf16, #tpu.memory_space<vmem>>, vector<32x256xbf16>
      tpu.vector_store %arg8[%c0_24, %c0_25], %39 {strides = array<i32>} : memref<32x256xbf16, #tpu.memory_space<vmem>>, vector<32x256xbf16>,
      %cst_26 = arith.constant 0.000000e+00 : f32
      %41 = vector.broadcast %cst_26 : f32 to vector<32x256xf32>
      %c0_27 = arith.constant 0 : index
      %c0_28 = arith.constant 0 : index
      %42 = vector.load %arg9[%c0_27, %c0_28] : memref<32x256xf32, #tpu.memory_space<vmem>>, vector<32x256xf32>
      tpu.vector_store %arg9[%c0_27, %c0_28], %41 {strides = array<i32>} : memref<32x256xf32, #tpu.memory_space<vmem>>, vector<32x256xf32>,
    } else {
    }
    %c0 = arith.constant 0 : index
    %c0_1 = arith.constant 0 : index
    %3 = vector.load %arg8[%c0, %c0_1] : memref<32x256xbf16, #tpu.memory_space<vmem>>, vector<32x256xbf16>
    %c0_2 = arith.constant 0 : index
    %c0_3 = arith.constant 0 : index
    %4 = vector.load %arg4[%c0_2, %c0_3] : memref<256x512xbf16, #tpu.memory_space<vmem>>, vector<256x512xbf16>
    %cst = arith.constant dense<0.000000e+00> : vector<32x512xf32>
    %5 = tpu.matmul %3, %4, %cst {dimension_numbers = #tpu.dot_dimension_numbers<[1], [0], [0], [1], [0, 0, 1, 1], [], []>} : vector<32x256xbf16>, vector<256x512xbf16>, vector<32x512xf32> -> vector<32x512xf32>
    %c0_4 = arith.constant 0 : index
    %c0_5 = arith.constant 0 : index
    %6 = vector.load %arg5[%c0_4, %c0_5] : memref<256x512xbf16, #tpu.memory_space<vmem>>, vector<256x512xbf16>
    %cst_6 = arith.constant dense<0.000000e+00> : vector<32x512xf32>
    %7 = tpu.matmul %3, %6, %cst_6 {dimension_numbers = #tpu.dot_dimension_numbers<[1], [0], [0], [1], [0, 0, 1, 1], [], []>} : vector<32x256xbf16>, vector<256x512xbf16>, vector<32x512xf32> -> vector<32x512xf32>
    %8 = arith.negf %5 : vector<32x512xf32>
    %9 = math.exp %8 : vector<32x512xf32>
    %cst_7 = arith.constant 1.000000e+00 : f32
    %10 = vector.broadcast %cst_7 : f32 to vector<32x512xf32>
    %11 = arith.addf %10, %9 : vector<32x512xf32>
    %12 = arith.divf %10, %11 : vector<32x512xf32>
    %13 = arith.mulf %5, %12 : vector<32x512xf32>
    %14 = arith.mulf %13, %7 : vector<32x512xf32>
    %15 = arith.truncf %14 : vector<32x512xf32> to vector<32x512xbf16>
    %c0_8 = arith.constant 0 : index
    %c0_9 = arith.constant 0 : index
    %16 = vector.load %arg9[%c0_8, %c0_9] : memref<32x256xf32, #tpu.memory_space<vmem>>, vector<32x256xf32>
    %c0_10 = arith.constant 0 : index
    %c0_11 = arith.constant 0 : index
    %17 = vector.load %arg6[%c0_10, %c0_11] : memref<512x256xbf16, #tpu.memory_space<vmem>>, vector<512x256xbf16>
    %cst_12 = arith.constant dense<0.000000e+00> : vector<32x256xf32>
    %18 = tpu.matmul %15, %17, %cst_12 {dimension_numbers = #tpu.dot_dimension_numbers<[1], [0], [0], [1], [0, 0, 1, 1], [], []>} : vector<32x512xbf16>, vector<512x256xbf16>, vector<32x256xf32> -> vector<32x256xf32>
    %19 = arith.addf %16, %18 : vector<32x256xf32>
    %c0_13 = arith.constant 0 : index
    %c0_14 = arith.constant 0 : index
    %20 = vector.load %arg9[%c0_13, %c0_14] : memref<32x256xf32, #tpu.memory_space<vmem>>, vector<32x256xf32>
    tpu.vector_store %arg9[%c0_13, %c0_14], %19 {strides = array<i32>} : memref<32x256xf32, #tpu.memory_space<vmem>>, vector<32x256xf32>,
    %c0_i32_15 = arith.constant 0 : i32
    %21 = arith.cmpi eq, %arg1, %c0_i32_15 : i32
    %22 = arith.extui %21 : i1 to i32
    %c0_i32_16 = arith.constant 0 : i32
    %23 = arith.cmpi ne, %22, %c0_i32_16 : i32
    scf.if %23 {
      %c0_17 = arith.constant 0 : index
      %c0_18 = arith.constant 0 : index
      %24 = vector.load %arg9[%c0_17, %c0_18] : memref<32x256xf32, #tpu.memory_space<vmem>>, vector<32x256xf32>
      %c0_19 = arith.constant 0 : index
      %c0_20 = arith.constant 0 : index
      %25 = vector.load %arg2[%c0_19, %c0_20] : memref<32x256xbf16, #tpu.memory_space<vmem>>, vector<32x256xbf16>
      %26 = arith.extf %25 : vector<32x256xbf16> to vector<32x256xf32>
      %27 = arith.addf %24, %26 : vector<32x256xf32>
      %28 = arith.truncf %27 : vector<32x256xf32> to vector<32x256xbf16>
      %c0_21 = arith.constant 0 : index
      %c0_22 = arith.constant 0 : index
      %29 = vector.load %arg7[%c0_21, %c0_22] : memref<32x256xbf16, #tpu.memory_space<vmem>>, vector<32x256xbf16>
      tpu.vector_store %arg7[%c0_21, %c0_22], %28 {strides = array<i32>} : memref<32x256xbf16, #tpu.memory_space<vmem>>, vector<32x256xbf16>,
    } else {
    }
    return
  }
  func.func @transform_0(%arg0: i32, %arg1: i32) -> (i32, i32) {
    %c0_i32 = arith.constant 0 : i32
    %c0_i32_0 = arith.constant 0 : i32
    return %arg0, %c0_i32 : i32, i32
  }
  func.func @transform_1(%arg0: i32, %arg1: i32) -> (i32, i32) {
    %c0_i32 = arith.constant 0 : i32
    %c0_i32_0 = arith.constant 0 : i32
    %c0_i32_1 = arith.constant 0 : i32
    return %c0_i32, %c0_i32_0 : i32, i32
  }
  func.func @transform_2(%arg0: i32, %arg1: i32) -> (i32, i32) {
    %c0_i32 = arith.constant 0 : i32
    %c0_i32_0 = arith.constant 0 : i32
    return %c0_i32, %arg1 : i32, i32
  }
  func.func @transform_3(%arg0: i32, %arg1: i32) -> (i32, i32) {
    %c0_i32 = arith.constant 0 : i32
    %c0_i32_0 = arith.constant 0 : i32
    return %c0_i32, %arg1 : i32, i32
  }
  func.func @transform_4(%arg0: i32, %arg1: i32) -> (i32, i32) {
    %c0_i32 = arith.constant 0 : i32
    %c0_i32_0 = arith.constant 0 : i32
    return %arg1, %c0_i32 : i32, i32
  }
  func.func @transform_5(%arg0: i32, %arg1: i32) -> (i32, i32) {
    %c0_i32 = arith.constant 0 : i32
    %c0_i32_0 = arith.constant 0 : i32
    return %arg0, %c0_i32 : i32, i32
  }
}

module attributes {stable_mosaic.version = 11 : i64} {
  func.func @_rmsnorm_kernel(%arg0: i32, %arg1: memref<32x256xbf16, #tpu.memory_space<vmem>>, %arg2: memref<1x256xf32, #tpu.memory_space<vmem>>, %arg3: memref<32x256xbf16, #tpu.memory_space<vmem>>) attributes {dimension_semantics = [#tpu.dimension_semantics<parallel>], iteration_bounds = array<i64: 1>, scalar_prefetch = 0 : i64, scratch_operands = 0 : i64, tpu.core_type = #tpu.core_type<tc>, window_params = [{transform_indices = @transform_0, window_bounds = array<i64: 32, 256>}, {pipeline_mode = #tpu.pipeline_mode<synchronous>, transform_indices = @transform_1, window_bounds = array<i64: 1, 256>}, {transform_indices = @transform_2, window_bounds = array<i64: 32, 256>}]} {
    %c0 = arith.constant 0 : index
    %c0_0 = arith.constant 0 : index
    %0 = vector.load %arg1[%c0, %c0_0] : memref<32x256xbf16, #tpu.memory_space<vmem>>, vector<32x256xbf16>
    %1 = arith.extf %0 : vector<32x256xbf16> to vector<32x256xf32>
    %2 = arith.mulf %1, %1 : vector<32x256xf32>
    %cst = arith.constant dense<0.000000e+00> : vector<32xf32>
    %3 = vector.multi_reduction <add>, %2, %cst [1] : vector<32x256xf32> to vector<32xf32>
    %4 = vector.shape_cast %3 : vector<32xf32> to vector<32x1xf32>
    %cst_1 = arith.constant 2.560000e+02 : f32
    %5 = vector.broadcast %cst_1 : f32 to vector<32x1xf32>
    %6 = arith.divf %4, %5 : vector<32x1xf32>
    %cst_2 = arith.constant 9.99999997E-7 : f32
    %7 = vector.broadcast %cst_2 : f32 to vector<32x1xf32>
    %8 = arith.addf %6, %7 : vector<32x1xf32>
    %9 = math.rsqrt %8 : vector<32x1xf32>
    %10 = vector.broadcast %9 : vector<32x1xf32> to vector<32x256xf32>
    %11 = arith.mulf %1, %10 : vector<32x256xf32>
    %c0_3 = arith.constant 0 : index
    %c0_4 = arith.constant 0 : index
    %12 = vector.load %arg2[%c0_3, %c0_4] : memref<1x256xf32, #tpu.memory_space<vmem>>, vector<1x256xf32>
    %13 = vector.broadcast %12 : vector<1x256xf32> to vector<32x256xf32>
    %14 = arith.mulf %11, %13 : vector<32x256xf32>
    %15 = arith.truncf %14 : vector<32x256xf32> to vector<32x256xbf16>
    %c0_5 = arith.constant 0 : index
    %c0_6 = arith.constant 0 : index
    %16 = vector.load %arg3[%c0_5, %c0_6] : memref<32x256xbf16, #tpu.memory_space<vmem>>, vector<32x256xbf16>
    tpu.vector_store %arg3[%c0_5, %c0_6], %15 {strides = array<i32>} : memref<32x256xbf16, #tpu.memory_space<vmem>>, vector<32x256xbf16>,
    return
  }
  func.func @transform_0(%arg0: i32) -> (i32, i32) {
    %c0_i32 = arith.constant 0 : i32
    %c0_i32_0 = arith.constant 0 : i32
    return %arg0, %c0_i32 : i32, i32
  }
  func.func @transform_1(%arg0: i32) -> (i32, i32) {
    %c0_i32 = arith.constant 0 : i32
    %c0_i32_0 = arith.constant 0 : i32
    %c0_i32_1 = arith.constant 0 : i32
    return %c0_i32, %c0_i32_0 : i32, i32
  }
  func.func @transform_2(%arg0: i32) -> (i32, i32) {
    %c0_i32 = arith.constant 0 : i32
    %c0_i32_0 = arith.constant 0 : i32
    return %arg0, %c0_i32 : i32, i32
  }
}

</mosaic_0001>

<llo_original>
// kernel: llama_like_forward.11
$region0: #{llama_like_forward.11}
  #allocation0 [shape = 'u32[]', space=smem, size = 0x4, offset = 0x4, fixed_abs, tag = 'smem constant byte address 0x4 - core index']
  #allocation1 [shape = 'u32[144,128]{1,0:T(1,128)}', space=vmem, size = 0x12000, scoped, tag = 'internal scratch']
  %s0 = inlined_call_operand.hbm [shape: bf16[32,256], index: 0, kind: input, shape index: {}]
  %s1 = inlined_call_operand.hbm [shape: bf16[256,256], index: 1, kind: input, shape index: {}]
  %s2 = inlined_call_operand.hbm [shape: bf16[32,256], index: 2, kind: input, shape index: {}]
  %s3 = inlined_call_operand.hbm [shape: bf16[32,256], index: 3, kind: output, shape index: {}]
  %s4 = sld [smem:[#allocation0]]
  $region34: #{llama_like_forward.11} parent=0
    _
  %s6 = ssub.s32 1, %s4
  %s7 = scalar_select 0, %s6, %s4
  $region1: #{llama_like_forward.11} parent=0
    #allocation2 [shape = 'u8[16384]{0}', space=vmem, size = 0x4000, scoped, tag = 'input window, operand 0, single buffered']
    #allocation3 [shape = 's32[1]{0}', space=sflag, size = 0x4, scoped, tag = 'scoped memory for llama_like_forward.11']
    #allocation4 [shape = 's32[1]{0}', space=sflag, size = 0x4, scoped, tag = 'scoped memory for llama_like_forward.11']
    #allocation5 [shape = 'u8[131072]{0}', space=vmem, size = 0x20000, scoped, tag = 'input window, operand 1, single buffered']
    #allocation6 [shape = 's32[1]{0}', space=sflag, size = 0x4, scoped, tag = 'scoped memory for llama_like_forward.11']
    #allocation7 [shape = 'u8[16384]{0}', space=vmem, size = 0x4000, scoped, tag = 'input window, operand 2, single buffered']
    #allocation8 [shape = 'u8[16384]{0}', space=vmem, size = 0x4000, scoped, tag = 'output window, operand 0, single buffered']
    %8 = vsyncpa [#allocation3], 0
    %9 = vsyncpa [#allocation6], 0
    %10 = vsyncpa [#allocation4], 0
    // Predicated region
    $region2: #{llama_like_forward.11} parent=1 // pred_check
      _
    $region3: #{llama_like_forward.11} parent=1 // pred_check_branch
      %12 = sbr.rel (0) target = $region5
    $region4: #{llama_like_forward.11} parent=1 // pred_region
      %s14 = ssub.s32 512, 512
      %15 = vsyncadd [#allocation3], %s14
      %s16 = sshll.u32 [#allocation2], 4
      %s17 = int_to_ptr.vmem [resolvable:$true] %s16
      %22 = dma.hbm_to_vmem [thread:$0]  %s0, 512, %s17, [#allocation3], 128, 128, 8
    $region5: #{llama_like_forward.11} parent=1 // pred_fallthru
      _
    // Predicated region
    $region6: #{llama_like_forward.11} parent=1 // pred_check
      _
    $region7: #{llama_like_forward.11} parent=1 // pred_check_branch
      %24 = sbr.rel (0) target = $region9
    $region8: #{llama_like_forward.11} parent=1 // pred_region
      %s26 = ssub.s32 4096, 4096
      %27 = vsyncadd [#allocation6], %s26
      %s28 = sshll.u32 [#allocation5], 4
      %s29 = int_to_ptr.vmem [resolvable:$true] %s28
      %34 = dma.hbm_to_vmem [thread:$0]  %s1, 4096, %s29, [#allocation6], 128, 128, 8
    $region9: #{llama_like_forward.11} parent=1 // pred_fallthru
      _
    // Predicated region
    $region10: #{llama_like_forward.11} parent=1 // pred_check
      _
    $region11: #{llama_like_forward.11} parent=1 // pred_check_branch
      %36 = sbr.rel (0) target = $region13
    $region12: #{llama_like_forward.11} parent=1 // pred_region
      %s38 = ssub.s32 512, 512
      %39 = vsyncadd [#allocation6], %s38
      %s40 = sshll.u32 [#allocation7], 4
      %s41 = int_to_ptr.vmem [resolvable:$true] %s40
      %46 = dma.hbm_to_vmem [thread:$0]  %s2, 512, %s41, [#allocation6], 128, 128, 8
    $region13: #{llama_like_forward.11} parent=1 // pred_fallthru
      _
    // Predicated region
    $region14: #{llama_like_forward.11} parent=1 // pred_check
      _
    $region15: #{llama_like_forward.11} parent=1 // pred_check_branch
      %48 = sbr.rel (0) target = $region17
    $region16: #{llama_like_forward.11} parent=1 // pred_region
      %49 = dma.done [#allocation3], 512
    $region17: #{llama_like_forward.11} parent=1 // pred_fallthru
      _
    // Predicated region
    $region18: #{llama_like_forward.11} parent=1 // pred_check
      _
    $region19: #{llama_like_forward.11} parent=1 // pred_check_branch
      %51 = sbr.rel (0) target = $region21
    $region20: #{llama_like_forward.11} parent=1 // pred_region
      %52 = dma.done [#allocation6], 4096
    $region21: #{llama_like_forward.11} parent=1 // pred_fallthru
      _
    // Predicated region
    $region22: #{llama_like_forward.11} parent=1 // pred_check
      _
    $region23: #{llama_like_forward.11} parent=1 // pred_check_branch
      %54 = sbr.rel (0) target = $region25
    $region24: #{llama_like_forward.11} parent=1 // pred_region
      %55 = dma.done [#allocation6], 512
    $region25: #{llama_like_forward.11} parent=1 // pred_fallthru
      _
    %v56 = vld [vmem:[#allocation2] sm:$0xff]
    %v57 = vld [vmem:[#allocation2 + $0x8] sm:$0xff]
    %v58 = vld [vmem:[#allocation2 + $0x10] sm:$0xff]
    %v59 = vld [vmem:[#allocation2 + $0x18] sm:$0xff]
    %v60 = vld [vmem:[#allocation5] sm:$0xff]
    %v61 = vld [vmem:[#allocation5 + $0x8] sm:$0xff]
    %v62 = vld [vmem:[#allocation5 + $0x10] sm:$0xff]
    %v63 = vld [vmem:[#allocation5 + $0x18] sm:$0xff]
    %v64 = vld [vmem:[#allocation5 + $0x20] sm:$0xff]
    %v65 = vld [vmem:[#allocation5 + $0x28] sm:$0xff]
    %v66 = vld [vmem:[#allocation5 + $0x30] sm:$0xff]
    %v67 = vld [vmem:[#allocation5 + $0x38] sm:$0xff]
    %v68 = vld [vmem:[#allocation5 + $0x40] sm:$0xff]
    %v69 = vld [vmem:[#allocation5 + $0x48] sm:$0xff]
    %v70 = vld [vmem:[#allocation5 + $0x50] sm:$0xff]
    %v71 = vld [vmem:[#allocation5 + $0x58] sm:$0xff]
    %v72 = vld [vmem:[#allocation5 + $0x60] sm:$0xff]
    %v73 = vld [vmem:[#allocation5 + $0x68] sm:$0xff]
    %v74 = vld [vmem:[#allocation5 + $0x70] sm:$0xff]
    %v75 = vld [vmem:[#allocation5 + $0x78] sm:$0xff]
    %v76 = vld [vmem:[#allocation5 + $0x80] sm:$0xff]
    %v77 = vld [vmem:[#allocation5 + $0x88] sm:$0xff]
    %v78 = vld [vmem:[#allocation5 + $0x90] sm:$0xff]
    %v79 = vld [vmem:[#allocation5 + $0x98] sm:$0xff]
    %v80 = vld [vmem:[#allocation5 + $0xa0] sm:$0xff]
    %v81 = vld [vmem:[#allocation5 + $0xa8] sm:$0xff]
    %v82 = vld [vmem:[#allocation5 + $0xb0] sm:$0xff]
    %v83 = vld [vmem:[#allocation5 + $0xb8] sm:$0xff]
    %v84 = vld [vmem:[#allocation5 + $0xc0] sm:$0xff]
    %v85 = vld [vmem:[#allocation5 + $0xc8] sm:$0xff]
    %v86 = vld [vmem:[#allocation5 + $0xd0] sm:$0xff]
    %v87 = vld [vmem:[#allocation5 + $0xd8] sm:$0xff]
    %v88 = vld [vmem:[#allocation5 + $0xe0] sm:$0xff]
    %v89 = vld [vmem:[#allocation5 + $0xe8] sm:$0xff]
    %v90 = vld [vmem:[#allocation5 + $0xf0] sm:$0xff]
    %v91 = vld [vmem:[#allocation5 + $0xf8] sm:$0xff]
    %v92 = vld [vmem:[#allocation7] sm:$0xff]
    %v93 = vld [vmem:[#allocation7 + $0x8] sm:$0xff]
    %v94 = vld [vmem:[#allocation7 + $0x10] sm:$0xff]
    %v95 = vld [vmem:[#allocation7 + $0x18] sm:$0xff]
    %v96 = vunpack.c.l.bf16 %v92
    %v97 = vunpack.c.h.bf16 %v92
    %v98 = vunpack.c.l.bf16 %v93
    %v99 = vunpack.c.h.bf16 %v93
    %v100 = vunpack.c.l.bf16 %v94
    %v101 = vunpack.c.h.bf16 %v94
    %v102 = vunpack.c.l.bf16 %v95
    %v103 = vunpack.c.h.bf16 %v95
    %v108 = vunpack.c.l.b16 %v56
    %v109 = vunpack.c.h.b16 %v56
    %v110 = vunpack.c.l.b16 %v57
    %v111 = vunpack.c.h.b16 %v57
    %v112 = vunpack.c.l.b16 %v58
    %v113 = vunpack.c.h.b16 %v58
    %v114 = vunpack.c.l.b16 %v59
    %v115 = vunpack.c.h.b16 %v59
    %v116 = vpack.c.b16 %v110, %v108
    %v117 = vpack.c.b16 %v111, %v109
    %v118 = vpack.c.b16 %v114, %v112
    %v119 = vpack.c.b16 %v115, %v113
    %v156 = vunpack.c.l.b16 %v60
    %v157 = vunpack.c.h.b16 %v60
    %v158 = vunpack.c.l.b16 %v61
    %v159 = vunpack.c.h.b16 %v61
    %v160 = vunpack.c.l.b16 %v62
    %v161 = vunpack.c.h.b16 %v62
    %v162 = vunpack.c.l.b16 %v63
    %v163 = vunpack.c.h.b16 %v63
    %v164 = vunpack.c.l.b16 %v64
    %v165 = vunpack.c.h.b16 %v64
    %v166 = vunpack.c.l.b16 %v65
    %v167 = vunpack.c.h.b16 %v65
    %v168 = vunpack.c.l.b16 %v66
    %v169 = vunpack.c.h.b16 %v66
    %v170 = vunpack.c.l.b16 %v67
    %v171 = vunpack.c.h.b16 %v67
    %v172 = vunpack.c.l.b16 %v68
    %v173 = vunpack.c.h.b16 %v68
    %v174 = vunpack.c.l.b16 %v69
    %v175 = vunpack.c.h.b16 %v69
    %v176 = vunpack.c.l.b16 %v70
    %v177 = vunpack.c.h.b16 %v70
    %v178 = vunpack.c.l.b16 %v71
    %v179 = vunpack.c.h.b16 %v71
    %v180 = vunpack.c.l.b16 %v72
    %v181 = vunpack.c.h.b16 %v72
    %v182 = vunpack.c.l.b16 %v73
    %v183 = vunpack.c.h.b16 %v73
    %v184 = vunpack.c.l.b16 %v74
    %v185 = vunpack.c.h.b16 %v74
    %v186 = vunpack.c.l.b16 %v75
    %v187 = vunpack.c.h.b16 %v75
    %v188 = vunpack.c.l.b16 %v76
    %v189 = vunpack.c.h.b16 %v76
    %v190 = vunpack.c.l.b16 %v77
    %v191 = vunpack.c.h.b16 %v77
    %v192 = vunpack.c.l.b16 %v78
    %v193 = vunpack.c.h.b16 %v78
    %v194 = vunpack.c.l.b16 %v79
    %v195 = vunpack.c.h.b16 %v79
    %v196 = vunpack.c.l.b16 %v80
    %v197 = vunpack.c.h.b16 %v80
    %v198 = vunpack.c.l.b16 %v81
    %v199 = vunpack.c.h.b16 %v81
    %v200 = vunpack.c.l.b16 %v82
    %v201 = vunpack.c.h.b16 %v82
    %v202 = vunpack.c.l.b16 %v83
    %v203 = vunpack.c.h.b16 %v83
    %v204 = vunpack.c.l.b16 %v84
    %v205 = vunpack.c.h.b16 %v84
    %v206 = vunpack.c.l.b16 %v85
    %v207 = vunpack.c.h.b16 %v85
    %v208 = vunpack.c.l.b16 %v86
    %v209 = vunpack.c.h.b16 %v86
    %v210 = vunpack.c.l.b16 %v87
    %v211 = vunpack.c.h.b16 %v87
    %v212 = vunpack.c.l.b16 %v88
    %v213 = vunpack.c.h.b16 %v88
    %v214 = vunpack.c.l.b16 %v89
    %v215 = vunpack.c.h.b16 %v89
    %v216 = vunpack.c.l.b16 %v90
    %v217 = vunpack.c.h.b16 %v90
    %v218 = vunpack.c.l.b16 %v91
    %v219 = vunpack.c.h.b16 %v91
    %v220 = vpack.c.b16 %v158, %v156
    %v221 = vpack.c.b16 %v159, %v157
    %v222 = vpack.c.b16 %v162, %v160
    %v223 = vpack.c.b16 %v163, %v161
    %v224 = vpack.c.b16 %v166, %v164
    %v225 = vpack.c.b16 %v167, %v165
    %v226 = vpack.c.b16 %v170, %v168
    %v227 = vpack.c.b16 %v171, %v169
    %v228 = vpack.c.b16 %v174, %v172
    %v229 = vpack.c.b16 %v175, %v173
    %v230 = vpack.c.b16 %v178, %v176
    %v231 = vpack.c.b16 %v179, %v177
    %v232 = vpack.c.b16 %v182, %v180
    %v233 = vpack.c.b16 %v183, %v181
    %v234 = vpack.c.b16 %v186, %v184
    %v235 = vpack.c.b16 %v187, %v185
    %v236 = vpack.c.b16 %v190, %v188
    %v237 = vpack.c.b16 %v191, %v189
    %v238 = vpack.c.b16 %v194, %v192
    %v239 = vpack.c.b16 %v195, %v193
    %v240 = vpack.c.b16 %v198, %v196
    %v241 = vpack.c.b16 %v199, %v197
    %v242 = vpack.c.b16 %v202, %v200
    %v243 = vpack.c.b16 %v203, %v201
    %v244 = vpack.c.b16 %v206, %v204
    %v245 = vpack.c.b16 %v207, %v205
    %v246 = vpack.c.b16 %v210, %v208
    %v247 = vpack.c.b16 %v211, %v209
    %v248 = vpack.c.b16 %v214, %v212
    %v249 = vpack.c.b16 %v215, %v213
    %v250 = vpack.c.b16 %v218, %v216
    %v251 = vpack.c.b16 %v219, %v217
    %284 = vmatprep.subr.bf16.mxu0 %v221
    %285 = vmatpush1.bf16.msra.mxu0 %v220
    %286 = vmatprep.subr.bf16.mxu0 %v223
    %287 = vmatpush1.bf16.msra.mxu0 %v222
    %288 = vmatprep.subr.bf16.mxu0 %v225
    %289 = vmatpush1.bf16.msra.mxu0 %v224
    %290 = vmatprep.subr.bf16.mxu0 %v227
    %291 = vmatpush1.bf16.msra.mxu0 %v226
    %292 = vmatprep.subr.bf16.mxu0 %v229
    %293 = vmatpush1.bf16.msra.mxu0 %v228
    %294 = vmatprep.subr.bf16.mxu0 %v231
    %295 = vmatpush1.bf16.msra.mxu0 %v230
    %296 = vmatprep.subr.bf16.mxu0 %v233
    %297 = vmatpush1.bf16.msra.mxu0 %v232
    %298 = vmatprep.subr.bf16.mxu0 %v235
    %299 = vmatpush1.bf16.msra.mxu0 %v234
    %300 = vmatprep.subr.bf16.mxu0 %v237
    %301 = vmatpush1.bf16.msra.mxu0 %v236
    %302 = vmatprep.subr.bf16.mxu0 %v239
    %303 = vmatpush1.bf16.msra.mxu0 %v238
    %304 = vmatprep.subr.bf16.mxu0 %v241
    %305 = vmatpush1.bf16.msra.mxu0 %v240
    %306 = vmatprep.subr.bf16.mxu0 %v243
    %307 = vmatpush1.bf16.msra.mxu0 %v242
    %308 = vmatprep.subr.bf16.mxu0 %v245
    %309 = vmatpush1.bf16.msra.mxu0 %v244
    %310 = vmatprep.subr.bf16.mxu0 %v247
    %311 = vmatpush1.bf16.msra.mxu0 %v246
    %312 = vmatprep.subr.bf16.mxu0 %v249
    %313 = vmatpush1.bf16.msra.mxu0 %v248
    %314 = vmatprep.subr.bf16.mxu0 %v251
    %315 = vmatpush1.bf16.msra.mxu0 %v250
    %316 = vmatprep.mubr.bf16.mxu0 %v117
    %317 = vmatmul.mubr.bf16.gmra.mrb[0].mxu0 %v116
    %v318 = vpop.f32.mrb[0].mxu0
    %v319 = vadd.f32 %v96, %v318
    %v320 = vpop.f32.mrb[0].mxu0
    %v321 = vadd.f32 %v97, %v320
    %v322 = vpop.f32.mrb[0].mxu0
    %v323 = vadd.f32 %v98, %v322
    %v324 = vpop.f32.mrb[0].mxu0
    %v325 = vadd.f32 %v99, %v324
    %326 = vmatprep.mubr.bf16.mxu0 %v119
    %327 = vmatmul.mubr.bf16.gmra.mrb[0].mxu0 %v118
    %v328 = vpop.f32.mrb[0].mxu0
    %v329 = vadd.f32 %v100, %v328
    %v330 = vpop.f32.mrb[0].mxu0
    %v331 = vadd.f32 %v101, %v330
    %v332 = vpop.f32.mrb[0].mxu0
    %v333 = vadd.f32 %v102, %v332
    %v334 = vpop.f32.mrb[0].mxu0
    %v335 = vadd.f32 %v103, %v334
    %336 = vdwg.mxu0
    %v337 = vpack.c.bf16 %v323, %v319
    %v338 = vpack.c.bf16 %v325, %v321
    %v339 = vpack.c.bf16 %v333, %v329
    %v340 = vpack.c.bf16 %v335, %v331
    %v345 = vunpack.c.l.b16 %v337
    %v346 = vunpack.c.l.b16 %v338
    %v347 = vunpack.c.h.b16 %v337
    %v348 = vunpack.c.h.b16 %v338
    %v349 = vunpack.c.l.b16 %v339
    %v350 = vunpack.c.l.b16 %v340
    %v351 = vunpack.c.h.b16 %v339
    %v352 = vunpack.c.h.b16 %v340
    %v353 = vpack.c.b16 %v346, %v345
    %v354 = vpack.c.b16 %v348, %v347
    %v355 = vpack.c.b16 %v350, %v349
    %v356 = vpack.c.b16 %v352, %v351
    %361 = vst [vmem:[#allocation8] sm:$0xff] %v353
    %362 = vst [vmem:[#allocation8 + $0x8] sm:$0xff] %v354
    %363 = vst [vmem:[#allocation8 + $0x10] sm:$0xff] %v355
    %364 = vst [vmem:[#allocation8 + $0x18] sm:$0xff] %v356
    // Predicated region
    $region26: #{llama_like_forward.11} parent=1 // pred_check
      _
    $region27: #{llama_like_forward.11} parent=1 // pred_check_branch
      %366 = sbr.rel (0) target = $region29
    $region28: #{llama_like_forward.11} parent=1 // pred_region
      %s368 = ssub.s32 512, 512
      %369 = vsyncadd [#allocation4], %s368
      %s370 = sshll.u32 [#allocation8], 4
      %s371 = int_to_ptr.vmem [resolvable:$true] %s370
      %376 = dma.vmem_to_hbm [thread:$0]  %s371, 512, %s3, [#allocation4], 128, 128, 8
    $region29: #{llama_like_forward.11} parent=1 // pred_fallthru
      _
    // Predicated region
    $region30: #{llama_like_forward.11} parent=1 // pred_check
      _
    $region31: #{llama_like_forward.11} parent=1 // pred_check_branch
      %378 = sbr.rel (0) target = $region33
    $region32: #{llama_like_forward.11} parent=1 // pred_region
      %379 = dma.done [#allocation4], 512
    $region33: #{llama_like_forward.11} parent=1 // pred_fallthru
      _
    %380 = vsyncpa [#allocation3], 1
    %381 = vsyncpa [#allocation6], 1
    %382 = vsyncpa [#allocation4], 1

// kernel: llama_like_forward.10
$region0: #{llama_like_forward.10}
  #allocation0 [shape = 'u32[]', space=smem, size = 0x4, offset = 0x4, fixed_abs, tag = 'smem constant byte address 0x4 - core index']
  #allocation1 [shape = 'u32[144,128]{1,0:T(1,128)}', space=vmem, size = 0x12000, scoped, tag = 'internal scratch']
  #allocation2 [shape = 'f32[16,128]{1,0:T(8,128)}', space=vmem, size = 0x2000, scoped, tag = 'scratch operand']
  #allocation3 [shape = 'f32[16,1]{1,0:T(8,128)}', space=vmem, size = 0x2000, scoped, tag = 'scratch operand']
  #allocation4 [shape = 'f32[16,1]{1,0:T(8,128)}', space=vmem, size = 0x2000, scoped, tag = 'scratch operand']
  #allocation5 [shape = 'f32[16,128]{1,0:T(8,128)}', space=vmem, size = 0x2000, scoped, tag = 'scratch operand']
  %s0 = inlined_call_operand.hbm [shape: bf16[32,768], index: 0, kind: input, shape index: {}, may-alias: {0,1,2}]
  %s1 = inlined_call_operand.hbm [shape: bf16[32,768], index: 1, kind: input, shape index: {}, may-alias: {0,1,2}]
  %s2 = inlined_call_operand.hbm [shape: bf16[32,768], index: 2, kind: input, shape index: {}, may-alias: {0,1,2}]
  %s3 = inlined_call_operand.hbm [shape: f32[16,128], index: 3, kind: input, shape index: {}, may-alias: {3,5}]
  %s4 = inlined_call_operand.hbm [shape: f32[16,128], index: 4, kind: input, shape index: {}, may-alias: {4,6}]
  %s5 = inlined_call_operand.hbm [shape: f32[16,128], index: 5, kind: input, shape index: {}, may-alias: {3,5}]
  %s6 = inlined_call_operand.hbm [shape: f32[16,128], index: 6, kind: input, shape index: {}, may-alias: {4,6}]
  %s7 = inlined_call_operand.hbm [shape: bf16[32,256], index: 7, kind: output, shape index: {}]
  %s8 = sld [smem:[#allocation0]]
  $region101: #{llama_like_forward.10} parent=0
    _
  %s10 = ssub.s32 1, %s8
  %s11 = scalar_select 0, %s10, %s8
  $region1: #{llama_like_forward.10} parent=0
    #allocation6 [shape = 'u8[8192]{0}', space=vmem, size = 0x2000, scoped, tag = 'input window, operand 0']
    #allocation7 [shape = 's32[2]{0}', space=sflag, size = 0x8, scoped, tag = 'scoped memory for llama_like_forward.10']
    #allocation8 [shape = 's32[2]{0}', space=sflag, size = 0x8, scoped, tag = 'scoped memory for llama_like_forward.10']
    #allocation9 [shape = 'u8[8192]{0}', space=vmem, size = 0x2000, scoped, tag = 'input window, operand 1']
    #allocation10 [shape = 's32[2]{0}', space=sflag, size = 0x8, scoped, tag = 'scoped memory for llama_like_forward.10']
    #allocation11 [shape = 'u8[8192]{0}', space=vmem, size = 0x2000, scoped, tag = 'input window, operand 2']
    #allocation12 [shape = 'u8[8192]{0}', space=vmem, size = 0x2000, scoped, tag = 'input window, operand 3, single buffered']
    #allocation13 [shape = 's32[1]{0}', space=sflag, size = 0x4, scoped, tag = 'scoped memory for llama_like_forward.10']
    #allocation14 [shape = 'u8[8192]{0}', space=vmem, size = 0x2000, scoped, tag = 'input window, operand 4, single buffered']
    #allocation15 [shape = 'u8[8192]{0}', space=vmem, size = 0x2000, scoped, tag = 'input window, operand 5, single buffered']
    #allocation16 [shape = 's32[1]{0}', space=sflag, size = 0x4, scoped, tag = 'scoped memory for llama_like_forward.10']
    #allocation17 [shape = 'u8[8192]{0}', space=vmem, size = 0x2000, scoped, tag = 'input window, operand 6, single buffered']
    #allocation18 [shape = 'u8[8192]{0}', space=vmem, size = 0x2000, scoped, tag = 'output window, operand 0']
    %12 = vsyncpa [#allocation7], 0
    %s13 = scalar_lea.sflag [#allocation7], 1
    %14 = vsyncpa %s13, 0
    %15 = vsyncpa [#allocation10], 0
    %s16 = scalar_lea.sflag [#allocation10], 1
    %17 = vsyncpa %s16, 0
    %18 = vsyncpa [#allocation13], 0
    %19 = vsyncpa [#allocation16], 0
    %20 = vsyncpa [#allocation8], 0
    %s21 = scalar_lea.sflag [#allocation8], 1
    %22 = vsyncpa %s21, 0
    loop: start=0, step=1, limit=6
    $region2: #{llama_like_forward.10} parent=1 // loop_pre_header
      _
    $region3: #{llama_like_forward.10} parent=1 // loop_header
      %s24 = sphi 0, %s28
      %p25 = scmp.ge.s32.totalorder %s24, 6
      %s31 = sphi 0, %s57
      %s32 = sphi 0, %s53
      %s33 = sphi 0, %s49
      %s34 = sphi 0, %s45
      %s35 = sphi 0, %s31
      %s36 = sphi 0, %s32
      %s37 = sphi 0, %s33
      %s38 = sphi 0, %s34
      %s39 = sphi 0, %s35
      %s40 = sphi 0, %s36
      %s41 = sphi 0, %s37
      %s42 = sphi 0, %s38
      %s64 = sphi 0, %s66
      %s67 = sphi 0, %s64
      %s68 = sphi 0, %s67
      %s84 = sphi 0, %s68
      %s96 = sphi 0, %s98
      %s99 = sphi 0, %s96
      %s100 = sphi 0, %s99
      %s116 = sphi 0, %s100
      %s128 = sphi 0, %s130
      %s131 = sphi 0, %s128
      %s132 = sphi 0, %s131
      %s148 = sphi 0, %s132
      %s154 = sphi 0, %s156
      %s157 = sphi 0, %s154
      %s158 = sphi 0, %s157
      %s174 = sphi 0, %s158
      %s180 = sphi 0, %s182
      %s183 = sphi 0, %s180
      %s184 = sphi 0, %s183
      %s200 = sphi 0, %s184
      %s206 = sphi 0, %s208
      %s209 = sphi 0, %s206
      %s210 = sphi 0, %s209
      %s226 = sphi 0, %s210
      %s232 = sphi 0, %s234
      %s235 = sphi 0, %s232
      %s236 = sphi 0, %s235
      %s252 = sphi 0, %s236
      %s262 = sphi 0, %s264
      %s265 = sphi 0, %s262
      %s266 = sphi 0, %s265
      %s282 = sphi 0, %s266
    $region4: #{llama_like_forward.10} parent=1 // loop_header_branch
      %27 = sbr.rel (%p25) target = $region8
    $region5: #{llama_like_forward.10} parent=1 // loop_body
      %s29 = ssub.s32 %s24, 1
      %s30 = ssub.s32 %s24, 2
      %s43 = sadd.s32 1, %s34
      %p44 = scmp.ge.s32.totalorder %s43, 1
      %s45 = scalar_select %p44, 0, %s43
      %s46 = sadd.s32 1, %s33
      %s47 = scalar_select %p44, %s46, %s33
      %p48 = scmp.ge.s32.totalorder %s47, 1
      %s49 = scalar_select %p48, 0, %s47
      %s50 = sadd.s32 1, %s32
      %s51 = scalar_select %p48, %s50, %s32
      %p52 = scmp.ge.s32.totalorder %s51, 2
      %s53 = scalar_select %p52, 0, %s51
      %s54 = sadd.s32 1, %s31
      %s55 = scalar_select %p52, %s54, %s31
      %p56 = scmp.ge.s32.totalorder %s55, 2
      %s57 = scalar_select %p56, 0, %s55
      %s58 = sadd.s32 %s31, %s33
      %s59 = sadd.s32 %s57, %s49
      %s60 = ssub.s32 %s58, %s59
      %s61 = ssub.s32 %s32, %s53
      %s62 = sor.u32 %s60, %s61
      %p63 = scmp.eq.s32.totalorder %s62, 0
      %s65 = sadd.s32 %s64, 1
      %s66 = scalar_select %p63, %s64, %s65
      %p69 = pneg %p63
      %p70 = scmp.eq.s32.totalorder %s24, 3
      %p71 = por %p69, %p70
      %p72 = scmp.ne.s32.totalorder %s64, %s67
      %p73 = scmp.eq.s32.totalorder %s24, 0
      %p74 = por %p72, %p73
      %p75 = scmp.ne.s32.totalorder %s64, %s67
      %p76 = scmp.eq.s32.totalorder %s29, 3
      %p77 = por %p75, %p76
      %p78 = scmp.ne.s32.totalorder %s67, %s68
      %p79 = scmp.eq.s32.totalorder %s29, 0
      %p80 = por %p78, %p79
      %p81 = scmp.ne.s32.totalorder %s67, %s68
      %p82 = scmp.eq.s32.totalorder %s30, 3
      %p83 = por %p81, %p82
      %p85 = scmp.ne.s32.totalorder %s68, %s84
      %p86 = scmp.eq.s32.totalorder %s30, 0
      %p87 = por %p85, %p86
      %s88 = sadd.s32 %s31, %s34
      %s89 = sadd.s32 %s32, 2
      %s90 = sadd.s32 %s57, %s45
      %s91 = sadd.s32 %s53, 2
      %s92 = ssub.s32 %s88, %s90
      %s93 = ssub.s32 %s89, %s91
      %s94 = sor.u32 %s92, %s93
      %p95 = scmp.eq.s32.totalorder %s94, 0
      %s97 = sadd.s32 %s96, 1
      %s98 = scalar_select %p95, %s96, %s97
      %p101 = pneg %p95
      %p102 = scmp.eq.s32.totalorder %s24, 3
      %p103 = por %p101, %p102
      %p104 = scmp.ne.s32.totalorder %s96, %s99
      %p105 = scmp.eq.s32.totalorder %s24, 0
      %p106 = por %p104, %p105
      %p107 = scmp.ne.s32.totalorder %s96, %s99
      %p108 = scmp.eq.s32.totalorder %s29, 3
      %p109 = por %p107, %p108
      %p110 = scmp.ne.s32.totalorder %s99, %s100
      %p111 = scmp.eq.s32.totalorder %s29, 0
      %p112 = por %p110, %p111
      %p113 = scmp.ne.s32.totalorder %s99, %s100
      %p114 = scmp.eq.s32.totalorder %s30, 3
      %p115 = por %p113, %p114
      %p117 = scmp.ne.s32.totalorder %s100, %s116
      %p118 = scmp.eq.s32.totalorder %s30, 0
      %p119 = por %p117, %p118
      %s120 = sadd.s32 %s31, %s34
      %s121 = sadd.s32 %s32, 4
      %s122 = sadd.s32 %s57, %s45
      %s123 = sadd.s32 %s53, 4
      %s124 = ssub.s32 %s120, %s122
      %s125 = ssub.s32 %s121, %s123
      %s126 = sor.u32 %s124, %s125
      %p127 = scmp.eq.s32.totalorder %s126, 0
      %s129 = sadd.s32 %s128, 1
      %s130 = scalar_select %p127, %s128, %s129
      %p133 = pneg %p127
      %p134 = scmp.eq.s32.totalorder %s24, 3
      %p135 = por %p133, %p134
      %p136 = scmp.ne.s32.totalorder %s128, %s131
      %p137 = scmp.eq.s32.totalorder %s24, 0
      %p138 = por %p136, %p137
      %p139 = scmp.ne.s32.totalorder %s128, %s131
      %p140 = scmp.eq.s32.totalorder %s29, 3
      %p141 = por %p139, %p140
      %p142 = scmp.ne.s32.totalorder %s131, %s132
      %p143 = scmp.eq.s32.totalorder %s29, 0
      %p144 = por %p142, %p143
      %p145 = scmp.ne.s32.totalorder %s131, %s132
      %p146 = scmp.eq.s32.totalorder %s30, 3
      %p147 = por %p145, %p146
      %p149 = scmp.ne.s32.totalorder %s132, %s148
      %p150 = scmp.eq.s32.totalorder %s30, 0
      %p151 = por %p149, %p150
      %s152 = ssub.s32 %s33, %s49
      %p153 = scmp.eq.s32.totalorder %s152, 0
      %s155 = sadd.s32 %s154, 1
      %s156 = scalar_select %p153, %s154, %s155
      %p159 = pneg %p153
      %p160 = scmp.eq.s32.totalorder %s24, 3
      %p161 = por %p159, %p160
      %p162 = scmp.ne.s32.totalorder %s154, %s157
      %p163 = scmp.eq.s32.totalorder %s24, 0
      %p164 = por %p162, %p163
      %p165 = scmp.ne.s32.totalorder %s154, %s157
      %p166 = scmp.eq.s32.totalorder %s29, 3
      %p167 = por %p165, %p166
      %p168 = scmp.ne.s32.totalorder %s157, %s158
      %p169 = scmp.eq.s32.totalorder %s29, 0
      %p170 = por %p168, %p169
      %p171 = scmp.ne.s32.totalorder %s157, %s158
      %p172 = scmp.eq.s32.totalorder %s30, 3
      %p173 = por %p171, %p172
      %p175 = scmp.ne.s32.totalorder %s158, %s174
      %p176 = scmp.eq.s32.totalorder %s30, 0
      %p177 = por %p175, %p176
      %s178 = ssub.s32 %s33, %s49
      %p179 = scmp.eq.s32.totalorder %s178, 0
      %s181 = sadd.s32 %s180, 1
      %s182 = scalar_select %p179, %s180, %s181
      %p185 = pneg %p179
      %p186 = scmp.eq.s32.totalorder %s24, 3
      %p187 = por %p185, %p186
      %p188 = scmp.ne.s32.totalorder %s180, %s183
      %p189 = scmp.eq.s32.totalorder %s24, 0
      %p190 = por %p188, %p189
      %p191 = scmp.ne.s32.totalorder %s180, %s183
      %p192 = scmp.eq.s32.totalorder %s29, 3
      %p193 = por %p191, %p192
      %p194 = scmp.ne.s32.totalorder %s183, %s184
      %p195 = scmp.eq.s32.totalorder %s29, 0
      %p196 = por %p194, %p195
      %p197 = scmp.ne.s32.totalorder %s183, %s184
      %p198 = scmp.eq.s32.totalorder %s30, 3
      %p199 = por %p197, %p198
      %p201 = scmp.ne.s32.totalorder %s184, %s200
      %p202 = scmp.eq.s32.totalorder %s30, 0
      %p203 = por %p201, %p202
      %s204 = ssub.s32 %s34, %s45
      %p205 = scmp.eq.s32.totalorder %s204, 0
      %s207 = sadd.s32 %s206, 1
      %s208 = scalar_select %p205, %s206, %s207
      %p211 = pneg %p205
      %p212 = scmp.eq.s32.totalorder %s24, 3
      %p213 = por %p211, %p212
      %p214 = scmp.ne.s32.totalorder %s206, %s209
      %p215 = scmp.eq.s32.totalorder %s24, 0
      %p216 = por %p214, %p215
      %p217 = scmp.ne.s32.totalorder %s206, %s209
      %p218 = scmp.eq.s32.totalorder %s29, 3
      %p219 = por %p217, %p218
      %p220 = scmp.ne.s32.totalorder %s209, %s210
      %p221 = scmp.eq.s32.totalorder %s29, 0
      %p222 = por %p220, %p221
      %p223 = scmp.ne.s32.totalorder %s209, %s210
      %p224 = scmp.eq.s32.totalorder %s30, 3
      %p225 = por %p223, %p224
      %p227 = scmp.ne.s32.totalorder %s210, %s226
      %p228 = scmp.eq.s32.totalorder %s30, 0
      %p229 = por %p227, %p228
      %s230 = ssub.s32 %s34, %s45
      %p231 = scmp.eq.s32.totalorder %s230, 0
      %s233 = sadd.s32 %s232, 1
      %s234 = scalar_select %p231, %s232, %s233
      %p237 = pneg %p231
      %p238 = scmp.eq.s32.totalorder %s24, 3
      %p239 = por %p237, %p238
      %p240 = scmp.ne.s32.totalorder %s232, %s235
      %p241 = scmp.eq.s32.totalorder %s24, 0
      %p242 = por %p240, %p241
      %p243 = scmp.ne.s32.totalorder %s232, %s235
      %p244 = scmp.eq.s32.totalorder %s29, 3
      %p245 = por %p243, %p244
      %p246 = scmp.ne.s32.totalorder %s235, %s236
      %p247 = scmp.eq.s32.totalorder %s29, 0
      %p248 = por %p246, %p247
      %p249 = scmp.ne.s32.totalorder %s235, %s236
      %p250 = scmp.eq.s32.totalorder %s30, 3
      %p251 = por %p249, %p250
      %p253 = scmp.ne.s32.totalorder %s236, %s252
      %p254 = scmp.eq.s32.totalorder %s30, 0
      %p255 = por %p253, %p254
      %s256 = sadd.s32 %s31, %s33
      %s257 = sadd.s32 %s57, %s49
      %s258 = ssub.s32 %s256, %s257
      %s259 = ssub.s32 %s32, %s53
      %s260 = sor.u32 %s258, %s259
      %p261 = scmp.eq.s32.totalorder %s260, 0
      %s263 = sadd.s32 %s262, 1
      %s264 = scalar_select %p261, %s262, %s263
      %p267 = pneg %p261
      %p268 = scmp.eq.s32.totalorder %s24, 3
      %p269 = por %p267, %p268
      %p270 = scmp.ne.s32.totalorder %s262, %s265
      %p271 = scmp.eq.s32.totalorder %s24, 0
      %p272 = por %p270, %p271
      %p273 = scmp.ne.s32.totalorder %s262, %s265
      %p274 = scmp.eq.s32.totalorder %s29, 3
      %p275 = por %p273, %p274
      %p276 = scmp.ne.s32.totalorder %s265, %s266
      %p277 = scmp.eq.s32.totalorder %s29, 0
      %p278 = por %p276, %p277
      %p279 = scmp.ne.s32.totalorder %s265, %s266
      %p280 = scmp.eq.s32.totalorder %s30, 3
      %p281 = por %p279, %p280
      %p283 = scmp.ne.s32.totalorder %s266, %s282
      %p284 = scmp.eq.s32.totalorder %s30, 0
      %p285 = por %p283, %p284
      %p286 = scmp.le.s32.totalorder 1, %s24
      %p287 = scmp.lt.s32.totalorder %s24, 5
      %p288 = pnand %p286, %p287
      %p289 = pneg %p288
      // Predicated region
      $region9: #{llama_like_forward.10} parent=5 // pred_check
        _
      $region10: #{llama_like_forward.10} parent=5 // pred_check_branch
        %291 = sbr.rel (%p288) target = $region12
      $region11: #{llama_like_forward.10} parent=5 // pred_region
        %s292 = ssub.s32 %s24, 1
        // Predicated region
        $region13: #{llama_like_forward.10} parent=11 // pred_check
          %p293 = pneg %p170
        $region14: #{llama_like_forward.10} parent=11 // pred_check_branch
          %295 = sbr.rel (%p293) target = $region16
        $region15: #{llama_like_forward.10} parent=11 // pred_region
          %s296 = smul.u32 2, %s37
          %s298 = ssub.s32 256, 256
          %299 = vsyncadd [#allocation13], %s298
          %s300 = smul.addr %s296, 128
          %s301 = scalar_lea.hbm %s3, %s300
          %s302 = sshll.u32 [#allocation12], 4
          %s303 = int_to_ptr.vmem [resolvable:$true] %s302
          %308 = dma.hbm_to_vmem [thread:$0]  %s301, 256, %s303, [#allocation13], 128, 128, 8
        $region16: #{llama_like_forward.10} parent=11 // pred_fallthru
          _
        // Predicated region
        $region17: #{llama_like_forward.10} parent=11 // pred_check
          %p309 = pneg %p196
        $region18: #{llama_like_forward.10} parent=11 // pred_check_branch
          %311 = sbr.rel (%p309) target = $region20
        $region19: #{llama_like_forward.10} parent=11 // pred_region
          %s312 = smul.u32 2, %s37
          %s314 = ssub.s32 256, 256
          %315 = vsyncadd [#allocation13], %s314
          %s316 = smul.addr %s312, 128
          %s317 = scalar_lea.hbm %s4, %s316
          %s318 = sshll.u32 [#allocation14], 4
          %s319 = int_to_ptr.vmem [resolvable:$true] %s318
          %324 = dma.hbm_to_vmem [thread:$0]  %s317, 256, %s319, [#allocation13], 128, 128, 8
        $region20: #{llama_like_forward.10} parent=11 // pred_fallthru
          _
        // Predicated region
        $region21: #{llama_like_forward.10} parent=11 // pred_check
          %p325 = pneg %p222
        $region22: #{llama_like_forward.10} parent=11 // pred_check_branch
          %327 = sbr.rel (%p325) target = $region24
        $region23: #{llama_like_forward.10} parent=11 // pred_region
          %s328 = smul.u32 2, %s38
          %s330 = ssub.s32 256, 256
          %331 = vsyncadd [#allocation16], %s330
          %s332 = smul.addr %s328, 128
          %s333 = scalar_lea.hbm %s5, %s332
          %s334 = sshll.u32 [#allocation15], 4
          %s335 = int_to_ptr.vmem [resolvable:$true] %s334
          %340 = dma.hbm_to_vmem [thread:$0]  %s333, 256, %s335, [#allocation16], 128, 128, 8
        $region24: #{llama_like_forward.10} parent=11 // pred_fallthru
          _
        // Predicated region
        $region25: #{llama_like_forward.10} parent=11 // pred_check
          %p341 = pneg %p248
        $region26: #{llama_like_forward.10} parent=11 // pred_check_branch
          %343 = sbr.rel (%p341) target = $region28
        $region27: #{llama_like_forward.10} parent=11 // pred_region
          %s344 = smul.u32 2, %s38
          %s346 = ssub.s32 256, 256
          %347 = vsyncadd [#allocation16], %s346
          %s348 = smul.addr %s344, 128
          %s349 = scalar_lea.hbm %s6, %s348
          %s350 = sshll.u32 [#allocation17], 4
          %s351 = int_to_ptr.vmem [resolvable:$true] %s350
          %356 = dma.hbm_to_vmem [thread:$0]  %s349, 256, %s351, [#allocation16], 128, 128, 8
        $region28: #{llama_like_forward.10} parent=11 // pred_fallthru
          _
      $region12: #{llama_like_forward.10} parent=5 // pred_fallthru
        _
      %p357 = scmp.lt.s32.totalorder %s24, 4
      // Predicated region
      $region29: #{llama_like_forward.10} parent=5 // pred_check
        %p358 = pneg %p357
      $region30: #{llama_like_forward.10} parent=5 // pred_check_branch
        %360 = sbr.rel (%p358) target = $region32
      $region31: #{llama_like_forward.10} parent=5 // pred_region
        // Predicated region
        $region33: #{llama_like_forward.10} parent=31 // pred_check
          %p361 = pneg %p74
        $region34: #{llama_like_forward.10} parent=31 // pred_check_branch
          %363 = sbr.rel (%p361) target = $region36
        $region35: #{llama_like_forward.10} parent=31 // pred_region
          %s364 = sand.u32 %s64, 1
          %s365 = scalar_lea.sflag [#allocation7], %s364
          %s366 = sand.u32 %s64, 1
          %s367 = smul.addr %s366, 8
          %s368 = scalar_lea.vmem [#allocation6], %s367
          %s369 = sadd.s32 %s31, %s33
          %s370 = smul.u32 2, %s369
          %s372 = ssub.s32 128, 128
          %373 = vsyncadd %s365, %s372
          %s374 = smul.addr %s370, 6
          %s375 = sadd.s32 %s32, %s374
          %s376 = smul.addr %s375, 64
          %s377 = scalar_lea.hbm %s0, %s376
          %s378 = sshll.u32 %s368, 4
          %s379 = int_to_ptr.vmem [resolvable:$true] %s378
          %384 = dma.hbm_to_vmem [thread:$0]  %s377, 128, %s379, %s365, 384, 64, 4
        $region36: #{llama_like_forward.10} parent=31 // pred_fallthru
          _
        // Predicated region
        $region37: #{llama_like_forward.10} parent=31 // pred_check
          %p385 = pneg %p106
        $region38: #{llama_like_forward.10} parent=31 // pred_check_branch
          %387 = sbr.rel (%p385) target = $region40
        $region39: #{llama_like_forward.10} parent=31 // pred_region
          %s388 = sand.u32 %s24, 1
          %s389 = scalar_lea.sflag [#allocation10], %s388
          %s390 = sand.u32 %s96, 1
          %s391 = smul.addr %s390, 8
          %s392 = scalar_lea.vmem [#allocation9], %s391
          %s393 = sadd.s32 %s31, %s34
          %s394 = sadd.s32 %s32, 2
          %s395 = smul.u32 2, %s393
          %s397 = ssub.s32 128, 128
          %398 = vsyncadd %s389, %s397
          %s399 = smul.addr %s395, 6
          %s400 = sadd.s32 %s394, %s399
          %s401 = smul.addr %s400, 64
          %s402 = scalar_lea.hbm %s1, %s401
          %s403 = sshll.u32 %s392, 4
          %s404 = int_to_ptr.vmem [resolvable:$true] %s403
          %409 = dma.hbm_to_vmem [thread:$0]  %s402, 128, %s404, %s389, 384, 64, 4
        $region40: #{llama_like_forward.10} parent=31 // pred_fallthru
          _
        // Predicated region
        $region41: #{llama_like_forward.10} parent=31 // pred_check
          %p410 = pneg %p138
        $region42: #{llama_like_forward.10} parent=31 // pred_check_branch
          %412 = sbr.rel (%p410) target = $region44
        $region43: #{llama_like_forward.10} parent=31 // pred_region
          %s413 = sand.u32 %s24, 1
          %s414 = scalar_lea.sflag [#allocation10], %s413
          %s415 = sand.u32 %s128, 1
          %s416 = smul.addr %s415, 8
          %s417 = scalar_lea.vmem [#allocation11], %s416
          %s418 = sadd.s32 %s31, %s34
          %s419 = sadd.s32 %s32, 4
          %s420 = smul.u32 2, %s418
          %s422 = ssub.s32 128, 128
          %423 = vsyncadd %s414, %s422
          %s424 = smul.addr %s420, 6
          %s425 = sadd.s32 %s419, %s424
          %s426 = smul.addr %s425, 64
          %s427 = scalar_lea.hbm %s2, %s426
          %s428 = sshll.u32 %s417, 4
          %s429 = int_to_ptr.vmem [resolvable:$true] %s428
          %434 = dma.hbm_to_vmem [thread:$0]  %s427, 128, %s429, %s414, 384, 64, 4
        $region44: #{llama_like_forward.10} parent=31 // pred_fallthru
          _
      $region32: #{llama_like_forward.10} parent=5 // pred_fallthru
        _
      %p435 = scmp.le.s32.totalorder 1, %s24
      %p436 = scmp.lt.s32.totalorder %s24, 5
      %p437 = pnand %p435, %p436
      %p438 = pneg %p437
      // Predicated region
      $region45: #{llama_like_forward.10} parent=5 // pred_check
        _
      $region46: #{llama_like_forward.10} parent=5 // pred_check_branch
        %440 = sbr.rel (%p437) target = $region48
      $region47: #{llama_like_forward.10} parent=5 // pred_region
        %s441 = ssub.s32 %s24, 1
        %s442 = sand.u32 %s67, 1
        %s443 = scalar_lea.sflag [#allocation7], %s442
        %s444 = sand.u32 %s67, 1
        %s445 = smul.addr %s444, 8
        %s446 = scalar_lea.vmem [#allocation6], %s445
        // Predicated region
        $region49: #{llama_like_forward.10} parent=47 // pred_check
          %p447 = pneg %p80
        $region50: #{llama_like_forward.10} parent=47 // pred_check_branch
          %449 = sbr.rel (%p447) target = $region52
        $region51: #{llama_like_forward.10} parent=47 // pred_region
          %450 = dma.done %s443, 128
        $region52: #{llama_like_forward.10} parent=47 // pred_fallthru
          _
        %s451 = sand.u32 %s29, 1
        %s452 = scalar_lea.sflag [#allocation10], %s451
        %s453 = sand.u32 %s99, 1
        %s454 = smul.addr %s453, 8
        %s455 = scalar_lea.vmem [#allocation9], %s454
        // Predicated region
        $region53: #{llama_like_forward.10} parent=47 // pred_check
          %p456 = pneg %p112
        $region54: #{llama_like_forward.10} parent=47 // pred_check_branch
          %458 = sbr.rel (%p456) target = $region56
        $region55: #{llama_like_forward.10} parent=47 // pred_region
          %459 = dma.done %s452, 128
        $region56: #{llama_like_forward.10} parent=47 // pred_fallthru
          _
        %s460 = sand.u32 %s29, 1
        %s461 = scalar_lea.sflag [#allocation10], %s460
        %s462 = sand.u32 %s131, 1
        %s463 = smul.addr %s462, 8
        %s464 = scalar_lea.vmem [#allocation11], %s463
        // Predicated region
        $region57: #{llama_like_forward.10} parent=47 // pred_check
          %p465 = pneg %p144
        $region58: #{llama_like_forward.10} parent=47 // pred_check_branch
          %467 = sbr.rel (%p465) target = $region60
        $region59: #{llama_like_forward.10} parent=47 // pred_region
          %468 = dma.done %s461, 128
        $region60: #{llama_like_forward.10} parent=47 // pred_fallthru
          _
        // Predicated region
        $region61: #{llama_like_forward.10} parent=47 // pred_check
          %p469 = pneg %p170
        $region62: #{llama_like_forward.10} parent=47 // pred_check_branch
          %471 = sbr.rel (%p469) target = $region64
        $region63: #{llama_like_forward.10} parent=47 // pred_region
          %472 = dma.done [#allocation13], 256
        $region64: #{llama_like_forward.10} parent=47 // pred_fallthru
          _
        // Predicated region
        $region65: #{llama_like_forward.10} parent=47 // pred_check
          %p473 = pneg %p196
        $region66: #{llama_like_forward.10} parent=47 // pred_check_branch
          %475 = sbr.rel (%p473) target = $region68
        $region67: #{llama_like_forward.10} parent=47 // pred_region
          %476 = dma.done [#allocation13], 256
        $region68: #{llama_like_forward.10} parent=47 // pred_fallthru
          _
        // Predicated region
        $region69: #{llama_like_forward.10} parent=47 // pred_check
          %p477 = pneg %p222
        $region70: #{llama_like_forward.10} parent=47 // pred_check_branch
          %479 = sbr.rel (%p477) target = $region72
        $region71: #{llama_like_forward.10} parent=47 // pred_region
          %480 = dma.done [#allocation16], 256
        $region72: #{llama_like_forward.10} parent=47 // pred_fallthru
          _
        // Predicated region
        $region73: #{llama_like_forward.10} parent=47 // pred_check
          %p481 = pneg %p248
        $region74: #{llama_like_forward.10} parent=47 // pred_check_branch
          %483 = sbr.rel (%p481) target = $region76
        $region75: #{llama_like_forward.10} parent=47 // pred_region
          %484 = dma.done [#allocation16], 256
        $region76: #{llama_like_forward.10} parent=47 // pred_fallthru
          _
        %s485 = sand.u32 %s67, 1
        %s486 = scalar_lea.sflag [#allocation7], %s485
        %s487 = sand.u32 %s67, 1
        %s488 = smul.addr %s487, 8
        %s489 = scalar_lea.vmem [#allocation6], %s488
        %p490 = pneg %p80
        %p491 = pneg %p77
        %s492 = sand.u32 %s29, 1
        %s493 = scalar_lea.sflag [#allocation10], %s492
        %s494 = sand.u32 %s99, 1
        %s495 = smul.addr %s494, 8
        %s496 = scalar_lea.vmem [#allocation9], %s495
        %p497 = pneg %p112
        %p498 = pneg %p109
        %s499 = sand.u32 %s29, 1
        %s500 = scalar_lea.sflag [#allocation10], %s499
        %s501 = sand.u32 %s131, 1
        %s502 = smul.addr %s501, 8
        %s503 = scalar_lea.vmem [#allocation11], %s502
        %p504 = pneg %p144
        %p505 = pneg %p141
        %p506 = pneg %p170
        %p507 = pneg %p167
        %p508 = pneg %p196
        %p509 = pneg %p193
        %p510 = pneg %p222
        %p511 = pneg %p219
        %p512 = pneg %p248
        %p513 = pneg %p245
        %p514 = pneg %p278
        %p515 = pneg %p275
        %s516 = sand.u32 %s265, 1
        %s517 = scalar_lea.sflag [#allocation8], %s516
        %s518 = sand.u32 %s265, 1
        %s519 = smul.addr %s518, 8
        %s520 = scalar_lea.vmem [#allocation18], %s519
        %s521 = sadd.s32 %s35, %s37
        %s522 = smul.u32 2, %s521
        %s523 = sadd.s32 %s35, %s38
        %s524 = sadd.s32 %s36, 2
        %s525 = smul.u32 2, %s523
        %s526 = sadd.s32 %s35, %s38
        %s527 = sadd.s32 %s36, 4
        %s528 = smul.u32 2, %s526
        %s529 = smul.u32 2, %s37
        %s530 = smul.u32 2, %s37
        %s531 = smul.u32 2, %s38
        %s532 = smul.u32 2, %s38
        %s533 = sadd.s32 %s35, %s37
        %s534 = smul.u32 2, %s533
        %p536 = scmp.eq.s32.totalorder %s38, 0
        // Predicated region
        $region77: #{llama_like_forward.10} parent=47 // pred_check
          %p537 = pneg %p536
        $region78: #{llama_like_forward.10} parent=47 // pred_check_branch
          %539 = sbr.rel (%p537) target = $region80
        $region79: #{llama_like_forward.10} parent=47 // pred_region
          %vm540 = vcmask 7168
          %541 = vst.msk [vmem:[#allocation3] sm:$0xff] %vm540, -inf
          %542 = vst.msk [vmem:[#allocation3 + $0x8] sm:$0xff] %vm540, -inf
          %543 = vst.msk [vmem:[#allocation4] sm:$0xff] %vm540, 0.0
          %544 = vst.msk [vmem:[#allocation4 + $0x8] sm:$0xff] %vm540, 0.0
          %545 = vst [vmem:[#allocation5] sm:$0xff] 0.0
          %546 = vst [vmem:[#allocation5 + $0x8] sm:$0xff] 0.0
          %v547 = vld [vmem:[%s446] sm:$0xf]
          %v548 = vld [vmem:[%s446 + $0x4] sm:$0xf]
          %v549 = vunpack.c.l.bf16 %v547
          %v550 = vunpack.c.l.bf16 %v548
          %v551 = vld [vmem:[#allocation12] sm:$0xff]
          %v552 = vld [vmem:[#allocation12 + $0x8] sm:$0xff]
          %v553 = vmul.f32 %v549, %v551
          %v554 = vmul.f32 %v550, %v552
          %555 = vrot.lane.b32.xlu0 %v549, 64
          %v556 = vpop.permute.xlu0 %555
          %557 = vrot.lane.b32.xlu0 %v550, 64
          %v558 = vpop.permute.xlu0 %557
          %v559 = vld [vmem:[#allocation14] sm:$0xff]
          %v560 = vld [vmem:[#allocation14 + $0x8] sm:$0xff]
          %v561 = vmul.f32 %v556, %v559
          %v562 = vmul.f32 %v558, %v560
          %v563 = vadd.f32 %v553, %v561
          %v564 = vadd.f32 %v554, %v562
          %v565 = vmul.f32 %v563, 0.088388346
          %v566 = vmul.f32 %v564, 0.088388346
          %567 = vst [vmem:[#allocation2] sm:$0xff] %v565
          %568 = vst [vmem:[#allocation2 + $0x8] sm:$0xff] %v566
        $region80: #{llama_like_forward.10} parent=47 // pred_fallthru
          _
        %s569 = smul.u32 %s38, 16
        %s570 = smul.u32 %s37, 16
        %s571 = sadd.s32 %s570, 15
        %p572 = scmp.le.s32.totalorder %s569, %s571
        // Predicated region
        $region81: #{llama_like_forward.10} parent=47 // pred_check
          %p573 = pneg %p572
        $region82: #{llama_like_forward.10} parent=47 // pred_check_branch
          %575 = sbr.rel (%p573) target = $region84
        $region83: #{llama_like_forward.10} parent=47 // pred_region
          %v576 = vld [vmem:[%s455] sm:$0xf]
          %v577 = vld [vmem:[%s455 + $0x4] sm:$0xf]
          %v578 = vunpack.c.l.bf16 %v576
          %v579 = vunpack.c.l.bf16 %v577
          %v580 = vld [vmem:[#allocation15] sm:$0xff]
          %v581 = vld [vmem:[#allocation15 + $0x8] sm:$0xff]
          %v582 = vmul.f32 %v578, %v580
          %v583 = vmul.f32 %v579, %v581
          %584 = vrot.lane.b32.xlu0 %v578, 64
          %v585 = vpop.permute.xlu0 %584
          %586 = vrot.lane.b32.xlu0 %v579, 64
          %v587 = vpop.permute.xlu0 %586
          %v588 = vld [vmem:[#allocation17] sm:$0xff]
          %v589 = vld [vmem:[#allocation17 + $0x8] sm:$0xff]
          %v590 = vmul.f32 %v585, %v588
          %v591 = vmul.f32 %v587, %v589
          %v592 = vadd.f32 %v582, %v590
          %v593 = vadd.f32 %v583, %v591
          %v594 = vld [vmem:[#allocation2] sm:$0xff]
          %v595 = vld [vmem:[#allocation2 + $0x8] sm:$0xff]
          %596 = vmatprep.subr.mxu0 0.0
          %597 = vmatpush1.xpose.msra.mxu0 %v592
          %598 = vmatprep.subr.mxu0 0.0
          %599 = vmatpush1.xpose.msra.mxu0 %v593
          %600 = vmatprep.subr.mxu0 0.0
          %601 = vmatpush1.xpose.msra.mxu0 0.0
          %602 = vmatprep.subr.mxu0 0.0
          %603 = vmatpush1.xpose.msra.mxu0 0.0
          %604 = vmatprep.subr.mxu0 0.0
          %605 = vmatpush1.xpose.msra.mxu0 0.0
          %606 = vmatprep.subr.mxu0 0.0
          %607 = vmatpush1.xpose.msra.mxu0 0.0
          %608 = vmatprep.subr.mxu0 0.0
          %609 = vmatpush1.xpose.msra.mxu0 0.0
          %610 = vmatprep.subr.mxu0 0.0
          %611 = vmatpush1.xpose.msra.mxu0 0.0
          %612 = vmatprep.subr.mxu0 0.0
          %613 = vmatpush1.xpose.msra.mxu0 0.0
          %614 = vmatprep.subr.mxu0 0.0
          %615 = vmatpush1.xpose.msra.mxu0 0.0
          %616 = vmatprep.subr.mxu0 0.0
          %617 = vmatpush1.xpose.msra.mxu0 0.0
          %618 = vmatprep.subr.mxu0 0.0
          %619 = vmatpush1.xpose.msra.mxu0 0.0
          %620 = vmatprep.subr.mxu0 0.0
          %621 = vmatpush1.xpose.msra.mxu0 0.0
          %622 = vmatprep.subr.mxu0 0.0
          %623 = vmatpush1.xpose.msra.mxu0 0.0
          %624 = vmatprep.subr.mxu0 0.0
          %625 = vmatpush1.xpose.msra.mxu0 0.0
          %626 = vmatprep.subr.mxu0 0.0
          %627 = vmatpush1.xpose.msra.mxu0 0.0
          %628 = vmatprep.subr.mxu0 0.0
          %629 = vmatpush1.xpose.msra.mxu0 0.0
          %630 = vmatprep.subr.mxu0 0.0
          %631 = vmatpush1.xpose.msra.mxu0 0.0
          %632 = vmatprep.subr.mxu0 0.0
          %633 = vmatpush1.xpose.msra.mxu0 0.0
          %634 = vmatprep.subr.mxu0 0.0
          %635 = vmatpush1.xpose.msra.mxu0 0.0
          %636 = vmatprep.subr.mxu0 0.0
          %637 = vmatpush1.xpose.msra.mxu0 0.0
          %638 = vmatprep.subr.mxu0 0.0
          %639 = vmatpush1.xpose.msra.mxu0 0.0
          %640 = vmatprep.subr.mxu0 0.0
          %641 = vmatpush1.xpose.msra.mxu0 0.0
          %642 = vmatprep.subr.mxu0 0.0
          %643 = vmatpush1.xpose.msra.mxu0 0.0
          %644 = vmatprep.subr.mxu0 0.0
          %645 = vmatpush1.xpose.msra.mxu0 0.0
          %646 = vmatprep.subr.mxu0 0.0
          %647 = vmatpush1.xpose.msra.mxu0 0.0
          %648 = vmatprep.subr.mxu0 0.0
          %649 = vmatpush1.xpose.msra.mxu0 0.0
          %650 = vmatprep.subr.mxu0 0.0
          %651 = vmatpush1.xpose.msra.mxu0 0.0
          %652 = vmatprep.subr.mxu0 0.0
          %653 = vmatpush1.xpose.msra.mxu0 0.0
          %654 = vmatprep.subr.mxu0 0.0
          %655 = vmatpush1.xpose.msra.mxu0 0.0
          %656 = vmatprep.subr.mxu0 0.0
          %657 = vmatpush1.xpose.msra.mxu0 0.0
          %658 = vmatprep.subr.mxu0 0.0
          %659 = vmatpush1.xpose.msra.mxu0 0.0
          %660 = vmatprep.mubr.f32.mxu0 0.0
          %661 = vmatmul.mubr.f32.gmra.mrb[0].mxu0 %v594
          %v662 = vpop.f32.mrb[0].mxu0
          %v663 = vadd.f32 0.0, %v662
          %v664 = vpop.f32.mrb[0].mxu0
          %665 = vmatprep.mubr.f32.mxu0 0.0
          %666 = vmatmul.mubr.f32.gmra.mrb[0].mxu0 %v595
          %v667 = vpop.f32.mrb[0].mxu0
          %v668 = vadd.f32 0.0, %v667
          %v669 = vpop.f32.mrb[0].mxu0
          %670 = vdwg.mxu0
          %v671 = vlaneseq
          %v672 = vshrl.u32 %v671, 7
          %v673 = vadd.s32 %v672, 8
          %v674 = vstv %s570
          %v675 = vadd.s32 %v674, %v672
          %v676 = vadd.s32 %v674, %v673
          %v677 = vlaneseq
          %v678 = vand.u32 %v677, 127
          %v679 = vstv %s569
          %v680 = vadd.s32 %v679, %v678
          %vm681 = vcmp.ge.s32.totalorder %v675, %v680
          %vm682 = vcmp.ge.s32.totalorder %v676, %v680
          %v683 = vsel %vm681, %v663, -1e+30
          %v684 = vsel %vm682, %v668, -1e+30
          %v685 = vld [vmem:[#allocation3] sm:$0xff]
          %v686 = vld [vmem:[#allocation3 + $0x8] sm:$0xff]
          %vm687 = vcmask 130048
          %v688 = vsel %vm687, %v683, -inf
          %689 = vmax.xlane.f32.xlu0 %v688
          %v690 = vpop.xlane.xlu0 %689
          %v691 = vsel %vm687, %v684, -inf
          %692 = vmax.xlane.f32.xlu0 %v691
          %v693 = vpop.xlane.xlu0 %692
          %v694 = vmax.f32 %v685, %v690
          %v695 = vmax.f32 %v686, %v693
          %v696 = vsub.f32 %v685, %v694
          %v697 = vsub.f32 %v686, %v695
          %v698 = vmul.f32 %v696, 1.442695
          %v699 = vpow.pop %v698
          %v700 = vmul.f32 %v697, 1.442695
          %v701 = vpow.pop %v700
          %703 = vset.pattern.permute.xlu0 0
          %704 = vperm.xlu0 %703, %v694
          %v705 = vpop.permute.xlu0 %704
          %708 = vset.pattern.permute.xlu0 0
          %709 = vperm.xlu0 %708, %v695
          %v710 = vpop.permute.xlu0 %709
          %v712 = vsub.f32 %v683, %v705
          %v713 = vsub.f32 %v684, %v710
          %v714 = vmul.f32 %v712, 1.442695
          %v715 = vpow.pop %v714
          %v716 = vmul.f32 %v713, 1.442695
          %v717 = vpow.pop %v716
          %v718 = vld [vmem:[#allocation4] sm:$0xff]
          %v719 = vld [vmem:[#allocation4 + $0x8] sm:$0xff]
          %v720 = vmul.f32 %v699, %v718
          %v721 = vmul.f32 %v701, %v719
          %v722 = vsel %vm687, %v715, 0.0
          %723 = vadd.xlane.f32.xlu0 %v722
          %v724 = vpop.xlane.xlu0 %723
          %v725 = vsel %vm687, %v717, 0.0
          %726 = vadd.xlane.f32.xlu0 %v725
          %v727 = vpop.xlane.xlu0 %726
          %v728 = vadd.f32 %v720, %v724
          %v729 = vadd.f32 %v721, %v727
          %vm730 = vcmask 7168
          %731 = vst.msk [vmem:[#allocation4] sm:$0xff] %vm730, %v728
          %732 = vst.msk [vmem:[#allocation4 + $0x8] sm:$0xff] %vm730, %v729
          %v733 = vld [vmem:[#allocation5] sm:$0xff]
          %v734 = vld [vmem:[#allocation5 + $0x8] sm:$0xff]
          %736 = vset.pattern.permute.xlu0 0
          %737 = vperm.xlu0 %736, %v699
          %v738 = vpop.permute.xlu0 %737
          %741 = vset.pattern.permute.xlu0 0
          %742 = vperm.xlu0 %741, %v701
          %v743 = vpop.permute.xlu0 %742
          %v745 = vmul.f32 %v738, %v733
          %v746 = vmul.f32 %v743, %v734
          %v747 = vpack.c.bf16 %v717, %v715
          %v748 = vld [vmem:[%s464] sm:$0xf]
          %v749 = vld [vmem:[%s464 + $0x4] sm:$0xf]
          %v752 = vunpack.c.l.b16 %v748
          %v753 = vunpack.c.l.b16 %v749
          %v754 = vpack.c.b16 %v753, %v752
          %v757 = vsel %vm687, %v747, 0
          %759 = vmatprep.subr.bf16.mxu0 0
          %760 = vmatpush1.bf16.msra.mxu0 %v754
          %761 = vmatprep.subr.bf16.mxu0 0
          %762 = vmatpush1.bf16.msra.mxu0 0
          %763 = vmatprep.subr.bf16.mxu0 0
          %764 = vmatpush1.bf16.msra.mxu0 0
          %765 = vmatprep.subr.bf16.mxu0 0
          %766 = vmatpush1.bf16.msra.mxu0 0
          %767 = vmatprep.subr.bf16.mxu0 0
          %768 = vmatpush1.bf16.msra.mxu0 0
          %769 = vmatprep.subr.bf16.mxu0 0
          %770 = vmatpush1.bf16.msra.mxu0 0
          %771 = vmatprep.subr.bf16.mxu0 0
          %772 = vmatpush1.bf16.msra.mxu0 0
          %773 = vmatprep.subr.bf16.mxu0 0
          %774 = vmatpush1.bf16.msra.mxu0 0
          %775 = vmatprep.subr.bf16.mxu0 0
          %776 = vmatpush1.bf16.msra.mxu0 0
          %777 = vmatprep.subr.bf16.mxu0 0
          %778 = vmatpush1.bf16.msra.mxu0 0
          %779 = vmatprep.subr.bf16.mxu0 0
          %780 = vmatpush1.bf16.msra.mxu0 0
          %781 = vmatprep.subr.bf16.mxu0 0
          %782 = vmatpush1.bf16.msra.mxu0 0
          %783 = vmatprep.subr.bf16.mxu0 0
          %784 = vmatpush1.bf16.msra.mxu0 0
          %785 = vmatprep.subr.bf16.mxu0 0
          %786 = vmatpush1.bf16.msra.mxu0 0
          %787 = vmatprep.subr.bf16.mxu0 0
          %788 = vmatpush1.bf16.msra.mxu0 0
          %789 = vmatprep.subr.bf16.mxu0 0
          %790 = vmatpush1.bf16.msra.mxu0 0
          %791 = vmatprep.mubr.bf16.mxu0 0
          %792 = vmatmul.mubr.bf16.gmra.mrb[0].mxu0 %v757
          %v793 = vpop.f32.mrb[0].mxu0
          %v794 = vadd.f32 0.0, %v793
          %v795 = vpop.f32.mrb[0].mxu0
          %v796 = vpop.f32.mrb[0].mxu0
          %v797 = vadd.f32 0.0, %v796
          %v798 = vpop.f32.mrb[0].mxu0
          %799 = vdwg.mxu0
          %v800 = vadd.f32 %v745, %v794
          %v801 = vadd.f32 %v746, %v797
          %802 = vst [vmem:[#allocation5] sm:$0xff] %v800
          %803 = vst [vmem:[#allocation5 + $0x8] sm:$0xff] %v801
          %804 = vst.msk [vmem:[#allocation3] sm:$0xff] %vm730, %v694
          %805 = vst.msk [vmem:[#allocation3 + $0x8] sm:$0xff] %vm730, %v695
        $region84: #{llama_like_forward.10} parent=47 // pred_fallthru
          _
        // Predicated region
        $region85: #{llama_like_forward.10} parent=47 // pred_check
          %p806 = pneg %p536
        $region86: #{llama_like_forward.10} parent=47 // pred_check_branch
          %808 = sbr.rel (%p806) target = $region88
        $region87: #{llama_like_forward.10} parent=47 // pred_region
          %v809 = vld [vmem:[#allocation5] sm:$0xff]
          %v810 = vld [vmem:[#allocation5 + $0x8] sm:$0xff]
          %v811 = vld [vmem:[#allocation4] sm:$0xff]
          %v812 = vld [vmem:[#allocation4 + $0x8] sm:$0xff]
          %v813 = vrcp.pop %v811
          %v814 = vrcp.pop %v812
          %816 = vset.pattern.permute.xlu0 0
          %817 = vperm.xlu0 %816, %v813
          %v818 = vpop.permute.xlu0 %817
          %821 = vset.pattern.permute.xlu0 0
          %822 = vperm.xlu0 %821, %v814
          %v823 = vpop.permute.xlu0 %822
          %v825 = vmul.f32 %v809, %v818
          %v826 = vmul.f32 %v810, %v823
          %v827 = vpack.c.bf16 %v826, %v825
          %v829 = vunpack.c.l.b16 %v827
          %v830 = vunpack.c.h.b16 %v827
          %v831 = vpack.c.b16 %v829, %v829
          %v832 = vpack.c.b16 %v830, %v830
          %835 = vst [vmem:[%s520] sm:$0xf] %v831
          %836 = vst [vmem:[%s520 + $0x4] sm:$0xf] %v832
        $region88: #{llama_like_forward.10} parent=47 // pred_fallthru
          _
        %s837 = sand.u32 %s265, 1
        %s838 = scalar_lea.sflag [#allocation8], %s837
        %s839 = sand.u32 %s265, 1
        %s840 = smul.addr %s839, 8
        %s841 = scalar_lea.vmem [#allocation18], %s840
        // Predicated region
        $region89: #{llama_like_forward.10} parent=47 // pred_check
          %p842 = pneg %p275
        $region90: #{llama_like_forward.10} parent=47 // pred_check_branch
          %844 = sbr.rel (%p842) target = $region92
        $region91: #{llama_like_forward.10} parent=47 // pred_region
          %s845 = sadd.s32 %s35, %s37
          %s846 = smul.u32 2, %s845
          %s848 = ssub.s32 128, 128
          %849 = vsyncadd %s838, %s848
          %s850 = smul.addr %s846, 2
          %s851 = sadd.s32 %s36, %s850
          %s852 = smul.addr %s851, 64
          %s853 = scalar_lea.hbm %s7, %s852
          %s854 = sshll.u32 %s841, 4
          %s855 = int_to_ptr.vmem [resolvable:$true] %s854
          %860 = dma.vmem_to_hbm [thread:$0]  %s855, 128, %s853, %s838, 64, 128, 4
        $region92: #{llama_like_forward.10} parent=47 // pred_fallthru
          _
      $region48: #{llama_like_forward.10} parent=5 // pred_fallthru
        _
      %p861 = scmp.le.s32.totalorder 2, %s24
      // Predicated region
      $region93: #{llama_like_forward.10} parent=5 // pred_check
        %p862 = pneg %p861
      $region94: #{llama_like_forward.10} parent=5 // pred_check_branch
        %864 = sbr.rel (%p862) target = $region96
      $region95: #{llama_like_forward.10} parent=5 // pred_region
        %s865 = ssub.s32 %s24, 2
        // Predicated region
        $region97: #{llama_like_forward.10} parent=95 // pred_check
          %p866 = pneg %p281
        $region98: #{llama_like_forward.10} parent=95 // pred_check_branch
          %868 = sbr.rel (%p866) target = $region100
        $region99: #{llama_like_forward.10} parent=95 // pred_region
          %s869 = sand.u32 %s266, 1
          %s870 = scalar_lea.sflag [#allocation8], %s869
          %s871 = sand.u32 %s266, 1
          %s872 = smul.addr %s871, 8
          %s873 = scalar_lea.vmem [#allocation18], %s872
          %874 = dma.done %s870, 128
        $region100: #{llama_like_forward.10} parent=95 // pred_fallthru
          _
      $region96: #{llama_like_forward.10} parent=5 // pred_fallthru
        _
    $region6: #{llama_like_forward.10} parent=1 // loop_footer
      %s28 = sadd.s32 1, %s24
    $region7: #{llama_like_forward.10} parent=1 // loop_footer_branch
      %23 = sbr.rel target = $region3
    $region8: #{llama_like_forward.10} parent=1 // loop_exit
      _
    %875 = vsyncpa [#allocation7], 1
    %s876 = scalar_lea.sflag [#allocation7], 1
    %877 = vsyncpa %s876, 1
    %878 = vsyncpa [#allocation10], 1
    %s879 = scalar_lea.sflag [#allocation10], 1
    %880 = vsyncpa %s879, 1
    %881 = vsyncpa [#allocation13], 1
    %882 = vsyncpa [#allocation16], 1
    %883 = vsyncpa [#allocation8], 1
    %s884 = scalar_lea.sflag [#allocation8], 1
    %885 = vsyncpa %s884, 1

// kernel: llama_like_forward.9
$region0: #{llama_like_forward.9}
  #allocation0 [shape = 'u32[]', space=smem, size = 0x4, offset = 0x4, fixed_abs, tag = 'smem constant byte address 0x4 - core index']
  #allocation1 [shape = 'u32[144,128]{1,0:T(1,128)}', space=vmem, size = 0x12000, scoped, tag = 'internal scratch']
  %s0 = inlined_call_operand.hbm [shape: bf16[32,256], index: 0, kind: input, shape index: {}]
  %s1 = inlined_call_operand.hbm [shape: f32[1,256], index: 1, kind: input, shape index: {}]
  %s2 = inlined_call_operand.hbm [shape: bf16[256,768], index: 2, kind: input, shape index: {}]
  %s3 = inlined_call_operand.hbm [shape: bf16[32,768], index: 3, kind: output, shape index: {}]
  %s4 = sld [smem:[#allocation0]]
  $region57: #{llama_like_forward.9} parent=0
    _
  %s6 = ssub.s32 1, %s4
  %s7 = scalar_select 0, %s6, %s4
  $region1: #{llama_like_forward.9} parent=0
    #allocation2 [shape = 'u8[16384]{0}', space=vmem, size = 0x4000, scoped, tag = 'input window, operand 0, single buffered']
    #allocation3 [shape = 's32[2]{0}', space=sflag, size = 0x8, scoped, tag = 'scoped memory for llama_like_forward.9']
    #allocation4 [shape = 's32[2]{0}', space=sflag, size = 0x8, scoped, tag = 'scoped memory for llama_like_forward.9']
    #allocation5 [shape = 'u8[1024]{0}', space=vmem, size = 0x400, scoped, tag = 'input window, operand 1, single buffered']
    #allocation6 [shape = 's32[1]{0}', space=sflag, size = 0x4, scoped, tag = 'scoped memory for llama_like_forward.9']
    #allocation7 [shape = 'u8[393216]{0}', space=vmem, size = 0x60000, scoped, tag = 'input window, operand 2']
    #allocation8 [shape = 'u8[49152]{0}', space=vmem, size = 0xc000, scoped, tag = 'output window, operand 0']
    %8 = vsyncpa [#allocation3], 0
    %9 = vsyncpa [#allocation6], 0
    %10 = vsyncpa [#allocation4], 0
    %s11 = scalar_lea.sflag [#allocation4], 1
    %12 = vsyncpa %s11, 0
    loop: start=0, step=1, limit=4
    $region2: #{llama_like_forward.9} parent=1 // loop_pre_header
      _
    $region3: #{llama_like_forward.9} parent=1 // loop_header
      %s14 = sphi 0, %s18
      %p15 = scmp.ge.s32.totalorder %s14, 4
      %s21 = sphi 0, %s33
      %s22 = sphi 0, %s29
      %s23 = sphi 0, %s21
      %s24 = sphi 0, %s22
      %s25 = sphi 0, %s23
      %s26 = sphi 0, %s24
      %s36 = sphi 0, %s38
      %s39 = sphi 0, %s36
      %s40 = sphi 0, %s39
      %s56 = sphi 0, %s40
      %s60 = sphi 0, %s60
      %s62 = sphi 0, %s60
      %s63 = sphi 0, %s62
      %s77 = sphi 0, %s63
      %s83 = sphi 0, %s85
      %s86 = sphi 0, %s83
      %s87 = sphi 0, %s86
      %s103 = sphi 0, %s87
      %s111 = sphi 0, %s113
      %s114 = sphi 0, %s111
      %s115 = sphi 0, %s114
      %s131 = sphi 0, %s115
    $region4: #{llama_like_forward.9} parent=1 // loop_header_branch
      %17 = sbr.rel (%p15) target = $region8
    $region5: #{llama_like_forward.9} parent=1 // loop_body
      %s19 = ssub.s32 %s14, 1
      %s20 = ssub.s32 %s14, 2
      %s27 = sadd.s32 1, %s22
      %p28 = scmp.ge.s32.totalorder %s27, 2
      %s29 = scalar_select %p28, 0, %s27
      %s30 = sadd.s32 1, %s21
      %s31 = scalar_select %p28, %s30, %s21
      %p32 = scmp.ge.s32.totalorder %s31, 1
      %s33 = scalar_select %p32, 0, %s31
      %s34 = ssub.s32 %s21, %s33
      %p35 = scmp.eq.s32.totalorder %s34, 0
      %s37 = sadd.s32 %s36, 1
      %s38 = scalar_select %p35, %s36, %s37
      %p41 = pneg %p35
      %p42 = scmp.eq.s32.totalorder %s14, 1
      %p43 = por %p41, %p42
      %p44 = scmp.ne.s32.totalorder %s36, %s39
      %p45 = scmp.eq.s32.totalorder %s14, 0
      %p46 = por %p44, %p45
      %p47 = scmp.ne.s32.totalorder %s36, %s39
      %p48 = scmp.eq.s32.totalorder %s19, 1
      %p49 = por %p47, %p48
      %p50 = scmp.ne.s32.totalorder %s39, %s40
      %p51 = scmp.eq.s32.totalorder %s19, 0
      %p52 = por %p50, %p51
      %p53 = scmp.ne.s32.totalorder %s39, %s40
      %p54 = scmp.eq.s32.totalorder %s20, 1
      %p55 = por %p53, %p54
      %p57 = scmp.ne.s32.totalorder %s40, %s56
      %p58 = scmp.eq.s32.totalorder %s20, 0
      %p59 = por %p57, %p58
      %s61 = sadd.s32 %s60, 1
      %p64 = scmp.eq.s32.totalorder %s14, 1
      %p65 = scmp.ne.s32.totalorder %s60, %s62
      %p66 = scmp.eq.s32.totalorder %s14, 0
      %p67 = por %p65, %p66
      %p68 = scmp.ne.s32.totalorder %s60, %s62
      %p69 = scmp.eq.s32.totalorder %s19, 1
      %p70 = por %p68, %p69
      %p71 = scmp.ne.s32.totalorder %s62, %s63
      %p72 = scmp.eq.s32.totalorder %s19, 0
      %p73 = por %p71, %p72
      %p74 = scmp.ne.s32.totalorder %s62, %s63
      %p75 = scmp.eq.s32.totalorder %s20, 1
      %p76 = por %p74, %p75
      %p78 = scmp.ne.s32.totalorder %s63, %s77
      %p79 = scmp.eq.s32.totalorder %s20, 0
      %p80 = por %p78, %p79
      %s81 = ssub.s32 %s22, %s29
      %p82 = scmp.eq.s32.totalorder %s81, 0
      %s84 = sadd.s32 %s83, 1
      %s85 = scalar_select %p82, %s83, %s84
      %p88 = pneg %p82
      %p89 = scmp.eq.s32.totalorder %s14, 1
      %p90 = por %p88, %p89
      %p91 = scmp.ne.s32.totalorder %s83, %s86
      %p92 = scmp.eq.s32.totalorder %s14, 0
      %p93 = por %p91, %p92
      %p94 = scmp.ne.s32.totalorder %s83, %s86
      %p95 = scmp.eq.s32.totalorder %s19, 1
      %p96 = por %p94, %p95
      %p97 = scmp.ne.s32.totalorder %s86, %s87
      %p98 = scmp.eq.s32.totalorder %s19, 0
      %p99 = por %p97, %p98
      %p100 = scmp.ne.s32.totalorder %s86, %s87
      %p101 = scmp.eq.s32.totalorder %s20, 1
      %p102 = por %p100, %p101
      %p104 = scmp.ne.s32.totalorder %s87, %s103
      %p105 = scmp.eq.s32.totalorder %s20, 0
      %p106 = por %p104, %p105
      %s107 = ssub.s32 %s21, %s33
      %s108 = ssub.s32 %s22, %s29
      %s109 = sor.u32 %s107, %s108
      %p110 = scmp.eq.s32.totalorder %s109, 0
      %s112 = sadd.s32 %s111, 1
      %s113 = scalar_select %p110, %s111, %s112
      %p116 = pneg %p110
      %p117 = scmp.eq.s32.totalorder %s14, 1
      %p118 = por %p116, %p117
      %p119 = scmp.ne.s32.totalorder %s111, %s114
      %p120 = scmp.eq.s32.totalorder %s14, 0
      %p121 = por %p119, %p120
      %p122 = scmp.ne.s32.totalorder %s111, %s114
      %p123 = scmp.eq.s32.totalorder %s19, 1
      %p124 = por %p122, %p123
      %p125 = scmp.ne.s32.totalorder %s114, %s115
      %p126 = scmp.eq.s32.totalorder %s19, 0
      %p127 = por %p125, %p126
      %p128 = scmp.ne.s32.totalorder %s114, %s115
      %p129 = scmp.eq.s32.totalorder %s20, 1
      %p130 = por %p128, %p129
      %p132 = scmp.ne.s32.totalorder %s115, %s131
      %p133 = scmp.eq.s32.totalorder %s20, 0
      %p134 = por %p132, %p133
      %p135 = scmp.le.s32.totalorder 1, %s14
      %p136 = scmp.lt.s32.totalorder %s14, 3
      %p137 = pnand %p135, %p136
      %p138 = pneg %p137
      // Predicated region
      $region9: #{llama_like_forward.9} parent=5 // pred_check
        _
      $region10: #{llama_like_forward.9} parent=5 // pred_check_branch
        %140 = sbr.rel (%p137) target = $region12
      $region11: #{llama_like_forward.9} parent=5 // pred_region
        %s141 = ssub.s32 %s14, 1
        // Predicated region
        $region13: #{llama_like_forward.9} parent=11 // pred_check
          %p142 = pneg %p52
        $region14: #{llama_like_forward.9} parent=11 // pred_check_branch
          %144 = sbr.rel (%p142) target = $region16
        $region15: #{llama_like_forward.9} parent=11 // pred_region
          %s145 = smul.u32 4, %s23
          %s147 = ssub.s32 512, 512
          %148 = vsyncadd [#allocation3], %s147
          %s149 = smul.addr %s145, 2
          %s150 = smul.addr %s149, 64
          %s151 = scalar_lea.hbm %s0, %s150
          %s152 = sshll.u32 [#allocation2], 4
          %s153 = int_to_ptr.vmem [resolvable:$true] %s152
          %158 = dma.hbm_to_vmem [thread:$0]  %s151, 512, %s153, [#allocation3], 128, 128, 8
        $region16: #{llama_like_forward.9} parent=11 // pred_fallthru
          _
        // Predicated region
        $region17: #{llama_like_forward.9} parent=11 // pred_check
          %p159 = pneg %p73
        $region18: #{llama_like_forward.9} parent=11 // pred_check_branch
          %161 = sbr.rel (%p159) target = $region20
        $region19: #{llama_like_forward.9} parent=11 // pred_region
          %s163 = ssub.s32 32, 32
          %164 = vsyncadd [#allocation6], %s163
          %s166 = sshll.u32 [#allocation5], 4
          %s167 = int_to_ptr.vmem [resolvable:$true] %s166
          %169 = dma.hbm_to_vmem [thread:$0]  %s1, 32, %s167, [#allocation6]
        $region20: #{llama_like_forward.9} parent=11 // pred_fallthru
          _
      $region12: #{llama_like_forward.9} parent=5 // pred_fallthru
        _
      %p170 = scmp.lt.s32.totalorder %s14, 2
      // Predicated region
      $region21: #{llama_like_forward.9} parent=5 // pred_check
        %p171 = pneg %p170
      $region22: #{llama_like_forward.9} parent=5 // pred_check_branch
        %173 = sbr.rel (%p171) target = $region24
      $region23: #{llama_like_forward.9} parent=5 // pred_region
        // Predicated region
        $region25: #{llama_like_forward.9} parent=23 // pred_check
          %p174 = pneg %p93
        $region26: #{llama_like_forward.9} parent=23 // pred_check_branch
          %176 = sbr.rel (%p174) target = $region28
        $region27: #{llama_like_forward.9} parent=23 // pred_region
          %s177 = sand.u32 %s14, 1
          %s178 = scalar_lea.sflag [#allocation3], %s177
          %s179 = sand.u32 %s83, 1
          %s180 = smul.addr %s179, 384
          %s181 = scalar_lea.vmem [#allocation7], %s180
          %s182 = smul.u32 3, %s22
          %s184 = ssub.s32 6144, 6144
          %185 = vsyncadd %s178, %s184
          %s186 = smul.addr %s182, 64
          %s187 = scalar_lea.hbm %s2, %s186
          %s188 = sshll.u32 %s181, 4
          %s189 = int_to_ptr.vmem [resolvable:$true] %s188
          %194 = dma.hbm_to_vmem [thread:$0]  %s187, 6144, %s189, %s178, 384, 192, 12
        $region28: #{llama_like_forward.9} parent=23 // pred_fallthru
          _
      $region24: #{llama_like_forward.9} parent=5 // pred_fallthru
        _
      %p195 = scmp.le.s32.totalorder 1, %s14
      %p196 = scmp.lt.s32.totalorder %s14, 3
      %p197 = pnand %p195, %p196
      %p198 = pneg %p197
      // Predicated region
      $region29: #{llama_like_forward.9} parent=5 // pred_check
        _
      $region30: #{llama_like_forward.9} parent=5 // pred_check_branch
        %200 = sbr.rel (%p197) target = $region32
      $region31: #{llama_like_forward.9} parent=5 // pred_region
        %s201 = ssub.s32 %s14, 1
        // Predicated region
        $region33: #{llama_like_forward.9} parent=31 // pred_check
          %p202 = pneg %p52
        $region34: #{llama_like_forward.9} parent=31 // pred_check_branch
          %204 = sbr.rel (%p202) target = $region36
        $region35: #{llama_like_forward.9} parent=31 // pred_region
          %205 = dma.done [#allocation3], 512
        $region36: #{llama_like_forward.9} parent=31 // pred_fallthru
          _
        // Predicated region
        $region37: #{llama_like_forward.9} parent=31 // pred_check
          %p206 = pneg %p73
        $region38: #{llama_like_forward.9} parent=31 // pred_check_branch
          %208 = sbr.rel (%p206) target = $region40
        $region39: #{llama_like_forward.9} parent=31 // pred_region
          %209 = dma.done [#allocation6], 32
        $region40: #{llama_like_forward.9} parent=31 // pred_fallthru
          _
        %s210 = sand.u32 %s19, 1
        %s211 = scalar_lea.sflag [#allocation3], %s210
        %s212 = sand.u32 %s86, 1
        %s213 = smul.addr %s212, 384
        %s214 = scalar_lea.vmem [#allocation7], %s213
        // Predicated region
        $region41: #{llama_like_forward.9} parent=31 // pred_check
          %p215 = pneg %p99
        $region42: #{llama_like_forward.9} parent=31 // pred_check_branch
          %217 = sbr.rel (%p215) target = $region44
        $region43: #{llama_like_forward.9} parent=31 // pred_region
          %218 = dma.done %s211, 6144
        $region44: #{llama_like_forward.9} parent=31 // pred_fallthru
          _
        %p219 = pneg %p52
        %p220 = pneg %p49
        %p221 = pneg %p73
        %p222 = pneg %p70
        %s223 = sand.u32 %s19, 1
        %s224 = scalar_lea.sflag [#allocation3], %s223
        %s225 = sand.u32 %s86, 1
        %s226 = smul.addr %s225, 384
        %s227 = scalar_lea.vmem [#allocation7], %s226
        %p228 = pneg %p99
        %p229 = pneg %p96
        %p230 = pneg %p127
        %p231 = pneg %p124
        %s232 = sand.u32 %s114, 1
        %s233 = scalar_lea.sflag [#allocation4], %s232
        %s234 = sand.u32 %s114, 1
        %s235 = smul.addr %s234, 48
        %s236 = scalar_lea.vmem [#allocation8], %s235
        %s237 = smul.u32 4, %s23
        %s238 = smul.u32 3, %s24
        %s239 = smul.u32 4, %s23
        %s240 = smul.u32 3, %s24
        %v242 = vld [vmem:[#allocation2] sm:$0xff]
        %v243 = vld [vmem:[#allocation2 + $0x8] sm:$0xff]
        %v244 = vld [vmem:[#allocation2 + $0x10] sm:$0xff]
        %v245 = vld [vmem:[#allocation2 + $0x18] sm:$0xff]
        %v246 = vunpack.c.l.bf16 %v242
        %v247 = vunpack.c.h.bf16 %v242
        %v248 = vunpack.c.l.bf16 %v243
        %v249 = vunpack.c.h.bf16 %v243
        %v250 = vunpack.c.l.bf16 %v244
        %v251 = vunpack.c.h.bf16 %v244
        %v252 = vunpack.c.l.bf16 %v245
        %v253 = vunpack.c.h.bf16 %v245
        %v254 = vmul.f32 %v246, %v246
        %v255 = vmul.f32 %v247, %v247
        %v256 = vmul.f32 %v248, %v248
        %v257 = vmul.f32 %v249, %v249
        %v258 = vmul.f32 %v250, %v250
        %v259 = vmul.f32 %v251, %v251
        %v260 = vmul.f32 %v252, %v252
        %v261 = vmul.f32 %v253, %v253
        %v262 = vadd.f32 %v254, %v255
        %263 = vadd.xlane.f32.xlu0 %v262
        %v264 = vpop.xlane.xlu0 %263
        %v265 = vadd.f32 %v256, %v257
        %266 = vadd.xlane.f32.xlu0 %v265
        %v267 = vpop.xlane.xlu0 %266
        %v268 = vadd.f32 %v258, %v259
        %269 = vadd.xlane.f32.xlu0 %v268
        %v270 = vpop.xlane.xlu0 %269
        %v271 = vadd.f32 %v260, %v261
        %272 = vadd.xlane.f32.xlu0 %v271
        %v273 = vpop.xlane.xlu0 %272
        %v274 = vrcp.pop 256.0
        %v275 = vmul.f32 %v264, %v274
        %v276 = vmul.f32 %v267, %v274
        %v277 = vmul.f32 %v270, %v274
        %v278 = vmul.f32 %v273, %v274
        %v279 = vadd.f32 %v275, 1e-06
        %v280 = vadd.f32 %v276, 1e-06
        %v281 = vadd.f32 %v277, 1e-06
        %v282 = vadd.f32 %v278, 1e-06
        %v283 = vrsqrt.pop %v279
        %v284 = vrsqrt.pop %v280
        %v285 = vrsqrt.pop %v281
        %v286 = vrsqrt.pop %v282
        %v287 = vmul.f32 %v246, %v283
        %v288 = vmul.f32 %v247, %v283
        %v289 = vmul.f32 %v248, %v284
        %v290 = vmul.f32 %v249, %v284
        %v291 = vmul.f32 %v250, %v285
        %v292 = vmul.f32 %v251, %v285
        %v293 = vmul.f32 %v252, %v286
        %v294 = vmul.f32 %v253, %v286
        %v295 = vld [vmem:[#allocation5] sm:$0x3]
        %v297 = vlaneseq
        %v298 = vshrl.u32 %v297, 7
        %v299 = vsub.s32 0, %v298
        %v300 = vrot.slane %v295, %v299
        %v301 = vlaneseq
        %v302 = vshrl.u32 %v301, 7
        %v303 = vsub.s32 1, %v302
        %v304 = vrot.slane %v295, %v303
        %v307 = vmul.f32 %v287, %v300
        %v308 = vmul.f32 %v288, %v304
        %v309 = vmul.f32 %v289, %v300
        %v310 = vmul.f32 %v290, %v304
        %v311 = vmul.f32 %v291, %v300
        %v312 = vmul.f32 %v292, %v304
        %v313 = vmul.f32 %v293, %v300
        %v314 = vmul.f32 %v294, %v304
        %v315 = vpack.c.bf16 %v309, %v307
        %v316 = vpack.c.bf16 %v310, %v308
        %v317 = vpack.c.bf16 %v313, %v311
        %v318 = vpack.c.bf16 %v314, %v312
        %v319 = vld [vmem:[%s214] sm:$0xff]
        %v320 = vld [vmem:[%s214 + $0x8] sm:$0xf]
        %v321 = vld [vmem:[%s214 + $0xc] sm:$0xff]
        %v322 = vld [vmem:[%s214 + $0x14] sm:$0xf]
        %v323 = vld [vmem:[%s214 + $0x18] sm:$0xff]
        %v324 = vld [vmem:[%s214 + $0x20] sm:$0xf]
        %v325 = vld [vmem:[%s214 + $0x24] sm:$0xff]
        %v326 = vld [vmem:[%s214 + $0x2c] sm:$0xf]
        %v327 = vld [vmem:[%s214 + $0x30] sm:$0xff]
        %v328 = vld [vmem:[%s214 + $0x38] sm:$0xf]
        %v329 = vld [vmem:[%s214 + $0x3c] sm:$0xff]
        %v330 = vld [vmem:[%s214 + $0x44] sm:$0xf]
        %v331 = vld [vmem:[%s214 + $0x48] sm:$0xff]
        %v332 = vld [vmem:[%s214 + $0x50] sm:$0xf]
        %v333 = vld [vmem:[%s214 + $0x54] sm:$0xff]
        %v334 = vld [vmem:[%s214 + $0x5c] sm:$0xf]
        %v335 = vld [vmem:[%s214 + $0x60] sm:$0xff]
        %v336 = vld [vmem:[%s214 + $0x68] sm:$0xf]
        %v337 = vld [vmem:[%s214 + $0x6c] sm:$0xff]
        %v338 = vld [vmem:[%s214 + $0x74] sm:$0xf]
        %v339 = vld [vmem:[%s214 + $0x78] sm:$0xff]
        %v340 = vld [vmem:[%s214 + $0x80] sm:$0xf]
        %v341 = vld [vmem:[%s214 + $0x84] sm:$0xff]
        %v342 = vld [vmem:[%s214 + $0x8c] sm:$0xf]
        %v343 = vld [vmem:[%s214 + $0x90] sm:$0xff]
        %v344 = vld [vmem:[%s214 + $0x98] sm:$0xf]
        %v345 = vld [vmem:[%s214 + $0x9c] sm:$0xff]
        %v346 = vld [vmem:[%s214 + $0xa4] sm:$0xf]
        %v347 = vld [vmem:[%s214 + $0xa8] sm:$0xff]
        %v348 = vld [vmem:[%s214 + $0xb0] sm:$0xf]
        %v349 = vld [vmem:[%s214 + $0xb4] sm:$0xff]
        %v350 = vld [vmem:[%s214 + $0xbc] sm:$0xf]
        %v351 = vld [vmem:[%s214 + $0xc0] sm:$0xff]
        %v352 = vld [vmem:[%s214 + $0xc8] sm:$0xf]
        %v353 = vld [vmem:[%s214 + $0xcc] sm:$0xff]
        %v354 = vld [vmem:[%s214 + $0xd4] sm:$0xf]
        %v355 = vld [vmem:[%s214 + $0xd8] sm:$0xff]
        %v356 = vld [vmem:[%s214 + $0xe0] sm:$0xf]
        %v357 = vld [vmem:[%s214 + $0xe4] sm:$0xff]
        %v358 = vld [vmem:[%s214 + $0xec] sm:$0xf]
        %v359 = vld [vmem:[%s214 + $0xf0] sm:$0xff]
        %v360 = vld [vmem:[%s214 + $0xf8] sm:$0xf]
        %v361 = vld [vmem:[%s214 + $0xfc] sm:$0xff]
        %v362 = vld [vmem:[%s214 + $0x104] sm:$0xf]
        %v363 = vld [vmem:[%s214 + $0x108] sm:$0xff]
        %v364 = vld [vmem:[%s214 + $0x110] sm:$0xf]
        %v365 = vld [vmem:[%s214 + $0x114] sm:$0xff]
        %v366 = vld [vmem:[%s214 + $0x11c] sm:$0xf]
        %v367 = vld [vmem:[%s214 + $0x120] sm:$0xff]
        %v368 = vld [vmem:[%s214 + $0x128] sm:$0xf]
        %v369 = vld [vmem:[%s214 + $0x12c] sm:$0xff]
        %v370 = vld [vmem:[%s214 + $0x134] sm:$0xf]
        %v371 = vld [vmem:[%s214 + $0x138] sm:$0xff]
        %v372 = vld [vmem:[%s214 + $0x140] sm:$0xf]
        %v373 = vld [vmem:[%s214 + $0x144] sm:$0xff]
        %v374 = vld [vmem:[%s214 + $0x14c] sm:$0xf]
        %v375 = vld [vmem:[%s214 + $0x150] sm:$0xff]
        %v376 = vld [vmem:[%s214 + $0x158] sm:$0xf]
        %v377 = vld [vmem:[%s214 + $0x15c] sm:$0xff]
        %v378 = vld [vmem:[%s214 + $0x164] sm:$0xf]
        %v379 = vld [vmem:[%s214 + $0x168] sm:$0xff]
        %v380 = vld [vmem:[%s214 + $0x170] sm:$0xf]
        %v381 = vld [vmem:[%s214 + $0x174] sm:$0xff]
        %v382 = vld [vmem:[%s214 + $0x17c] sm:$0xf]
        %v447 = vunpack.c.l.b16 %v319
        %v448 = vunpack.c.h.b16 %v319
        %v449 = vunpack.c.l.b16 %v320
        %v450 = vunpack.c.l.b16 %v321
        %v451 = vunpack.c.h.b16 %v321
        %v452 = vunpack.c.l.b16 %v322
        %v453 = vunpack.c.l.b16 %v323
        %v454 = vunpack.c.h.b16 %v323
        %v455 = vunpack.c.l.b16 %v324
        %v456 = vunpack.c.l.b16 %v325
        %v457 = vunpack.c.h.b16 %v325
        %v458 = vunpack.c.l.b16 %v326
        %v459 = vunpack.c.l.b16 %v327
        %v460 = vunpack.c.h.b16 %v327
        %v461 = vunpack.c.l.b16 %v328
        %v462 = vunpack.c.l.b16 %v329
        %v463 = vunpack.c.h.b16 %v329
        %v464 = vunpack.c.l.b16 %v330
        %v465 = vunpack.c.l.b16 %v331
        %v466 = vunpack.c.h.b16 %v331
        %v467 = vunpack.c.l.b16 %v332
        %v468 = vunpack.c.l.b16 %v333
        %v469 = vunpack.c.h.b16 %v333
        %v470 = vunpack.c.l.b16 %v334
        %v471 = vunpack.c.l.b16 %v335
        %v472 = vunpack.c.h.b16 %v335
        %v473 = vunpack.c.l.b16 %v336
        %v474 = vunpack.c.l.b16 %v337
        %v475 = vunpack.c.h.b16 %v337
        %v476 = vunpack.c.l.b16 %v338
        %v477 = vunpack.c.l.b16 %v339
        %v478 = vunpack.c.h.b16 %v339
        %v479 = vunpack.c.l.b16 %v340
        %v480 = vunpack.c.l.b16 %v341
        %v481 = vunpack.c.h.b16 %v341
        %v482 = vunpack.c.l.b16 %v342
        %v483 = vunpack.c.l.b16 %v343
        %v484 = vunpack.c.h.b16 %v343
        %v485 = vunpack.c.l.b16 %v344
        %v486 = vunpack.c.l.b16 %v345
        %v487 = vunpack.c.h.b16 %v345
        %v488 = vunpack.c.l.b16 %v346
        %v489 = vunpack.c.l.b16 %v347
        %v490 = vunpack.c.h.b16 %v347
        %v491 = vunpack.c.l.b16 %v348
        %v492 = vunpack.c.l.b16 %v349
        %v493 = vunpack.c.h.b16 %v349
        %v494 = vunpack.c.l.b16 %v350
        %v495 = vunpack.c.l.b16 %v351
        %v496 = vunpack.c.h.b16 %v351
        %v497 = vunpack.c.l.b16 %v352
        %v498 = vunpack.c.l.b16 %v353
        %v499 = vunpack.c.h.b16 %v353
        %v500 = vunpack.c.l.b16 %v354
        %v501 = vunpack.c.l.b16 %v355
        %v502 = vunpack.c.h.b16 %v355
        %v503 = vunpack.c.l.b16 %v356
        %v504 = vunpack.c.l.b16 %v357
        %v505 = vunpack.c.h.b16 %v357
        %v506 = vunpack.c.l.b16 %v358
        %v507 = vunpack.c.l.b16 %v359
        %v508 = vunpack.c.h.b16 %v359
        %v509 = vunpack.c.l.b16 %v360
        %v510 = vunpack.c.l.b16 %v361
        %v511 = vunpack.c.h.b16 %v361
        %v512 = vunpack.c.l.b16 %v362
        %v513 = vunpack.c.l.b16 %v363
        %v514 = vunpack.c.h.b16 %v363
        %v515 = vunpack.c.l.b16 %v364
        %v516 = vunpack.c.l.b16 %v365
        %v517 = vunpack.c.h.b16 %v365
        %v518 = vunpack.c.l.b16 %v366
        %v519 = vunpack.c.l.b16 %v367
        %v520 = vunpack.c.h.b16 %v367
        %v521 = vunpack.c.l.b16 %v368
        %v522 = vunpack.c.l.b16 %v369
        %v523 = vunpack.c.h.b16 %v369
        %v524 = vunpack.c.l.b16 %v370
        %v525 = vunpack.c.l.b16 %v371
        %v526 = vunpack.c.h.b16 %v371
        %v527 = vunpack.c.l.b16 %v372
        %v528 = vunpack.c.l.b16 %v373
        %v529 = vunpack.c.h.b16 %v373
        %v530 = vunpack.c.l.b16 %v374
        %v531 = vunpack.c.l.b16 %v375
        %v532 = vunpack.c.h.b16 %v375
        %v533 = vunpack.c.l.b16 %v376
        %v534 = vunpack.c.l.b16 %v377
        %v535 = vunpack.c.h.b16 %v377
        %v536 = vunpack.c.l.b16 %v378
        %v537 = vunpack.c.l.b16 %v379
        %v538 = vunpack.c.h.b16 %v379
        %v539 = vunpack.c.l.b16 %v380
        %v540 = vunpack.c.l.b16 %v381
        %v541 = vunpack.c.h.b16 %v381
        %v542 = vunpack.c.l.b16 %v382
        %v543 = vpack.c.b16 %v450, %v447
        %v544 = vpack.c.b16 %v451, %v448
        %v545 = vpack.c.b16 %v452, %v449
        %v546 = vpack.c.b16 %v456, %v453
        %v547 = vpack.c.b16 %v457, %v454
        %v548 = vpack.c.b16 %v458, %v455
        %v549 = vpack.c.b16 %v462, %v459
        %v550 = vpack.c.b16 %v463, %v460
        %v551 = vpack.c.b16 %v464, %v461
        %v552 = vpack.c.b16 %v468, %v465
        %v553 = vpack.c.b16 %v469, %v466
        %v554 = vpack.c.b16 %v470, %v467
        %v555 = vpack.c.b16 %v474, %v471
        %v556 = vpack.c.b16 %v475, %v472
        %v557 = vpack.c.b16 %v476, %v473
        %v558 = vpack.c.b16 %v480, %v477
        %v559 = vpack.c.b16 %v481, %v478
        %v560 = vpack.c.b16 %v482, %v479
        %v561 = vpack.c.b16 %v486, %v483
        %v562 = vpack.c.b16 %v487, %v484
        %v563 = vpack.c.b16 %v488, %v485
        %v564 = vpack.c.b16 %v492, %v489
        %v565 = vpack.c.b16 %v493, %v490
        %v566 = vpack.c.b16 %v494, %v491
        %v567 = vpack.c.b16 %v498, %v495
        %v568 = vpack.c.b16 %v499, %v496
        %v569 = vpack.c.b16 %v500, %v497
        %v570 = vpack.c.b16 %v504, %v501
        %v571 = vpack.c.b16 %v505, %v502
        %v572 = vpack.c.b16 %v506, %v503
        %v573 = vpack.c.b16 %v510, %v507
        %v574 = vpack.c.b16 %v511, %v508
        %v575 = vpack.c.b16 %v512, %v509
        %v576 = vpack.c.b16 %v516, %v513
        %v577 = vpack.c.b16 %v517, %v514
        %v578 = vpack.c.b16 %v518, %v515
        %v579 = vpack.c.b16 %v522, %v519
        %v580 = vpack.c.b16 %v523, %v520
        %v581 = vpack.c.b16 %v524, %v521
        %v582 = vpack.c.b16 %v528, %v525
        %v583 = vpack.c.b16 %v529, %v526
        %v584 = vpack.c.b16 %v530, %v527
        %v585 = vpack.c.b16 %v534, %v531
        %v586 = vpack.c.b16 %v535, %v532
        %v587 = vpack.c.b16 %v536, %v533
        %v588 = vpack.c.b16 %v540, %v537
        %v589 = vpack.c.b16 %v541, %v538
        %v590 = vpack.c.b16 %v542, %v539
        %639 = vmatprep.subr.bf16.mxu0 %v544
        %640 = vmatpush1.bf16.msra.mxu0 %v543
        %641 = vmatprep.subr.bf16.mxu0 %v547
        %642 = vmatpush1.bf16.msra.mxu0 %v546
        %643 = vmatprep.subr.bf16.mxu0 %v550
        %644 = vmatpush1.bf16.msra.mxu0 %v549
        %645 = vmatprep.subr.bf16.mxu0 %v553
        %646 = vmatpush1.bf16.msra.mxu0 %v552
        %647 = vmatprep.subr.bf16.mxu0 %v556
        %648 = vmatpush1.bf16.msra.mxu0 %v555
        %649 = vmatprep.subr.bf16.mxu0 %v559
        %650 = vmatpush1.bf16.msra.mxu0 %v558
        %651 = vmatprep.subr.bf16.mxu0 %v562
        %652 = vmatpush1.bf16.msra.mxu0 %v561
        %653 = vmatprep.subr.bf16.mxu0 %v565
        %654 = vmatpush1.bf16.msra.mxu0 %v564
        %655 = vmatprep.subr.bf16.mxu0 %v568
        %656 = vmatpush1.bf16.msra.mxu0 %v567
        %657 = vmatprep.subr.bf16.mxu0 %v571
        %658 = vmatpush1.bf16.msra.mxu0 %v570
        %659 = vmatprep.subr.bf16.mxu0 %v574
        %660 = vmatpush1.bf16.msra.mxu0 %v573
        %661 = vmatprep.subr.bf16.mxu0 %v577
        %662 = vmatpush1.bf16.msra.mxu0 %v576
        %663 = vmatprep.subr.bf16.mxu0 %v580
        %664 = vmatpush1.bf16.msra.mxu0 %v579
        %665 = vmatprep.subr.bf16.mxu0 %v583
        %666 = vmatpush1.bf16.msra.mxu0 %v582
        %667 = vmatprep.subr.bf16.mxu0 %v586
        %668 = vmatpush1.bf16.msra.mxu0 %v585
        %669 = vmatprep.subr.bf16.mxu0 %v589
        %670 = vmatpush1.bf16.msra.mxu0 %v588
        %671 = vmatprep.mubr.bf16.mxu0 %v316
        %672 = vmatmul.mubr.bf16.gmra.mrb[0].mxu0 %v315
        %v673 = vpop.f32.mrb[0].mxu0
        %v674 = vadd.f32 0.0, %v673
        %v675 = vpop.f32.mrb[0].mxu0
        %v676 = vadd.f32 0.0, %v675
        %v677 = vpop.f32.mrb[0].mxu0
        %v678 = vadd.f32 0.0, %v677
        %v679 = vpop.f32.mrb[0].mxu0
        %v680 = vadd.f32 0.0, %v679
        %681 = vmatprep.mubr.bf16.mxu0 %v318
        %682 = vmatmul.mubr.bf16.gmra.mrb[0].mxu0 %v317
        %v683 = vpop.f32.mrb[0].mxu0
        %v684 = vadd.f32 0.0, %v683
        %v685 = vpop.f32.mrb[0].mxu0
        %v686 = vadd.f32 0.0, %v685
        %v687 = vpop.f32.mrb[0].mxu0
        %v688 = vadd.f32 0.0, %v687
        %v689 = vpop.f32.mrb[0].mxu0
        %v690 = vadd.f32 0.0, %v689
        %691 = vdwg.mxu0
        %692 = vmatprep.subr.bf16.mxu0 0
        %693 = vmatpush1.bf16.msra.mxu0 %v545
        %694 = vmatprep.subr.bf16.mxu0 0
        %695 = vmatpush1.bf16.msra.mxu0 %v548
        %696 = vmatprep.subr.bf16.mxu0 0
        %697 = vmatpush1.bf16.msra.mxu0 %v551
        %698 = vmatprep.subr.bf16.mxu0 0
        %699 = vmatpush1.bf16.msra.mxu0 %v554
        %700 = vmatprep.subr.bf16.mxu0 0
        %701 = vmatpush1.bf16.msra.mxu0 %v557
        %702 = vmatprep.subr.bf16.mxu0 0
        %703 = vmatpush1.bf16.msra.mxu0 %v560
        %704 = vmatprep.subr.bf16.mxu0 0
        %705 = vmatpush1.bf16.msra.mxu0 %v563
        %706 = vmatprep.subr.bf16.mxu0 0
        %707 = vmatpush1.bf16.msra.mxu0 %v566
        %708 = vmatprep.subr.bf16.mxu0 0
        %709 = vmatpush1.bf16.msra.mxu0 %v569
        %710 = vmatprep.subr.bf16.mxu0 0
        %711 = vmatpush1.bf16.msra.mxu0 %v572
        %712 = vmatprep.subr.bf16.mxu0 0
        %713 = vmatpush1.bf16.msra.mxu0 %v575
        %714 = vmatprep.subr.bf16.mxu0 0
        %715 = vmatpush1.bf16.msra.mxu0 %v578
        %716 = vmatprep.subr.bf16.mxu0 0
        %717 = vmatpush1.bf16.msra.mxu0 %v581
        %718 = vmatprep.subr.bf16.mxu0 0
        %719 = vmatpush1.bf16.msra.mxu0 %v584
        %720 = vmatprep.subr.bf16.mxu0 0
        %721 = vmatpush1.bf16.msra.mxu0 %v587
        %722 = vmatprep.subr.bf16.mxu0 0
        %723 = vmatpush1.bf16.msra.mxu0 %v590
        %724 = vmatprep.mubr.bf16.mxu0 %v316
        %725 = vmatmul.mubr.bf16.gmra.mrb[0].mxu0 %v315
        %v726 = vpop.f32.mrb[0].mxu0
        %v727 = vadd.f32 0.0, %v726
        %v728 = vpop.f32.mrb[0].mxu0
        %v729 = vpop.f32.mrb[0].mxu0
        %v730 = vadd.f32 0.0, %v729
        %v731 = vpop.f32.mrb[0].mxu0
        %732 = vmatprep.mubr.bf16.mxu0 %v318
        %733 = vmatmul.mubr.bf16.gmra.mrb[0].mxu0 %v317
        %v734 = vpop.f32.mrb[0].mxu0
        %v735 = vadd.f32 0.0, %v734
        %v736 = vpop.f32.mrb[0].mxu0
        %v737 = vpop.f32.mrb[0].mxu0
        %v738 = vadd.f32 0.0, %v737
        %v739 = vpop.f32.mrb[0].mxu0
        %740 = vdwg.mxu0
        %v741 = vpack.c.bf16 %v678, %v674
        %v742 = vpack.c.bf16 %v680, %v676
        %v743 = vpack.c.bf16 %v730, %v727
        %v744 = vpack.c.bf16 %v688, %v684
        %v745 = vpack.c.bf16 %v690, %v686
        %v746 = vpack.c.bf16 %v738, %v735
        %v753 = vunpack.c.l.b16 %v741
        %v754 = vunpack.c.l.b16 %v742
        %v755 = vunpack.c.l.b16 %v743
        %v756 = vunpack.c.h.b16 %v741
        %v757 = vunpack.c.h.b16 %v742
        %v758 = vunpack.c.h.b16 %v743
        %v759 = vunpack.c.l.b16 %v744
        %v760 = vunpack.c.l.b16 %v745
        %v761 = vunpack.c.l.b16 %v746
        %v762 = vunpack.c.h.b16 %v744
        %v763 = vunpack.c.h.b16 %v745
        %v764 = vunpack.c.h.b16 %v746
        %v765 = vpack.c.b16 %v754, %v753
        %v766 = vpack.c.b16 %v755, %v755
        %v767 = vpack.c.b16 %v757, %v756
        %v768 = vpack.c.b16 %v758, %v758
        %v769 = vpack.c.b16 %v760, %v759
        %v770 = vpack.c.b16 %v761, %v761
        %v771 = vpack.c.b16 %v763, %v762
        %v772 = vpack.c.b16 %v764, %v764
        %781 = vst [vmem:[%s236] sm:$0xff] %v765
        %782 = vst [vmem:[%s236 + $0x8] sm:$0xf] %v766
        %783 = vst [vmem:[%s236 + $0xc] sm:$0xff] %v767
        %784 = vst [vmem:[%s236 + $0x14] sm:$0xf] %v768
        %785 = vst [vmem:[%s236 + $0x18] sm:$0xff] %v769
        %786 = vst [vmem:[%s236 + $0x20] sm:$0xf] %v770
        %787 = vst [vmem:[%s236 + $0x24] sm:$0xff] %v771
        %788 = vst [vmem:[%s236 + $0x2c] sm:$0xf] %v772
        %s789 = sand.u32 %s114, 1
        %s790 = scalar_lea.sflag [#allocation4], %s789
        %s791 = sand.u32 %s114, 1
        %s792 = smul.addr %s791, 48
        %s793 = scalar_lea.vmem [#allocation8], %s792
        // Predicated region
        $region45: #{llama_like_forward.9} parent=31 // pred_check
          %p794 = pneg %p124
        $region46: #{llama_like_forward.9} parent=31 // pred_check_branch
          %796 = sbr.rel (%p794) target = $region48
        $region47: #{llama_like_forward.9} parent=31 // pred_region
          %s797 = smul.u32 4, %s23
          %s798 = smul.u32 3, %s24
          %s800 = ssub.s32 768, 768
          %801 = vsyncadd %s790, %s800
          %s802 = smul.addr %s797, 6
          %s803 = sadd.s32 %s798, %s802
          %s804 = smul.addr %s803, 64
          %s805 = scalar_lea.hbm %s3, %s804
          %s806 = sshll.u32 %s793, 4
          %s807 = int_to_ptr.vmem [resolvable:$true] %s806
          %812 = dma.vmem_to_hbm [thread:$0]  %s807, 768, %s805, %s790, 192, 384, 12
        $region48: #{llama_like_forward.9} parent=31 // pred_fallthru
          _
      $region32: #{llama_like_forward.9} parent=5 // pred_fallthru
        _
      %p813 = scmp.le.s32.totalorder 2, %s14
      // Predicated region
      $region49: #{llama_like_forward.9} parent=5 // pred_check
        %p814 = pneg %p813
      $region50: #{llama_like_forward.9} parent=5 // pred_check_branch
        %816 = sbr.rel (%p814) target = $region52
      $region51: #{llama_like_forward.9} parent=5 // pred_region
        %s817 = ssub.s32 %s14, 2
        // Predicated region
        $region53: #{llama_like_forward.9} parent=51 // pred_check
          %p818 = pneg %p130
        $region54: #{llama_like_forward.9} parent=51 // pred_check_branch
          %820 = sbr.rel (%p818) target = $region56
        $region55: #{llama_like_forward.9} parent=51 // pred_region
          %s821 = sand.u32 %s115, 1
          %s822 = scalar_lea.sflag [#allocation4], %s821
          %s823 = sand.u32 %s115, 1
          %s824 = smul.addr %s823, 48
          %s825 = scalar_lea.vmem [#allocation8], %s824
          %826 = dma.done %s822, 768
        $region56: #{llama_like_forward.9} parent=51 // pred_fallthru
          _
      $region52: #{llama_like_forward.9} parent=5 // pred_fallthru
        _
    $region6: #{llama_like_forward.9} parent=1 // loop_footer
      %s18 = sadd.s32 1, %s14
    $region7: #{llama_like_forward.9} parent=1 // loop_footer_branch
      %13 = sbr.rel target = $region3
    $region8: #{llama_like_forward.9} parent=1 // loop_exit
      _
    %827 = vsyncpa [#allocation3], 1
    %s828 = scalar_lea.sflag [#allocation3], 1
    %829 = vsyncpa %s828, 1
    %830 = vsyncpa [#allocation6], 1
    %831 = vsyncpa [#allocation4], 1
    %s832 = scalar_lea.sflag [#allocation4], 1
    %833 = vsyncpa %s832, 1

// kernel: llama_like_forward.17
$region0: #{llama_like_forward.17}
  #allocation0 [shape = 'u32[]', space=smem, size = 0x4, offset = 0x4, fixed_abs, tag = 'smem constant byte address 0x4 - core index']
  #allocation1 [shape = 'u32[144,128]{1,0:T(1,128)}', space=vmem, size = 0x12000, scoped, tag = 'internal scratch']
  %s0 = inlined_call_operand.hbm [shape: bf16[32,256], index: 0, kind: input, shape index: {}]
  %s1 = inlined_call_operand.hbm [shape: f32[1,256], index: 1, kind: input, shape index: {}]
  %s2 = inlined_call_operand.hbm [shape: bf16[32,256], index: 2, kind: output, shape index: {}]
  %s3 = sld [smem:[#allocation0]]
  $region26: #{llama_like_forward.17} parent=0
    _
  %s5 = ssub.s32 1, %s3
  %s6 = scalar_select 0, %s5, %s3
  $region1: #{llama_like_forward.17} parent=0
    #allocation2 [shape = 'u8[16384]{0}', space=vmem, size = 0x4000, scoped, tag = 'input window, operand 0, single buffered']
    #allocation3 [shape = 's32[1]{0}', space=sflag, size = 0x4, scoped, tag = 'scoped memory for llama_like_forward.17']
    #allocation4 [shape = 's32[1]{0}', space=sflag, size = 0x4, scoped, tag = 'scoped memory for llama_like_forward.17']
    #allocation5 [shape = 'u8[1024]{0}', space=vmem, size = 0x400, scoped, tag = 'input window, operand 1, single buffered']
    #allocation6 [shape = 's32[1]{0}', space=sflag, size = 0x4, scoped, tag = 'scoped memory for llama_like_forward.17']
    #allocation7 [shape = 'u8[16384]{0}', space=vmem, size = 0x4000, scoped, tag = 'output window, operand 0, single buffered']
    %7 = vsyncpa [#allocation3], 0
    %8 = vsyncpa [#allocation6], 0
    %9 = vsyncpa [#allocation4], 0
    // Predicated region
    $region2: #{llama_like_forward.17} parent=1 // pred_check
      _
    $region3: #{llama_like_forward.17} parent=1 // pred_check_branch
      %11 = sbr.rel (0) target = $region5
    $region4: #{llama_like_forward.17} parent=1 // pred_region
      %s13 = ssub.s32 512, 512
      %14 = vsyncadd [#allocation3], %s13
      %s15 = sshll.u32 [#allocation2], 4
      %s16 = int_to_ptr.vmem [resolvable:$true] %s15
      %21 = dma.hbm_to_vmem [thread:$0]  %s0, 512, %s16, [#allocation3], 128, 128, 8
    $region5: #{llama_like_forward.17} parent=1 // pred_fallthru
      _
    // Predicated region
    $region6: #{llama_like_forward.17} parent=1 // pred_check
      _
    $region7: #{llama_like_forward.17} parent=1 // pred_check_branch
      %23 = sbr.rel (0) target = $region9
    $region8: #{llama_like_forward.17} parent=1 // pred_region
      %s25 = ssub.s32 32, 32
      %26 = vsyncadd [#allocation6], %s25
      %s28 = sshll.u32 [#allocation5], 4
      %s29 = int_to_ptr.vmem [resolvable:$true] %s28
      %31 = dma.hbm_to_vmem [thread:$0]  %s1, 32, %s29, [#allocation6]
    $region9: #{llama_like_forward.17} parent=1 // pred_fallthru
      _
    // Predicated region
    $region10: #{llama_like_forward.17} parent=1 // pred_check
      _
    $region11: #{llama_like_forward.17} parent=1 // pred_check_branch
      %33 = sbr.rel (0) target = $region13
    $region12: #{llama_like_forward.17} parent=1 // pred_region
      %34 = dma.done [#allocation3], 512
    $region13: #{llama_like_forward.17} parent=1 // pred_fallthru
      _
    // Predicated region
    $region14: #{llama_like_forward.17} parent=1 // pred_check
      _
    $region15: #{llama_like_forward.17} parent=1 // pred_check_branch
      %36 = sbr.rel (0) target = $region17
    $region16: #{llama_like_forward.17} parent=1 // pred_region
      %37 = dma.done [#allocation6], 32
    $region17: #{llama_like_forward.17} parent=1 // pred_fallthru
      _
    %v38 = vld [vmem:[#allocation2] sm:$0xff]
    %v39 = vld [vmem:[#allocation2 + $0x8] sm:$0xff]
    %v40 = vld [vmem:[#allocation2 + $0x10] sm:$0xff]
    %v41 = vld [vmem:[#allocation2 + $0x18] sm:$0xff]
    %v42 = vunpack.c.l.bf16 %v38
    %v43 = vunpack.c.h.bf16 %v38
    %v44 = vunpack.c.l.bf16 %v39
    %v45 = vunpack.c.h.bf16 %v39
    %v46 = vunpack.c.l.bf16 %v40
    %v47 = vunpack.c.h.bf16 %v40
    %v48 = vunpack.c.l.bf16 %v41
    %v49 = vunpack.c.h.bf16 %v41
    %v50 = vmul.f32 %v42, %v42
    %v51 = vmul.f32 %v43, %v43
    %v52 = vmul.f32 %v44, %v44
    %v53 = vmul.f32 %v45, %v45
    %v54 = vmul.f32 %v46, %v46
    %v55 = vmul.f32 %v47, %v47
    %v56 = vmul.f32 %v48, %v48
    %v57 = vmul.f32 %v49, %v49
    %v58 = vadd.f32 %v50, %v51
    %59 = vadd.xlane.f32.xlu0 %v58
    %v60 = vpop.xlane.xlu0 %59
    %v61 = vadd.f32 %v52, %v53
    %62 = vadd.xlane.f32.xlu0 %v61
    %v63 = vpop.xlane.xlu0 %62
    %v64 = vadd.f32 %v54, %v55
    %65 = vadd.xlane.f32.xlu0 %v64
    %v66 = vpop.xlane.xlu0 %65
    %v67 = vadd.f32 %v56, %v57
    %68 = vadd.xlane.f32.xlu0 %v67
    %v69 = vpop.xlane.xlu0 %68
    %v70 = vrcp.pop 256.0
    %v71 = vmul.f32 %v60, %v70
    %v72 = vmul.f32 %v63, %v70
    %v73 = vmul.f32 %v66, %v70
    %v74 = vmul.f32 %v69, %v70
    %v75 = vadd.f32 %v71, 1e-06
    %v76 = vadd.f32 %v72, 1e-06
    %v77 = vadd.f32 %v73, 1e-06
    %v78 = vadd.f32 %v74, 1e-06
    %v79 = vrsqrt.pop %v75
    %v80 = vrsqrt.pop %v76
    %v81 = vrsqrt.pop %v77
    %v82 = vrsqrt.pop %v78
    %v83 = vmul.f32 %v42, %v79
    %v84 = vmul.f32 %v43, %v79
    %v85 = vmul.f32 %v44, %v80
    %v86 = vmul.f32 %v45, %v80
    %v87 = vmul.f32 %v46, %v81
    %v88 = vmul.f32 %v47, %v81
    %v89 = vmul.f32 %v48, %v82
    %v90 = vmul.f32 %v49, %v82
    %v91 = vld [vmem:[#allocation5] sm:$0x3]
    %v93 = vlaneseq
    %v94 = vshrl.u32 %v93, 7
    %v95 = vsub.s32 0, %v94
    %v96 = vrot.slane %v91, %v95
    %v97 = vlaneseq
    %v98 = vshrl.u32 %v97, 7
    %v99 = vsub.s32 1, %v98
    %v100 = vrot.slane %v91, %v99
    %v103 = vmul.f32 %v83, %v96
    %v104 = vmul.f32 %v84, %v100
    %v105 = vmul.f32 %v85, %v96
    %v106 = vmul.f32 %v86, %v100
    %v107 = vmul.f32 %v87, %v96
    %v108 = vmul.f32 %v88, %v100
    %v109 = vmul.f32 %v89, %v96
    %v110 = vmul.f32 %v90, %v100
    %v111 = vpack.c.bf16 %v105, %v103
    %v112 = vpack.c.bf16 %v106, %v104
    %v113 = vpack.c.bf16 %v109, %v107
    %v114 = vpack.c.bf16 %v110, %v108
    %v119 = vunpack.c.l.b16 %v111
    %v120 = vunpack.c.l.b16 %v112
    %v121 = vunpack.c.h.b16 %v111
    %v122 = vunpack.c.h.b16 %v112
    %v123 = vunpack.c.l.b16 %v113
    %v124 = vunpack.c.l.b16 %v114
    %v125 = vunpack.c.h.b16 %v113
    %v126 = vunpack.c.h.b16 %v114
    %v127 = vpack.c.b16 %v120, %v119
    %v128 = vpack.c.b16 %v122, %v121
    %v129 = vpack.c.b16 %v124, %v123
    %v130 = vpack.c.b16 %v126, %v125
    %135 = vst [vmem:[#allocation7] sm:$0xff] %v127
    %136 = vst [vmem:[#allocation7 + $0x8] sm:$0xff] %v128
    %137 = vst [vmem:[#allocation7 + $0x10] sm:$0xff] %v129
    %138 = vst [vmem:[#allocation7 + $0x18] sm:$0xff] %v130
    // Predicated region
    $region18: #{llama_like_forward.17} parent=1 // pred_check
      _
    $region19: #{llama_like_forward.17} parent=1 // pred_check_branch
      %140 = sbr.rel (0) target = $region21
    $region20: #{llama_like_forward.17} parent=1 // pred_region
      %s142 = ssub.s32 512, 512
      %143 = vsyncadd [#allocation4], %s142
      %s144 = sshll.u32 [#allocation7], 4
      %s145 = int_to_ptr.vmem [resolvable:$true] %s144
      %150 = dma.vmem_to_hbm [thread:$0]  %s145, 512, %s2, [#allocation4], 128, 128, 8
    $region21: #{llama_like_forward.17} parent=1 // pred_fallthru
      _
    // Predicated region
    $region22: #{llama_like_forward.17} parent=1 // pred_check
      _
    $region23: #{llama_like_forward.17} parent=1 // pred_check_branch
      %152 = sbr.rel (0) target = $region25
    $region24: #{llama_like_forward.17} parent=1 // pred_region
      %153 = dma.done [#allocation4], 512
    $region25: #{llama_like_forward.17} parent=1 // pred_fallthru
      _
    %154 = vsyncpa [#allocation3], 1
    %155 = vsyncpa [#allocation6], 1
    %156 = vsyncpa [#allocation4], 1

// kernel: llama_like_forward.12
$region0: #{llama_like_forward.12}
  #allocation0 [shape = 'u32[]', space=smem, size = 0x4, offset = 0x4, fixed_abs, tag = 'smem constant byte address 0x4 - core index']
  #allocation1 [shape = 'u32[144,128]{1,0:T(1,128)}', space=vmem, size = 0x12000, scoped, tag = 'internal scratch']
  #allocation2 [shape = 'bf16[32,256]{1,0:T(16,128)(2,1)}', space=vmem, size = 0x4000, scoped, tag = 'scratch operand']
  #allocation3 [shape = 'f32[32,256]{1,0:T(8,128)}', space=vmem, size = 0x8000, scoped, tag = 'scratch operand']
  %s0 = inlined_call_operand.hbm [shape: bf16[32,256], index: 0, kind: input, shape index: {}]
  %s1 = inlined_call_operand.hbm [shape: f32[1,256], index: 1, kind: input, shape index: {}]
  %s2 = inlined_call_operand.hbm [shape: bf16[256,512], index: 2, kind: input, shape index: {}]
  %s3 = inlined_call_operand.hbm [shape: bf16[256,512], index: 3, kind: input, shape index: {}]
  %s4 = inlined_call_operand.hbm [shape: bf16[512,256], index: 4, kind: input, shape index: {}]
  %s5 = inlined_call_operand.hbm [shape: bf16[32,256], index: 5, kind: output, shape index: {}]
  %s6 = sld [smem:[#allocation0]]
  $region58: #{llama_like_forward.12} parent=0
    _
  %s8 = ssub.s32 1, %s6
  %s9 = scalar_select 0, %s8, %s6
  $region1: #{llama_like_forward.12} parent=0
    #allocation4 [shape = 'u8[16384]{0}', space=vmem, size = 0x4000, scoped, tag = 'input window, operand 0, single buffered']
    #allocation5 [shape = 's32[1]{0}', space=sflag, size = 0x4, scoped, tag = 'scoped memory for llama_like_forward.12']
    #allocation6 [shape = 's32[1]{0}', space=sflag, size = 0x4, scoped, tag = 'scoped memory for llama_like_forward.12']
    #allocation7 [shape = 'u8[1024]{0}', space=vmem, size = 0x400, scoped, tag = 'input window, operand 1, single buffered']
    #allocation8 [shape = 's32[1]{0}', space=sflag, size = 0x4, scoped, tag = 'scoped memory for llama_like_forward.12']
    #allocation9 [shape = 'u8[262144]{0}', space=vmem, size = 0x40000, scoped, tag = 'input window, operand 2, single buffered']
    #allocation10 [shape = 'u8[262144]{0}', space=vmem, size = 0x40000, scoped, tag = 'input window, operand 3, single buffered']
    #allocation11 [shape = 's32[1]{0}', space=sflag, size = 0x4, scoped, tag = 'scoped memory for llama_like_forward.12']
    #allocation12 [shape = 'u8[262144]{0}', space=vmem, size = 0x40000, scoped, tag = 'input window, operand 4, single buffered']
    #allocation13 [shape = 'u8[16384]{0}', space=vmem, size = 0x4000, scoped, tag = 'output window, operand 0, single buffered']
    %10 = vsyncpa [#allocation5], 0
    %11 = vsyncpa [#allocation8], 0
    %12 = vsyncpa [#allocation11], 0
    %13 = vsyncpa [#allocation6], 0
    // Predicated region
    $region2: #{llama_like_forward.12} parent=1 // pred_check
      _
    $region3: #{llama_like_forward.12} parent=1 // pred_check_branch
      %15 = sbr.rel (0) target = $region5
    $region4: #{llama_like_forward.12} parent=1 // pred_region
      %s17 = ssub.s32 512, 512
      %18 = vsyncadd [#allocation5], %s17
      %s19 = sshll.u32 [#allocation4], 4
      %s20 = int_to_ptr.vmem [resolvable:$true] %s19
      %25 = dma.hbm_to_vmem [thread:$0]  %s0, 512, %s20, [#allocation5], 128, 128, 8
    $region5: #{llama_like_forward.12} parent=1 // pred_fallthru
      _
    // Predicated region
    $region6: #{llama_like_forward.12} parent=1 // pred_check
      _
    $region7: #{llama_like_forward.12} parent=1 // pred_check_branch
      %27 = sbr.rel (0) target = $region9
    $region8: #{llama_like_forward.12} parent=1 // pred_region
      %s29 = ssub.s32 32, 32
      %30 = vsyncadd [#allocation8], %s29
      %s32 = sshll.u32 [#allocation7], 4
      %s33 = int_to_ptr.vmem [resolvable:$true] %s32
      %35 = dma.hbm_to_vmem [thread:$0]  %s1, 32, %s33, [#allocation8]
    $region9: #{llama_like_forward.12} parent=1 // pred_fallthru
      _
    // Predicated region
    $region10: #{llama_like_forward.12} parent=1 // pred_check
      _
    $region11: #{llama_like_forward.12} parent=1 // pred_check_branch
      %37 = sbr.rel (0) target = $region13
    $region12: #{llama_like_forward.12} parent=1 // pred_region
      %s39 = ssub.s32 8192, 8192
      %40 = vsyncadd [#allocation8], %s39
      %s41 = sshll.u32 [#allocation9], 4
      %s42 = int_to_ptr.vmem [resolvable:$true] %s41
      %47 = dma.hbm_to_vmem [thread:$0]  %s2, 8192, %s42, [#allocation8], 256, 256, 16
    $region13: #{llama_like_forward.12} parent=1 // pred_fallthru
      _
    // Predicated region
    $region14: #{llama_like_forward.12} parent=1 // pred_check
      _
    $region15: #{llama_like_forward.12} parent=1 // pred_check_branch
      %49 = sbr.rel (0) target = $region17
    $region16: #{llama_like_forward.12} parent=1 // pred_region
      %s51 = ssub.s32 8192, 8192
      %52 = vsyncadd [#allocation11], %s51
      %s53 = sshll.u32 [#allocation10], 4
      %s54 = int_to_ptr.vmem [resolvable:$true] %s53
      %59 = dma.hbm_to_vmem [thread:$0]  %s3, 8192, %s54, [#allocation11], 256, 256, 16
    $region17: #{llama_like_forward.12} parent=1 // pred_fallthru
      _
    // Predicated region
    $region18: #{llama_like_forward.12} parent=1 // pred_check
      _
    $region19: #{llama_like_forward.12} parent=1 // pred_check_branch
      %61 = sbr.rel (0) target = $region21
    $region20: #{llama_like_forward.12} parent=1 // pred_region
      %s63 = ssub.s32 8192, 8192
      %64 = vsyncadd [#allocation11], %s63
      %s65 = sshll.u32 [#allocation12], 4
      %s66 = int_to_ptr.vmem [resolvable:$true] %s65
      %71 = dma.hbm_to_vmem [thread:$0]  %s4, 8192, %s66, [#allocation11], 128, 128, 8
    $region21: #{llama_like_forward.12} parent=1 // pred_fallthru
      _
    // Predicated region
    $region22: #{llama_like_forward.12} parent=1 // pred_check
      _
    $region23: #{llama_like_forward.12} parent=1 // pred_check_branch
      %73 = sbr.rel (0) target = $region25
    $region24: #{llama_like_forward.12} parent=1 // pred_region
      %74 = dma.done [#allocation5], 512
    $region25: #{llama_like_forward.12} parent=1 // pred_fallthru
      _
    // Predicated region
    $region26: #{llama_like_forward.12} parent=1 // pred_check
      _
    $region27: #{llama_like_forward.12} parent=1 // pred_check_branch
      %76 = sbr.rel (0) target = $region29
    $region28: #{llama_like_forward.12} parent=1 // pred_region
      %77 = dma.done [#allocation8], 32
    $region29: #{llama_like_forward.12} parent=1 // pred_fallthru
      _
    // Predicated region
    $region30: #{llama_like_forward.12} parent=1 // pred_check
      _
    $region31: #{llama_like_forward.12} parent=1 // pred_check_branch
      %79 = sbr.rel (0) target = $region33
    $region32: #{llama_like_forward.12} parent=1 // pred_region
      %80 = dma.done [#allocation8], 8192
    $region33: #{llama_like_forward.12} parent=1 // pred_fallthru
      _
    // Predicated region
    $region34: #{llama_like_forward.12} parent=1 // pred_check
      _
    $region35: #{llama_like_forward.12} parent=1 // pred_check_branch
      %82 = sbr.rel (0) target = $region37
    $region36: #{llama_like_forward.12} parent=1 // pred_region
      %83 = dma.done [#allocation11], 8192
    $region37: #{llama_like_forward.12} parent=1 // pred_fallthru
      _
    // Predicated region
    $region38: #{llama_like_forward.12} parent=1 // pred_check
      _
    $region39: #{llama_like_forward.12} parent=1 // pred_check_branch
      %85 = sbr.rel (0) target = $region41
    $region40: #{llama_like_forward.12} parent=1 // pred_region
      %86 = dma.done [#allocation11], 8192
    $region41: #{llama_like_forward.12} parent=1 // pred_fallthru
      _
    %p87 = scmp.eq.s32.totalorder 0, 0
    // Predicated region
    $region42: #{llama_like_forward.12} parent=1 // pred_check
      %p88 = pneg %p87
    $region43: #{llama_like_forward.12} parent=1 // pred_check_branch
      %90 = sbr.rel (%p88) target = $region45
    $region44: #{llama_like_forward.12} parent=1 // pred_region
      %v91 = vld [vmem:[#allocation4] sm:$0xff]
      %v92 = vld [vmem:[#allocation4 + $0x8] sm:$0xff]
      %v93 = vld [vmem:[#allocation4 + $0x10] sm:$0xff]
      %v94 = vld [vmem:[#allocation4 + $0x18] sm:$0xff]
      %v95 = vunpack.c.l.bf16 %v91
      %v96 = vunpack.c.h.bf16 %v91
      %v97 = vunpack.c.l.bf16 %v92
      %v98 = vunpack.c.h.bf16 %v92
      %v99 = vunpack.c.l.bf16 %v93
      %v100 = vunpack.c.h.bf16 %v93
      %v101 = vunpack.c.l.bf16 %v94
      %v102 = vunpack.c.h.bf16 %v94
      %v103 = vmul.f32 %v95, %v95
      %v104 = vmul.f32 %v96, %v96
      %v105 = vmul.f32 %v97, %v97
      %v106 = vmul.f32 %v98, %v98
      %v107 = vmul.f32 %v99, %v99
      %v108 = vmul.f32 %v100, %v100
      %v109 = vmul.f32 %v101, %v101
      %v110 = vmul.f32 %v102, %v102
      %v111 = vadd.f32 %v103, %v104
      %112 = vadd.xlane.f32.xlu0 %v111
      %v113 = vpop.xlane.xlu0 %112
      %v114 = vadd.f32 %v105, %v106
      %115 = vadd.xlane.f32.xlu0 %v114
      %v116 = vpop.xlane.xlu0 %115
      %v117 = vadd.f32 %v107, %v108
      %118 = vadd.xlane.f32.xlu0 %v117
      %v119 = vpop.xlane.xlu0 %118
      %v120 = vadd.f32 %v109, %v110
      %121 = vadd.xlane.f32.xlu0 %v120
      %v122 = vpop.xlane.xlu0 %121
      %v123 = vrcp.pop 256.0
      %v124 = vmul.f32 %v113, %v123
      %v125 = vmul.f32 %v116, %v123
      %v126 = vmul.f32 %v119, %v123
      %v127 = vmul.f32 %v122, %v123
      %v128 = vadd.f32 %v124, 1e-06
      %v129 = vadd.f32 %v125, 1e-06
      %v130 = vadd.f32 %v126, 1e-06
      %v131 = vadd.f32 %v127, 1e-06
      %v132 = vrsqrt.pop %v128
      %v133 = vrsqrt.pop %v129
      %v134 = vrsqrt.pop %v130
      %v135 = vrsqrt.pop %v131
      %v136 = vmul.f32 %v95, %v132
      %v137 = vmul.f32 %v96, %v132
      %v138 = vmul.f32 %v97, %v133
      %v139 = vmul.f32 %v98, %v133
      %v140 = vmul.f32 %v99, %v134
      %v141 = vmul.f32 %v100, %v134
      %v142 = vmul.f32 %v101, %v135
      %v143 = vmul.f32 %v102, %v135
      %v144 = vld [vmem:[#allocation7] sm:$0x3]
      %v146 = vlaneseq
      %v147 = vshrl.u32 %v146, 7
      %v148 = vsub.s32 0, %v147
      %v149 = vrot.slane %v144, %v148
      %v150 = vlaneseq
      %v151 = vshrl.u32 %v150, 7
      %v152 = vsub.s32 1, %v151
      %v153 = vrot.slane %v144, %v152
      %v156 = vmul.f32 %v136, %v149
      %v157 = vmul.f32 %v137, %v153
      %v158 = vmul.f32 %v138, %v149
      %v159 = vmul.f32 %v139, %v153
      %v160 = vmul.f32 %v140, %v149
      %v161 = vmul.f32 %v141, %v153
      %v162 = vmul.f32 %v142, %v149
      %v163 = vmul.f32 %v143, %v153
      %v164 = vpack.c.bf16 %v158, %v156
      %v165 = vpack.c.bf16 %v159, %v157
      %v166 = vpack.c.bf16 %v162, %v160
      %v167 = vpack.c.bf16 %v163, %v161
      %168 = vst [vmem:[#allocation2] sm:$0xff] %v164
      %169 = vst [vmem:[#allocation2 + $0x8] sm:$0xff] %v165
      %170 = vst [vmem:[#allocation2 + $0x10] sm:$0xff] %v166
      %171 = vst [vmem:[#allocation2 + $0x18] sm:$0xff] %v167
      %172 = vst [vmem:[#allocation3] sm:$0xff] 0.0
      %173 = vst [vmem:[#allocation3 + $0x8] sm:$0xff] 0.0
      %174 = vst [vmem:[#allocation3 + $0x10] sm:$0xff] 0.0
      %175 = vst [vmem:[#allocation3 + $0x18] sm:$0xff] 0.0
      %176 = vst [vmem:[#allocation3 + $0x20] sm:$0xff] 0.0
      %177 = vst [vmem:[#allocation3 + $0x28] sm:$0xff] 0.0
      %178 = vst [vmem:[#allocation3 + $0x30] sm:$0xff] 0.0
      %179 = vst [vmem:[#allocation3 + $0x38] sm:$0xff] 0.0
    $region45: #{llama_like_forward.12} parent=1 // pred_fallthru
      _
    %v180 = vld [vmem:[#allocation2] sm:$0xff]
    %v181 = vld [vmem:[#allocation2 + $0x8] sm:$0xff]
    %v182 = vld [vmem:[#allocation2 + $0x10] sm:$0xff]
    %v183 = vld [vmem:[#allocation2 + $0x18] sm:$0xff]
    %v184 = vld [vmem:[#allocation9] sm:$0xff]
    %v185 = vld [vmem:[#allocation9 + $0x8] sm:$0xff]
    %v186 = vld [vmem:[#allocation9 + $0x10] sm:$0xff]
    %v187 = vld [vmem:[#allocation9 + $0x18] sm:$0xff]
    %v188 = vld [vmem:[#allocation9 + $0x20] sm:$0xff]
    %v189 = vld [vmem:[#allocation9 + $0x28] sm:$0xff]
    %v190 = vld [vmem:[#allocation9 + $0x30] sm:$0xff]
    %v191 = vld [vmem:[#allocation9 + $0x38] sm:$0xff]
    %v192 = vld [vmem:[#allocation9 + $0x40] sm:$0xff]
    %v193 = vld [vmem:[#allocation9 + $0x48] sm:$0xff]
    %v194 = vld [vmem:[#allocation9 + $0x50] sm:$0xff]
    %v195 = vld [vmem:[#allocation9 + $0x58] sm:$0xff]
    %v196 = vld [vmem:[#allocation9 + $0x60] sm:$0xff]
    %v197 = vld [vmem:[#allocation9 + $0x68] sm:$0xff]
    %v198 = vld [vmem:[#allocation9 + $0x70] sm:$0xff]
    %v199 = vld [vmem:[#allocation9 + $0x78] sm:$0xff]
    %v200 = vld [vmem:[#allocation9 + $0x80] sm:$0xff]
    %v201 = vld [vmem:[#allocation9 + $0x88] sm:$0xff]
    %v202 = vld [vmem:[#allocation9 + $0x90] sm:$0xff]
    %v203 = vld [vmem:[#allocation9 + $0x98] sm:$0xff]
    %v204 = vld [vmem:[#allocation9 + $0xa0] sm:$0xff]
    %v205 = vld [vmem:[#allocation9 + $0xa8] sm:$0xff]
    %v206 = vld [vmem:[#allocation9 + $0xb0] sm:$0xff]
    %v207 = vld [vmem:[#allocation9 + $0xb8] sm:$0xff]
    %v208 = vld [vmem:[#allocation9 + $0xc0] sm:$0xff]
    %v209 = vld [vmem:[#allocation9 + $0xc8] sm:$0xff]
    %v210 = vld [vmem:[#allocation9 + $0xd0] sm:$0xff]
    %v211 = vld [vmem:[#allocation9 + $0xd8] sm:$0xff]
    %v212 = vld [vmem:[#allocation9 + $0xe0] sm:$0xff]
    %v213 = vld [vmem:[#allocation9 + $0xe8] sm:$0xff]
    %v214 = vld [vmem:[#allocation9 + $0xf0] sm:$0xff]
    %v215 = vld [vmem:[#allocation9 + $0xf8] sm:$0xff]
    %v216 = vld [vmem:[#allocation9 + $0x100] sm:$0xff]
    %v217 = vld [vmem:[#allocation9 + $0x108] sm:$0xff]
    %v218 = vld [vmem:[#allocation9 + $0x110] sm:$0xff]
    %v219 = vld [vmem:[#allocation9 + $0x118] sm:$0xff]
    %v220 = vld [vmem:[#allocation9 + $0x120] sm:$0xff]
    %v221 = vld [vmem:[#allocation9 + $0x128] sm:$0xff]
    %v222 = vld [vmem:[#allocation9 + $0x130] sm:$0xff]
    %v223 = vld [vmem:[#allocation9 + $0x138] sm:$0xff]
    %v224 = vld [vmem:[#allocation9 + $0x140] sm:$0xff]
    %v225 = vld [vmem:[#allocation9 + $0x148] sm:$0xff]
    %v226 = vld [vmem:[#allocation9 + $0x150] sm:$0xff]
    %v227 = vld [vmem:[#allocation9 + $0x158] sm:$0xff]
    %v228 = vld [vmem:[#allocation9 + $0x160] sm:$0xff]
    %v229 = vld [vmem:[#allocation9 + $0x168] sm:$0xff]
    %v230 = vld [vmem:[#allocation9 + $0x170] sm:$0xff]
    %v231 = vld [vmem:[#allocation9 + $0x178] sm:$0xff]
    %v232 = vld [vmem:[#allocation9 + $0x180] sm:$0xff]
    %v233 = vld [vmem:[#allocation9 + $0x188] sm:$0xff]
    %v234 = vld [vmem:[#allocation9 + $0x190] sm:$0xff]
    %v235 = vld [vmem:[#allocation9 + $0x198] sm:$0xff]
    %v236 = vld [vmem:[#allocation9 + $0x1a0] sm:$0xff]
    %v237 = vld [vmem:[#allocation9 + $0x1a8] sm:$0xff]
    %v238 = vld [vmem:[#allocation9 + $0x1b0] sm:$0xff]
    %v239 = vld [vmem:[#allocation9 + $0x1b8] sm:$0xff]
    %v240 = vld [vmem:[#allocation9 + $0x1c0] sm:$0xff]
    %v241 = vld [vmem:[#allocation9 + $0x1c8] sm:$0xff]
    %v242 = vld [vmem:[#allocation9 + $0x1d0] sm:$0xff]
    %v243 = vld [vmem:[#allocation9 + $0x1d8] sm:$0xff]
    %v244 = vld [vmem:[#allocation9 + $0x1e0] sm:$0xff]
    %v245 = vld [vmem:[#allocation9 + $0x1e8] sm:$0xff]
    %v246 = vld [vmem:[#allocation9 + $0x1f0] sm:$0xff]
    %v247 = vld [vmem:[#allocation9 + $0x1f8] sm:$0xff]
    %v312 = vunpack.c.l.b16 %v184
    %v313 = vunpack.c.h.b16 %v184
    %v314 = vunpack.c.l.b16 %v185
    %v315 = vunpack.c.h.b16 %v185
    %v316 = vunpack.c.l.b16 %v186
    %v317 = vunpack.c.h.b16 %v186
    %v318 = vunpack.c.l.b16 %v187
    %v319 = vunpack.c.h.b16 %v187
    %v320 = vunpack.c.l.b16 %v188
    %v321 = vunpack.c.h.b16 %v188
    %v322 = vunpack.c.l.b16 %v189
    %v323 = vunpack.c.h.b16 %v189
    %v324 = vunpack.c.l.b16 %v190
    %v325 = vunpack.c.h.b16 %v190
    %v326 = vunpack.c.l.b16 %v191
    %v327 = vunpack.c.h.b16 %v191
    %v328 = vunpack.c.l.b16 %v192
    %v329 = vunpack.c.h.b16 %v192
    %v330 = vunpack.c.l.b16 %v193
    %v331 = vunpack.c.h.b16 %v193
    %v332 = vunpack.c.l.b16 %v194
    %v333 = vunpack.c.h.b16 %v194
    %v334 = vunpack.c.l.b16 %v195
    %v335 = vunpack.c.h.b16 %v195
    %v336 = vunpack.c.l.b16 %v196
    %v337 = vunpack.c.h.b16 %v196
    %v338 = vunpack.c.l.b16 %v197
    %v339 = vunpack.c.h.b16 %v197
    %v340 = vunpack.c.l.b16 %v198
    %v341 = vunpack.c.h.b16 %v198
    %v342 = vunpack.c.l.b16 %v199
    %v343 = vunpack.c.h.b16 %v199
    %v344 = vunpack.c.l.b16 %v200
    %v345 = vunpack.c.h.b16 %v200
    %v346 = vunpack.c.l.b16 %v201
    %v347 = vunpack.c.h.b16 %v201
    %v348 = vunpack.c.l.b16 %v202
    %v349 = vunpack.c.h.b16 %v202
    %v350 = vunpack.c.l.b16 %v203
    %v351 = vunpack.c.h.b16 %v203
    %v352 = vunpack.c.l.b16 %v204
    %v353 = vunpack.c.h.b16 %v204
    %v354 = vunpack.c.l.b16 %v205
    %v355 = vunpack.c.h.b16 %v205
    %v356 = vunpack.c.l.b16 %v206
    %v357 = vunpack.c.h.b16 %v206
    %v358 = vunpack.c.l.b16 %v207
    %v359 = vunpack.c.h.b16 %v207
    %v360 = vunpack.c.l.b16 %v208
    %v361 = vunpack.c.h.b16 %v208
    %v362 = vunpack.c.l.b16 %v209
    %v363 = vunpack.c.h.b16 %v209
    %v364 = vunpack.c.l.b16 %v210
    %v365 = vunpack.c.h.b16 %v210
    %v366 = vunpack.c.l.b16 %v211
    %v367 = vunpack.c.h.b16 %v211
    %v368 = vunpack.c.l.b16 %v212
    %v369 = vunpack.c.h.b16 %v212
    %v370 = vunpack.c.l.b16 %v213
    %v371 = vunpack.c.h.b16 %v213
    %v372 = vunpack.c.l.b16 %v214
    %v373 = vunpack.c.h.b16 %v214
    %v374 = vunpack.c.l.b16 %v215
    %v375 = vunpack.c.h.b16 %v215
    %v376 = vunpack.c.l.b16 %v216
    %v377 = vunpack.c.h.b16 %v216
    %v378 = vunpack.c.l.b16 %v217
    %v379 = vunpack.c.h.b16 %v217
    %v380 = vunpack.c.l.b16 %v218
    %v381 = vunpack.c.h.b16 %v218
    %v382 = vunpack.c.l.b16 %v219
    %v383 = vunpack.c.h.b16 %v219
    %v384 = vunpack.c.l.b16 %v220
    %v385 = vunpack.c.h.b16 %v220
    %v386 = vunpack.c.l.b16 %v221
    %v387 = vunpack.c.h.b16 %v221
    %v388 = vunpack.c.l.b16 %v222
    %v389 = vunpack.c.h.b16 %v222
    %v390 = vunpack.c.l.b16 %v223
    %v391 = vunpack.c.h.b16 %v223
    %v392 = vunpack.c.l.b16 %v224
    %v393 = vunpack.c.h.b16 %v224
    %v394 = vunpack.c.l.b16 %v225
    %v395 = vunpack.c.h.b16 %v225
    %v396 = vunpack.c.l.b16 %v226
    %v397 = vunpack.c.h.b16 %v226
    %v398 = vunpack.c.l.b16 %v227
    %v399 = vunpack.c.h.b16 %v227
    %v400 = vunpack.c.l.b16 %v228
    %v401 = vunpack.c.h.b16 %v228
    %v402 = vunpack.c.l.b16 %v229
    %v403 = vunpack.c.h.b16 %v229
    %v404 = vunpack.c.l.b16 %v230
    %v405 = vunpack.c.h.b16 %v230
    %v406 = vunpack.c.l.b16 %v231
    %v407 = vunpack.c.h.b16 %v231
    %v408 = vunpack.c.l.b16 %v232
    %v409 = vunpack.c.h.b16 %v232
    %v410 = vunpack.c.l.b16 %v233
    %v411 = vunpack.c.h.b16 %v233
    %v412 = vunpack.c.l.b16 %v234
    %v413 = vunpack.c.h.b16 %v234
    %v414 = vunpack.c.l.b16 %v235
    %v415 = vunpack.c.h.b16 %v235
    %v416 = vunpack.c.l.b16 %v236
    %v417 = vunpack.c.h.b16 %v236
    %v418 = vunpack.c.l.b16 %v237
    %v419 = vunpack.c.h.b16 %v237
    %v420 = vunpack.c.l.b16 %v238
    %v421 = vunpack.c.h.b16 %v238
    %v422 = vunpack.c.l.b16 %v239
    %v423 = vunpack.c.h.b16 %v239
    %v424 = vunpack.c.l.b16 %v240
    %v425 = vunpack.c.h.b16 %v240
    %v426 = vunpack.c.l.b16 %v241
    %v427 = vunpack.c.h.b16 %v241
    %v428 = vunpack.c.l.b16 %v242
    %v429 = vunpack.c.h.b16 %v242
    %v430 = vunpack.c.l.b16 %v243
    %v431 = vunpack.c.h.b16 %v243
    %v432 = vunpack.c.l.b16 %v244
    %v433 = vunpack.c.h.b16 %v244
    %v434 = vunpack.c.l.b16 %v245
    %v435 = vunpack.c.h.b16 %v245
    %v436 = vunpack.c.l.b16 %v246
    %v437 = vunpack.c.h.b16 %v246
    %v438 = vunpack.c.l.b16 %v247
    %v439 = vunpack.c.h.b16 %v247
    %v440 = vpack.c.b16 %v316, %v312
    %v441 = vpack.c.b16 %v317, %v313
    %v442 = vpack.c.b16 %v318, %v314
    %v443 = vpack.c.b16 %v319, %v315
    %v444 = vpack.c.b16 %v324, %v320
    %v445 = vpack.c.b16 %v325, %v321
    %v446 = vpack.c.b16 %v326, %v322
    %v447 = vpack.c.b16 %v327, %v323
    %v448 = vpack.c.b16 %v332, %v328
    %v449 = vpack.c.b16 %v333, %v329
    %v450 = vpack.c.b16 %v334, %v330
    %v451 = vpack.c.b16 %v335, %v331
    %v452 = vpack.c.b16 %v340, %v336
    %v453 = vpack.c.b16 %v341, %v337
    %v454 = vpack.c.b16 %v342, %v338
    %v455 = vpack.c.b16 %v343, %v339
    %v456 = vpack.c.b16 %v348, %v344
    %v457 = vpack.c.b16 %v349, %v345
    %v458 = vpack.c.b16 %v350, %v346
    %v459 = vpack.c.b16 %v351, %v347
    %v460 = vpack.c.b16 %v356, %v352
    %v461 = vpack.c.b16 %v357, %v353
    %v462 = vpack.c.b16 %v358, %v354
    %v463 = vpack.c.b16 %v359, %v355
    %v464 = vpack.c.b16 %v364, %v360
    %v465 = vpack.c.b16 %v365, %v361
    %v466 = vpack.c.b16 %v366, %v362
    %v467 = vpack.c.b16 %v367, %v363
    %v468 = vpack.c.b16 %v372, %v368
    %v469 = vpack.c.b16 %v373, %v369
    %v470 = vpack.c.b16 %v374, %v370
    %v471 = vpack.c.b16 %v375, %v371
    %v472 = vpack.c.b16 %v380, %v376
    %v473 = vpack.c.b16 %v381, %v377
    %v474 = vpack.c.b16 %v382, %v378
    %v475 = vpack.c.b16 %v383, %v379
    %v476 = vpack.c.b16 %v388, %v384
    %v477 = vpack.c.b16 %v389, %v385
    %v478 = vpack.c.b16 %v390, %v386
    %v479 = vpack.c.b16 %v391, %v387
    %v480 = vpack.c.b16 %v396, %v392
    %v481 = vpack.c.b16 %v397, %v393
    %v482 = vpack.c.b16 %v398, %v394
    %v483 = vpack.c.b16 %v399, %v395
    %v484 = vpack.c.b16 %v404, %v400
    %v485 = vpack.c.b16 %v405, %v401
    %v486 = vpack.c.b16 %v406, %v402
    %v487 = vpack.c.b16 %v407, %v403
    %v488 = vpack.c.b16 %v412, %v408
    %v489 = vpack.c.b16 %v413, %v409
    %v490 = vpack.c.b16 %v414, %v410
    %v491 = vpack.c.b16 %v415, %v411
    %v492 = vpack.c.b16 %v420, %v416
    %v493 = vpack.c.b16 %v421, %v417
    %v494 = vpack.c.b16 %v422, %v418
    %v495 = vpack.c.b16 %v423, %v419
    %v496 = vpack.c.b16 %v428, %v424
    %v497 = vpack.c.b16 %v429, %v425
    %v498 = vpack.c.b16 %v430, %v426
    %v499 = vpack.c.b16 %v431, %v427
    %v500 = vpack.c.b16 %v436, %v432
    %v501 = vpack.c.b16 %v437, %v433
    %v502 = vpack.c.b16 %v438, %v434
    %v503 = vpack.c.b16 %v439, %v435
    %568 = vmatprep.subr.bf16.mxu0 %v441
    %569 = vmatpush1.bf16.msra.mxu0 %v440
    %570 = vmatprep.subr.bf16.mxu0 %v445
    %571 = vmatpush1.bf16.msra.mxu0 %v444
    %572 = vmatprep.subr.bf16.mxu0 %v449
    %573 = vmatpush1.bf16.msra.mxu0 %v448
    %574 = vmatprep.subr.bf16.mxu0 %v453
    %575 = vmatpush1.bf16.msra.mxu0 %v452
    %576 = vmatprep.subr.bf16.mxu0 %v457
    %577 = vmatpush1.bf16.msra.mxu0 %v456
    %578 = vmatprep.subr.bf16.mxu0 %v461
    %579 = vmatpush1.bf16.msra.mxu0 %v460
    %580 = vmatprep.subr.bf16.mxu0 %v465
    %581 = vmatpush1.bf16.msra.mxu0 %v464
    %582 = vmatprep.subr.bf16.mxu0 %v469
    %583 = vmatpush1.bf16.msra.mxu0 %v468
    %584 = vmatprep.subr.bf16.mxu0 %v473
    %585 = vmatpush1.bf16.msra.mxu0 %v472
    %586 = vmatprep.subr.bf16.mxu0 %v477
    %587 = vmatpush1.bf16.msra.mxu0 %v476
    %588 = vmatprep.subr.bf16.mxu0 %v481
    %589 = vmatpush1.bf16.msra.mxu0 %v480
    %590 = vmatprep.subr.bf16.mxu0 %v485
    %591 = vmatpush1.bf16.msra.mxu0 %v484
    %592 = vmatprep.subr.bf16.mxu0 %v489
    %593 = vmatpush1.bf16.msra.mxu0 %v488
    %594 = vmatprep.subr.bf16.mxu0 %v493
    %595 = vmatpush1.bf16.msra.mxu0 %v492
    %596 = vmatprep.subr.bf16.mxu0 %v497
    %597 = vmatpush1.bf16.msra.mxu0 %v496
    %598 = vmatprep.subr.bf16.mxu0 %v501
    %599 = vmatpush1.bf16.msra.mxu0 %v500
    %600 = vmatprep.mubr.bf16.mxu0 %v181
    %601 = vmatmul.mubr.bf16.gmra.mrb[0].mxu0 %v180
    %v602 = vpop.f32.mrb[0].mxu0
    %v603 = vadd.f32 0.0, %v602
    %v604 = vpop.f32.mrb[0].mxu0
    %v605 = vadd.f32 0.0, %v604
    %v606 = vpop.f32.mrb[0].mxu0
    %v607 = vadd.f32 0.0, %v606
    %v608 = vpop.f32.mrb[0].mxu0
    %v609 = vadd.f32 0.0, %v608
    %610 = vmatprep.mubr.bf16.mxu0 %v183
    %611 = vmatmul.mubr.bf16.gmra.mrb[0].mxu0 %v182
    %v612 = vpop.f32.mrb[0].mxu0
    %v613 = vadd.f32 0.0, %v612
    %v614 = vpop.f32.mrb[0].mxu0
    %v615 = vadd.f32 0.0, %v614
    %v616 = vpop.f32.mrb[0].mxu0
    %v617 = vadd.f32 0.0, %v616
    %v618 = vpop.f32.mrb[0].mxu0
    %v619 = vadd.f32 0.0, %v618
    %620 = vdwg.mxu0
    %621 = vmatprep.subr.bf16.mxu0 %v443
    %622 = vmatpush1.bf16.msra.mxu0 %v442
    %623 = vmatprep.subr.bf16.mxu0 %v447
    %624 = vmatpush1.bf16.msra.mxu0 %v446
    %625 = vmatprep.subr.bf16.mxu0 %v451
    %626 = vmatpush1.bf16.msra.mxu0 %v450
    %627 = vmatprep.subr.bf16.mxu0 %v455
    %628 = vmatpush1.bf16.msra.mxu0 %v454
    %629 = vmatprep.subr.bf16.mxu0 %v459
    %630 = vmatpush1.bf16.msra.mxu0 %v458
    %631 = vmatprep.subr.bf16.mxu0 %v463
    %632 = vmatpush1.bf16.msra.mxu0 %v462
    %633 = vmatprep.subr.bf16.mxu0 %v467
    %634 = vmatpush1.bf16.msra.mxu0 %v466
    %635 = vmatprep.subr.bf16.mxu0 %v471
    %636 = vmatpush1.bf16.msra.mxu0 %v470
    %637 = vmatprep.subr.bf16.mxu0 %v475
    %638 = vmatpush1.bf16.msra.mxu0 %v474
    %639 = vmatprep.subr.bf16.mxu0 %v479
    %640 = vmatpush1.bf16.msra.mxu0 %v478
    %641 = vmatprep.subr.bf16.mxu0 %v483
    %642 = vmatpush1.bf16.msra.mxu0 %v482
    %643 = vmatprep.subr.bf16.mxu0 %v487
    %644 = vmatpush1.bf16.msra.mxu0 %v486
    %645 = vmatprep.subr.bf16.mxu0 %v491
    %646 = vmatpush1.bf16.msra.mxu0 %v490
    %647 = vmatprep.subr.bf16.mxu0 %v495
    %648 = vmatpush1.bf16.msra.mxu0 %v494
    %649 = vmatprep.subr.bf16.mxu0 %v499
    %650 = vmatpush1.bf16.msra.mxu0 %v498
    %651 = vmatprep.subr.bf16.mxu0 %v503
    %652 = vmatpush1.bf16.msra.mxu0 %v502
    %653 = vmatprep.mubr.bf16.mxu0 %v181
    %654 = vmatmul.mubr.bf16.gmra.mrb[0].mxu0 %v180
    %v655 = vpop.f32.mrb[0].mxu0
    %v656 = vadd.f32 0.0, %v655
    %v657 = vpop.f32.mrb[0].mxu0
    %v658 = vadd.f32 0.0, %v657
    %v659 = vpop.f32.mrb[0].mxu0
    %v660 = vadd.f32 0.0, %v659
    %v661 = vpop.f32.mrb[0].mxu0
    %v662 = vadd.f32 0.0, %v661
    %663 = vmatprep.mubr.bf16.mxu0 %v183
    %664 = vmatmul.mubr.bf16.gmra.mrb[0].mxu0 %v182
    %v665 = vpop.f32.mrb[0].mxu0
    %v666 = vadd.f32 0.0, %v665
    %v667 = vpop.f32.mrb[0].mxu0
    %v668 = vadd.f32 0.0, %v667
    %v669 = vpop.f32.mrb[0].mxu0
    %v670 = vadd.f32 0.0, %v669
    %v671 = vpop.f32.mrb[0].mxu0
    %v672 = vadd.f32 0.0, %v671
    %673 = vdwg.mxu0
    %v674 = vld [vmem:[#allocation10] sm:$0xff]
    %v675 = vld [vmem:[#allocation10 + $0x8] sm:$0xff]
    %v676 = vld [vmem:[#allocation10 + $0x10] sm:$0xff]
    %v677 = vld [vmem:[#allocation10 + $0x18] sm:$0xff]
    %v678 = vld [vmem:[#allocation10 + $0x20] sm:$0xff]
    %v679 = vld [vmem:[#allocation10 + $0x28] sm:$0xff]
    %v680 = vld [vmem:[#allocation10 + $0x30] sm:$0xff]
    %v681 = vld [vmem:[#allocation10 + $0x38] sm:$0xff]
    %v682 = vld [vmem:[#allocation10 + $0x40] sm:$0xff]
    %v683 = vld [vmem:[#allocation10 + $0x48] sm:$0xff]
    %v684 = vld [vmem:[#allocation10 + $0x50] sm:$0xff]
    %v685 = vld [vmem:[#allocation10 + $0x58] sm:$0xff]
    %v686 = vld [vmem:[#allocation10 + $0x60] sm:$0xff]
    %v687 = vld [vmem:[#allocation10 + $0x68] sm:$0xff]
    %v688 = vld [vmem:[#allocation10 + $0x70] sm:$0xff]
    %v689 = vld [vmem:[#allocation10 + $0x78] sm:$0xff]
    %v690 = vld [vmem:[#allocation10 + $0x80] sm:$0xff]
    %v691 = vld [vmem:[#allocation10 + $0x88] sm:$0xff]
    %v692 = vld [vmem:[#allocation10 + $0x90] sm:$0xff]
    %v693 = vld [vmem:[#allocation10 + $0x98] sm:$0xff]
    %v694 = vld [vmem:[#allocation10 + $0xa0] sm:$0xff]
    %v695 = vld [vmem:[#allocation10 + $0xa8] sm:$0xff]
    %v696 = vld [vmem:[#allocation10 + $0xb0] sm:$0xff]
    %v697 = vld [vmem:[#allocation10 + $0xb8] sm:$0xff]
    %v698 = vld [vmem:[#allocation10 + $0xc0] sm:$0xff]
    %v699 = vld [vmem:[#allocation10 + $0xc8] sm:$0xff]
    %v700 = vld [vmem:[#allocation10 + $0xd0] sm:$0xff]
    %v701 = vld [vmem:[#allocation10 + $0xd8] sm:$0xff]
    %v702 = vld [vmem:[#allocation10 + $0xe0] sm:$0xff]
    %v703 = vld [vmem:[#allocation10 + $0xe8] sm:$0xff]
    %v704 = vld [vmem:[#allocation10 + $0xf0] sm:$0xff]
    %v705 = vld [vmem:[#allocation10 + $0xf8] sm:$0xff]
    %v706 = vld [vmem:[#allocation10 + $0x100] sm:$0xff]
    %v707 = vld [vmem:[#allocation10 + $0x108] sm:$0xff]
    %v708 = vld [vmem:[#allocation10 + $0x110] sm:$0xff]
    %v709 = vld [vmem:[#allocation10 + $0x118] sm:$0xff]
    %v710 = vld [vmem:[#allocation10 + $0x120] sm:$0xff]
    %v711 = vld [vmem:[#allocation10 + $0x128] sm:$0xff]
    %v712 = vld [vmem:[#allocation10 + $0x130] sm:$0xff]
    %v713 = vld [vmem:[#allocation10 + $0x138] sm:$0xff]
    %v714 = vld [vmem:[#allocation10 + $0x140] sm:$0xff]
    %v715 = vld [vmem:[#allocation10 + $0x148] sm:$0xff]
    %v716 = vld [vmem:[#allocation10 + $0x150] sm:$0xff]
    %v717 = vld [vmem:[#allocation10 + $0x158] sm:$0xff]
    %v718 = vld [vmem:[#allocation10 + $0x160] sm:$0xff]
    %v719 = vld [vmem:[#allocation10 + $0x168] sm:$0xff]
    %v720 = vld [vmem:[#allocation10 + $0x170] sm:$0xff]
    %v721 = vld [vmem:[#allocation10 + $0x178] sm:$0xff]
    %v722 = vld [vmem:[#allocation10 + $0x180] sm:$0xff]
    %v723 = vld [vmem:[#allocation10 + $0x188] sm:$0xff]
    %v724 = vld [vmem:[#allocation10 + $0x190] sm:$0xff]
    %v725 = vld [vmem:[#allocation10 + $0x198] sm:$0xff]
    %v726 = vld [vmem:[#allocation10 + $0x1a0] sm:$0xff]
    %v727 = vld [vmem:[#allocation10 + $0x1a8] sm:$0xff]
    %v728 = vld [vmem:[#allocation10 + $0x1b0] sm:$0xff]
    %v729 = vld [vmem:[#allocation10 + $0x1b8] sm:$0xff]
    %v730 = vld [vmem:[#allocation10 + $0x1c0] sm:$0xff]
    %v731 = vld [vmem:[#allocation10 + $0x1c8] sm:$0xff]
    %v732 = vld [vmem:[#allocation10 + $0x1d0] sm:$0xff]
    %v733 = vld [vmem:[#allocation10 + $0x1d8] sm:$0xff]
    %v734 = vld [vmem:[#allocation10 + $0x1e0] sm:$0xff]
    %v735 = vld [vmem:[#allocation10 + $0x1e8] sm:$0xff]
    %v736 = vld [vmem:[#allocation10 + $0x1f0] sm:$0xff]
    %v737 = vld [vmem:[#allocation10 + $0x1f8] sm:$0xff]
    %v802 = vunpack.c.l.b16 %v674
    %v803 = vunpack.c.h.b16 %v674
    %v804 = vunpack.c.l.b16 %v675
    %v805 = vunpack.c.h.b16 %v675
    %v806 = vunpack.c.l.b16 %v676
    %v807 = vunpack.c.h.b16 %v676
    %v808 = vunpack.c.l.b16 %v677
    %v809 = vunpack.c.h.b16 %v677
    %v810 = vunpack.c.l.b16 %v678
    %v811 = vunpack.c.h.b16 %v678
    %v812 = vunpack.c.l.b16 %v679
    %v813 = vunpack.c.h.b16 %v679
    %v814 = vunpack.c.l.b16 %v680
    %v815 = vunpack.c.h.b16 %v680
    %v816 = vunpack.c.l.b16 %v681
    %v817 = vunpack.c.h.b16 %v681
    %v818 = vunpack.c.l.b16 %v682
    %v819 = vunpack.c.h.b16 %v682
    %v820 = vunpack.c.l.b16 %v683
    %v821 = vunpack.c.h.b16 %v683
    %v822 = vunpack.c.l.b16 %v684
    %v823 = vunpack.c.h.b16 %v684
    %v824 = vunpack.c.l.b16 %v685
    %v825 = vunpack.c.h.b16 %v685
    %v826 = vunpack.c.l.b16 %v686
    %v827 = vunpack.c.h.b16 %v686
    %v828 = vunpack.c.l.b16 %v687
    %v829 = vunpack.c.h.b16 %v687
    %v830 = vunpack.c.l.b16 %v688
    %v831 = vunpack.c.h.b16 %v688
    %v832 = vunpack.c.l.b16 %v689
    %v833 = vunpack.c.h.b16 %v689
    %v834 = vunpack.c.l.b16 %v690
    %v835 = vunpack.c.h.b16 %v690
    %v836 = vunpack.c.l.b16 %v691
    %v837 = vunpack.c.h.b16 %v691
    %v838 = vunpack.c.l.b16 %v692
    %v839 = vunpack.c.h.b16 %v692
    %v840 = vunpack.c.l.b16 %v693
    %v841 = vunpack.c.h.b16 %v693
    %v842 = vunpack.c.l.b16 %v694
    %v843 = vunpack.c.h.b16 %v694
    %v844 = vunpack.c.l.b16 %v695
    %v845 = vunpack.c.h.b16 %v695
    %v846 = vunpack.c.l.b16 %v696
    %v847 = vunpack.c.h.b16 %v696
    %v848 = vunpack.c.l.b16 %v697
    %v849 = vunpack.c.h.b16 %v697
    %v850 = vunpack.c.l.b16 %v698
    %v851 = vunpack.c.h.b16 %v698
    %v852 = vunpack.c.l.b16 %v699
    %v853 = vunpack.c.h.b16 %v699
    %v854 = vunpack.c.l.b16 %v700
    %v855 = vunpack.c.h.b16 %v700
    %v856 = vunpack.c.l.b16 %v701
    %v857 = vunpack.c.h.b16 %v701
    %v858 = vunpack.c.l.b16 %v702
    %v859 = vunpack.c.h.b16 %v702
    %v860 = vunpack.c.l.b16 %v703
    %v861 = vunpack.c.h.b16 %v703
    %v862 = vunpack.c.l.b16 %v704
    %v863 = vunpack.c.h.b16 %v704
    %v864 = vunpack.c.l.b16 %v705
    %v865 = vunpack.c.h.b16 %v705
    %v866 = vunpack.c.l.b16 %v706
    %v867 = vunpack.c.h.b16 %v706
    %v868 = vunpack.c.l.b16 %v707
    %v869 = vunpack.c.h.b16 %v707
    %v870 = vunpack.c.l.b16 %v708
    %v871 = vunpack.c.h.b16 %v708
    %v872 = vunpack.c.l.b16 %v709
    %v873 = vunpack.c.h.b16 %v709
    %v874 = vunpack.c.l.b16 %v710
    %v875 = vunpack.c.h.b16 %v710
    %v876 = vunpack.c.l.b16 %v711
    %v877 = vunpack.c.h.b16 %v711
    %v878 = vunpack.c.l.b16 %v712
    %v879 = vunpack.c.h.b16 %v712
    %v880 = vunpack.c.l.b16 %v713
    %v881 = vunpack.c.h.b16 %v713
    %v882 = vunpack.c.l.b16 %v714
    %v883 = vunpack.c.h.b16 %v714
    %v884 = vunpack.c.l.b16 %v715
    %v885 = vunpack.c.h.b16 %v715
    %v886 = vunpack.c.l.b16 %v716
    %v887 = vunpack.c.h.b16 %v716
    %v888 = vunpack.c.l.b16 %v717
    %v889 = vunpack.c.h.b16 %v717
    %v890 = vunpack.c.l.b16 %v718
    %v891 = vunpack.c.h.b16 %v718
    %v892 = vunpack.c.l.b16 %v719
    %v893 = vunpack.c.h.b16 %v719
    %v894 = vunpack.c.l.b16 %v720
    %v895 = vunpack.c.h.b16 %v720
    %v896 = vunpack.c.l.b16 %v721
    %v897 = vunpack.c.h.b16 %v721
    %v898 = vunpack.c.l.b16 %v722
    %v899 = vunpack.c.h.b16 %v722
    %v900 = vunpack.c.l.b16 %v723
    %v901 = vunpack.c.h.b16 %v723
    %v902 = vunpack.c.l.b16 %v724
    %v903 = vunpack.c.h.b16 %v724
    %v904 = vunpack.c.l.b16 %v725
    %v905 = vunpack.c.h.b16 %v725
    %v906 = vunpack.c.l.b16 %v726
    %v907 = vunpack.c.h.b16 %v726
    %v908 = vunpack.c.l.b16 %v727
    %v909 = vunpack.c.h.b16 %v727
    %v910 = vunpack.c.l.b16 %v728
    %v911 = vunpack.c.h.b16 %v728
    %v912 = vunpack.c.l.b16 %v729
    %v913 = vunpack.c.h.b16 %v729
    %v914 = vunpack.c.l.b16 %v730
    %v915 = vunpack.c.h.b16 %v730
    %v916 = vunpack.c.l.b16 %v731
    %v917 = vunpack.c.h.b16 %v731
    %v918 = vunpack.c.l.b16 %v732
    %v919 = vunpack.c.h.b16 %v732
    %v920 = vunpack.c.l.b16 %v733
    %v921 = vunpack.c.h.b16 %v733
    %v922 = vunpack.c.l.b16 %v734
    %v923 = vunpack.c.h.b16 %v734
    %v924 = vunpack.c.l.b16 %v735
    %v925 = vunpack.c.h.b16 %v735
    %v926 = vunpack.c.l.b16 %v736
    %v927 = vunpack.c.h.b16 %v736
    %v928 = vunpack.c.l.b16 %v737
    %v929 = vunpack.c.h.b16 %v737
    %v930 = vpack.c.b16 %v806, %v802
    %v931 = vpack.c.b16 %v807, %v803
    %v932 = vpack.c.b16 %v808, %v804
    %v933 = vpack.c.b16 %v809, %v805
    %v934 = vpack.c.b16 %v814, %v810
    %v935 = vpack.c.b16 %v815, %v811
    %v936 = vpack.c.b16 %v816, %v812
    %v937 = vpack.c.b16 %v817, %v813
    %v938 = vpack.c.b16 %v822, %v818
    %v939 = vpack.c.b16 %v823, %v819
    %v940 = vpack.c.b16 %v824, %v820
    %v941 = vpack.c.b16 %v825, %v821
    %v942 = vpack.c.b16 %v830, %v826
    %v943 = vpack.c.b16 %v831, %v827
    %v944 = vpack.c.b16 %v832, %v828
    %v945 = vpack.c.b16 %v833, %v829
    %v946 = vpack.c.b16 %v838, %v834
    %v947 = vpack.c.b16 %v839, %v835
    %v948 = vpack.c.b16 %v840, %v836
    %v949 = vpack.c.b16 %v841, %v837
    %v950 = vpack.c.b16 %v846, %v842
    %v951 = vpack.c.b16 %v847, %v843
    %v952 = vpack.c.b16 %v848, %v844
    %v953 = vpack.c.b16 %v849, %v845
    %v954 = vpack.c.b16 %v854, %v850
    %v955 = vpack.c.b16 %v855, %v851
    %v956 = vpack.c.b16 %v856, %v852
    %v957 = vpack.c.b16 %v857, %v853
    %v958 = vpack.c.b16 %v862, %v858
    %v959 = vpack.c.b16 %v863, %v859
    %v960 = vpack.c.b16 %v864, %v860
    %v961 = vpack.c.b16 %v865, %v861
    %v962 = vpack.c.b16 %v870, %v866
    %v963 = vpack.c.b16 %v871, %v867
    %v964 = vpack.c.b16 %v872, %v868
    %v965 = vpack.c.b16 %v873, %v869
    %v966 = vpack.c.b16 %v878, %v874
    %v967 = vpack.c.b16 %v879, %v875
    %v968 = vpack.c.b16 %v880, %v876
    %v969 = vpack.c.b16 %v881, %v877
    %v970 = vpack.c.b16 %v886, %v882
    %v971 = vpack.c.b16 %v887, %v883
    %v972 = vpack.c.b16 %v888, %v884
    %v973 = vpack.c.b16 %v889, %v885
    %v974 = vpack.c.b16 %v894, %v890
    %v975 = vpack.c.b16 %v895, %v891
    %v976 = vpack.c.b16 %v896, %v892
    %v977 = vpack.c.b16 %v897, %v893
    %v978 = vpack.c.b16 %v902, %v898
    %v979 = vpack.c.b16 %v903, %v899
    %v980 = vpack.c.b16 %v904, %v900
    %v981 = vpack.c.b16 %v905, %v901
    %v982 = vpack.c.b16 %v910, %v906
    %v983 = vpack.c.b16 %v911, %v907
    %v984 = vpack.c.b16 %v912, %v908
    %v985 = vpack.c.b16 %v913, %v909
    %v986 = vpack.c.b16 %v918, %v914
    %v987 = vpack.c.b16 %v919, %v915
    %v988 = vpack.c.b16 %v920, %v916
    %v989 = vpack.c.b16 %v921, %v917
    %v990 = vpack.c.b16 %v926, %v922
    %v991 = vpack.c.b16 %v927, %v923
    %v992 = vpack.c.b16 %v928, %v924
    %v993 = vpack.c.b16 %v929, %v925
    %1058 = vmatprep.subr.bf16.mxu0 %v931
    %1059 = vmatpush1.bf16.msra.mxu0 %v930
    %1060 = vmatprep.subr.bf16.mxu0 %v935
    %1061 = vmatpush1.bf16.msra.mxu0 %v934
    %1062 = vmatprep.subr.bf16.mxu0 %v939
    %1063 = vmatpush1.bf16.msra.mxu0 %v938
    %1064 = vmatprep.subr.bf16.mxu0 %v943
    %1065 = vmatpush1.bf16.msra.mxu0 %v942
    %1066 = vmatprep.subr.bf16.mxu0 %v947
    %1067 = vmatpush1.bf16.msra.mxu0 %v946
    %1068 = vmatprep.subr.bf16.mxu0 %v951
    %1069 = vmatpush1.bf16.msra.mxu0 %v950
    %1070 = vmatprep.subr.bf16.mxu0 %v955
    %1071 = vmatpush1.bf16.msra.mxu0 %v954
    %1072 = vmatprep.subr.bf16.mxu0 %v959
    %1073 = vmatpush1.bf16.msra.mxu0 %v958
    %1074 = vmatprep.subr.bf16.mxu0 %v963
    %1075 = vmatpush1.bf16.msra.mxu0 %v962
    %1076 = vmatprep.subr.bf16.mxu0 %v967
    %1077 = vmatpush1.bf16.msra.mxu0 %v966
    %1078 = vmatprep.subr.bf16.mxu0 %v971
    %1079 = vmatpush1.bf16.msra.mxu0 %v970
    %1080 = vmatprep.subr.bf16.mxu0 %v975
    %1081 = vmatpush1.bf16.msra.mxu0 %v974
    %1082 = vmatprep.subr.bf16.mxu0 %v979
    %1083 = vmatpush1.bf16.msra.mxu0 %v978
    %1084 = vmatprep.subr.bf16.mxu0 %v983
    %1085 = vmatpush1.bf16.msra.mxu0 %v982
    %1086 = vmatprep.subr.bf16.mxu0 %v987
    %1087 = vmatpush1.bf16.msra.mxu0 %v986
    %1088 = vmatprep.subr.bf16.mxu0 %v991
    %1089 = vmatpush1.bf16.msra.mxu0 %v990
    %1090 = vmatprep.mubr.bf16.mxu0 %v181
    %1091 = vmatmul.mubr.bf16.gmra.mrb[0].mxu0 %v180
    %v1092 = vpop.f32.mrb[0].mxu0
    %v1093 = vadd.f32 0.0, %v1092
    %v1094 = vpop.f32.mrb[0].mxu0
    %v1095 = vadd.f32 0.0, %v1094
    %v1096 = vpop.f32.mrb[0].mxu0
    %v1097 = vadd.f32 0.0, %v1096
    %v1098 = vpop.f32.mrb[0].mxu0
    %v1099 = vadd.f32 0.0, %v1098
    %1100 = vmatprep.mubr.bf16.mxu0 %v183
    %1101 = vmatmul.mubr.bf16.gmra.mrb[0].mxu0 %v182
    %v1102 = vpop.f32.mrb[0].mxu0
    %v1103 = vadd.f32 0.0, %v1102
    %v1104 = vpop.f32.mrb[0].mxu0
    %v1105 = vadd.f32 0.0, %v1104
    %v1106 = vpop.f32.mrb[0].mxu0
    %v1107 = vadd.f32 0.0, %v1106
    %v1108 = vpop.f32.mrb[0].mxu0
    %v1109 = vadd.f32 0.0, %v1108
    %1110 = vdwg.mxu0
    %1111 = vmatprep.subr.bf16.mxu0 %v933
    %1112 = vmatpush1.bf16.msra.mxu0 %v932
    %1113 = vmatprep.subr.bf16.mxu0 %v937
    %1114 = vmatpush1.bf16.msra.mxu0 %v936
    %1115 = vmatprep.subr.bf16.mxu0 %v941
    %1116 = vmatpush1.bf16.msra.mxu0 %v940
    %1117 = vmatprep.subr.bf16.mxu0 %v945
    %1118 = vmatpush1.bf16.msra.mxu0 %v944
    %1119 = vmatprep.subr.bf16.mxu0 %v949
    %1120 = vmatpush1.bf16.msra.mxu0 %v948
    %1121 = vmatprep.subr.bf16.mxu0 %v953
    %1122 = vmatpush1.bf16.msra.mxu0 %v952
    %1123 = vmatprep.subr.bf16.mxu0 %v957
    %1124 = vmatpush1.bf16.msra.mxu0 %v956
    %1125 = vmatprep.subr.bf16.mxu0 %v961
    %1126 = vmatpush1.bf16.msra.mxu0 %v960
    %1127 = vmatprep.subr.bf16.mxu0 %v965
    %1128 = vmatpush1.bf16.msra.mxu0 %v964
    %1129 = vmatprep.subr.bf16.mxu0 %v969
    %1130 = vmatpush1.bf16.msra.mxu0 %v968
    %1131 = vmatprep.subr.bf16.mxu0 %v973
    %1132 = vmatpush1.bf16.msra.mxu0 %v972
    %1133 = vmatprep.subr.bf16.mxu0 %v977
    %1134 = vmatpush1.bf16.msra.mxu0 %v976
    %1135 = vmatprep.subr.bf16.mxu0 %v981
    %1136 = vmatpush1.bf16.msra.mxu0 %v980
    %1137 = vmatprep.subr.bf16.mxu0 %v985
    %1138 = vmatpush1.bf16.msra.mxu0 %v984
    %1139 = vmatprep.subr.bf16.mxu0 %v989
    %1140 = vmatpush1.bf16.msra.mxu0 %v988
    %1141 = vmatprep.subr.bf16.mxu0 %v993
    %1142 = vmatpush1.bf16.msra.mxu0 %v992
    %1143 = vmatprep.mubr.bf16.mxu0 %v181
    %1144 = vmatmul.mubr.bf16.gmra.mrb[0].mxu0 %v180
    %v1145 = vpop.f32.mrb[0].mxu0
    %v1146 = vadd.f32 0.0, %v1145
    %v1147 = vpop.f32.mrb[0].mxu0
    %v1148 = vadd.f32 0.0, %v1147
    %v1149 = vpop.f32.mrb[0].mxu0
    %v1150 = vadd.f32 0.0, %v1149
    %v1151 = vpop.f32.mrb[0].mxu0
    %v1152 = vadd.f32 0.0, %v1151
    %1153 = vmatprep.mubr.bf16.mxu0 %v183
    %1154 = vmatmul.mubr.bf16.gmra.mrb[0].mxu0 %v182
    %v1155 = vpop.f32.mrb[0].mxu0
    %v1156 = vadd.f32 0.0, %v1155
    %v1157 = vpop.f32.mrb[0].mxu0
    %v1158 = vadd.f32 0.0, %v1157
    %v1159 = vpop.f32.mrb[0].mxu0
    %v1160 = vadd.f32 0.0, %v1159
    %v1161 = vpop.f32.mrb[0].mxu0
    %v1162 = vadd.f32 0.0, %v1161
    %1163 = vdwg.mxu0
    %v1164 = vxor.u32 %v603, 2147483648
    %v1165 = vxor.u32 %v605, 2147483648
    %v1166 = vxor.u32 %v656, 2147483648
    %v1167 = vxor.u32 %v658, 2147483648
    %v1168 = vxor.u32 %v607, 2147483648
    %v1169 = vxor.u32 %v609, 2147483648
    %v1170 = vxor.u32 %v660, 2147483648
    %v1171 = vxor.u32 %v662, 2147483648
    %v1172 = vxor.u32 %v613, 2147483648
    %v1173 = vxor.u32 %v615, 2147483648
    %v1174 = vxor.u32 %v666, 2147483648
    %v1175 = vxor.u32 %v668, 2147483648
    %v1176 = vxor.u32 %v617, 2147483648
    %v1177 = vxor.u32 %v619, 2147483648
    %v1178 = vxor.u32 %v670, 2147483648
    %v1179 = vxor.u32 %v672, 2147483648
    %v1180 = vmul.f32 %v1164, 1.442695
    %v1181 = vpow.pop %v1180
    %v1182 = vmul.f32 %v1165, 1.442695
    %v1183 = vpow.pop %v1182
    %v1184 = vmul.f32 %v1166, 1.442695
    %v1185 = vpow.pop %v1184
    %v1186 = vmul.f32 %v1167, 1.442695
    %v1187 = vpow.pop %v1186
    %v1188 = vmul.f32 %v1168, 1.442695
    %v1189 = vpow.pop %v1188
    %v1190 = vmul.f32 %v1169, 1.442695
    %v1191 = vpow.pop %v1190
    %v1192 = vmul.f32 %v1170, 1.442695
    %v1193 = vpow.pop %v1192
    %v1194 = vmul.f32 %v1171, 1.442695
    %v1195 = vpow.pop %v1194
    %v1196 = vmul.f32 %v1172, 1.442695
    %v1197 = vpow.pop %v1196
    %v1198 = vmul.f32 %v1173, 1.442695
    %v1199 = vpow.pop %v1198
    %v1200 = vmul.f32 %v1174, 1.442695
    %v1201 = vpow.pop %v1200
    %v1202 = vmul.f32 %v1175, 1.442695
    %v1203 = vpow.pop %v1202
    %v1204 = vmul.f32 %v1176, 1.442695
    %v1205 = vpow.pop %v1204
    %v1206 = vmul.f32 %v1177, 1.442695
    %v1207 = vpow.pop %v1206
    %v1208 = vmul.f32 %v1178, 1.442695
    %v1209 = vpow.pop %v1208
    %v1210 = vmul.f32 %v1179, 1.442695
    %v1211 = vpow.pop %v1210
    %v1212 = vadd.f32 %v1181, 1.0
    %v1213 = vadd.f32 %v1183, 1.0
    %v1214 = vadd.f32 %v1185, 1.0
    %v1215 = vadd.f32 %v1187, 1.0
    %v1216 = vadd.f32 %v1189, 1.0
    %v1217 = vadd.f32 %v1191, 1.0
    %v1218 = vadd.f32 %v1193, 1.0
    %v1219 = vadd.f32 %v1195, 1.0
    %v1220 = vadd.f32 %v1197, 1.0
    %v1221 = vadd.f32 %v1199, 1.0
    %v1222 = vadd.f32 %v1201, 1.0
    %v1223 = vadd.f32 %v1203, 1.0
    %v1224 = vadd.f32 %v1205, 1.0
    %v1225 = vadd.f32 %v1207, 1.0
    %v1226 = vadd.f32 %v1209, 1.0
    %v1227 = vadd.f32 %v1211, 1.0
    %v1228 = vrcp.pop %v1212
    %v1229 = vmul.f32 1.0, %v1228
    %v1230 = vrcp.pop %v1213
    %v1231 = vmul.f32 1.0, %v1230
    %v1232 = vrcp.pop %v1214
    %v1233 = vmul.f32 1.0, %v1232
    %v1234 = vrcp.pop %v1215
    %v1235 = vmul.f32 1.0, %v1234
    %v1236 = vrcp.pop %v1216
    %v1237 = vmul.f32 1.0, %v1236
    %v1238 = vrcp.pop %v1217
    %v1239 = vmul.f32 1.0, %v1238
    %v1240 = vrcp.pop %v1218
    %v1241 = vmul.f32 1.0, %v1240
    %v1242 = vrcp.pop %v1219
    %v1243 = vmul.f32 1.0, %v1242
    %v1244 = vrcp.pop %v1220
    %v1245 = vmul.f32 1.0, %v1244
    %v1246 = vrcp.pop %v1221
    %v1247 = vmul.f32 1.0, %v1246
    %v1248 = vrcp.pop %v1222
    %v1249 = vmul.f32 1.0, %v1248
    %v1250 = vrcp.pop %v1223
    %v1251 = vmul.f32 1.0, %v1250
    %v1252 = vrcp.pop %v1224
    %v1253 = vmul.f32 1.0, %v1252
    %v1254 = vrcp.pop %v1225
    %v1255 = vmul.f32 1.0, %v1254
    %v1256 = vrcp.pop %v1226
    %v1257 = vmul.f32 1.0, %v1256
    %v1258 = vrcp.pop %v1227
    %v1259 = vmul.f32 1.0, %v1258
    %v1260 = vmul.f32 %v603, %v1229
    %v1261 = vmul.f32 %v605, %v1231
    %v1262 = vmul.f32 %v656, %v1233
    %v1263 = vmul.f32 %v658, %v1235
    %v1264 = vmul.f32 %v607, %v1237
    %v1265 = vmul.f32 %v609, %v1239
    %v1266 = vmul.f32 %v660, %v1241
    %v1267 = vmul.f32 %v662, %v1243
    %v1268 = vmul.f32 %v613, %v1245
    %v1269 = vmul.f32 %v615, %v1247
    %v1270 = vmul.f32 %v666, %v1249
    %v1271 = vmul.f32 %v668, %v1251
    %v1272 = vmul.f32 %v617, %v1253
    %v1273 = vmul.f32 %v619, %v1255
    %v1274 = vmul.f32 %v670, %v1257
    %v1275 = vmul.f32 %v672, %v1259
    %v1276 = vmul.f32 %v1260, %v1093
    %v1277 = vmul.f32 %v1261, %v1095
    %v1278 = vmul.f32 %v1262, %v1146
    %v1279 = vmul.f32 %v1263, %v1148
    %v1280 = vmul.f32 %v1264, %v1097
    %v1281 = vmul.f32 %v1265, %v1099
    %v1282 = vmul.f32 %v1266, %v1150
    %v1283 = vmul.f32 %v1267, %v1152
    %v1284 = vmul.f32 %v1268, %v1103
    %v1285 = vmul.f32 %v1269, %v1105
    %v1286 = vmul.f32 %v1270, %v1156
    %v1287 = vmul.f32 %v1271, %v1158
    %v1288 = vmul.f32 %v1272, %v1107
    %v1289 = vmul.f32 %v1273, %v1109
    %v1290 = vmul.f32 %v1274, %v1160
    %v1291 = vmul.f32 %v1275, %v1162
    %v1292 = vpack.c.bf16 %v1280, %v1276
    %v1293 = vpack.c.bf16 %v1281, %v1277
    %v1294 = vpack.c.bf16 %v1282, %v1278
    %v1295 = vpack.c.bf16 %v1283, %v1279
    %v1296 = vpack.c.bf16 %v1288, %v1284
    %v1297 = vpack.c.bf16 %v1289, %v1285
    %v1298 = vpack.c.bf16 %v1290, %v1286
    %v1299 = vpack.c.bf16 %v1291, %v1287
    %v1300 = vld [vmem:[#allocation3] sm:$0xff]
    %v1301 = vld [vmem:[#allocation3 + $0x8] sm:$0xff]
    %v1302 = vld [vmem:[#allocation3 + $0x10] sm:$0xff]
    %v1303 = vld [vmem:[#allocation3 + $0x18] sm:$0xff]
    %v1304 = vld [vmem:[#allocation3 + $0x20] sm:$0xff]
    %v1305 = vld [vmem:[#allocation3 + $0x28] sm:$0xff]
    %v1306 = vld [vmem:[#allocation3 + $0x30] sm:$0xff]
    %v1307 = vld [vmem:[#allocation3 + $0x38] sm:$0xff]
    %v1308 = vld [vmem:[#allocation12] sm:$0xff]
    %v1309 = vld [vmem:[#allocation12 + $0x8] sm:$0xff]
    %v1310 = vld [vmem:[#allocation12 + $0x10] sm:$0xff]
    %v1311 = vld [vmem:[#allocation12 + $0x18] sm:$0xff]
    %v1312 = vld [vmem:[#allocation12 + $0x20] sm:$0xff]
    %v1313 = vld [vmem:[#allocation12 + $0x28] sm:$0xff]
    %v1314 = vld [vmem:[#allocation12 + $0x30] sm:$0xff]
    %v1315 = vld [vmem:[#allocation12 + $0x38] sm:$0xff]
    %v1316 = vld [vmem:[#allocation12 + $0x40] sm:$0xff]
    %v1317 = vld [vmem:[#allocation12 + $0x48] sm:$0xff]
    %v1318 = vld [vmem:[#allocation12 + $0x50] sm:$0xff]
    %v1319 = vld [vmem:[#allocation12 + $0x58] sm:$0xff]
    %v1320 = vld [vmem:[#allocation12 + $0x60] sm:$0xff]
    %v1321 = vld [vmem:[#allocation12 + $0x68] sm:$0xff]
    %v1322 = vld [vmem:[#allocation12 + $0x70] sm:$0xff]
    %v1323 = vld [vmem:[#allocation12 + $0x78] sm:$0xff]
    %v1324 = vld [vmem:[#allocation12 + $0x80] sm:$0xff]
    %v1325 = vld [vmem:[#allocation12 + $0x88] sm:$0xff]
    %v1326 = vld [vmem:[#allocation12 + $0x90] sm:$0xff]
    %v1327 = vld [vmem:[#allocation12 + $0x98] sm:$0xff]
    %v1328 = vld [vmem:[#allocation12 + $0xa0] sm:$0xff]
    %v1329 = vld [vmem:[#allocation12 + $0xa8] sm:$0xff]
    %v1330 = vld [vmem:[#allocation12 + $0xb0] sm:$0xff]
    %v1331 = vld [vmem:[#allocation12 + $0xb8] sm:$0xff]
    %v1332 = vld [vmem:[#allocation12 + $0xc0] sm:$0xff]
    %v1333 = vld [vmem:[#allocation12 + $0xc8] sm:$0xff]
    %v1334 = vld [vmem:[#allocation12 + $0xd0] sm:$0xff]
    %v1335 = vld [vmem:[#allocation12 + $0xd8] sm:$0xff]
    %v1336 = vld [vmem:[#allocation12 + $0xe0] sm:$0xff]
    %v1337 = vld [vmem:[#allocation12 + $0xe8] sm:$0xff]
    %v1338 = vld [vmem:[#allocation12 + $0xf0] sm:$0xff]
    %v1339 = vld [vmem:[#allocation12 + $0xf8] sm:$0xff]
    %v1340 = vld [vmem:[#allocation12 + $0x100] sm:$0xff]
    %v1341 = vld [vmem:[#allocation12 + $0x108] sm:$0xff]
    %v1342 = vld [vmem:[#allocation12 + $0x110] sm:$0xff]
    %v1343 = vld [vmem:[#allocation12 + $0x118] sm:$0xff]
    %v1344 = vld [vmem:[#allocation12 + $0x120] sm:$0xff]
    %v1345 = vld [vmem:[#allocation12 + $0x128] sm:$0xff]
    %v1346 = vld [vmem:[#allocation12 + $0x130] sm:$0xff]
    %v1347 = vld [vmem:[#allocation12 + $0x138] sm:$0xff]
    %v1348 = vld [vmem:[#allocation12 + $0x140] sm:$0xff]
    %v1349 = vld [vmem:[#allocation12 + $0x148] sm:$0xff]
    %v1350 = vld [vmem:[#allocation12 + $0x150] sm:$0xff]
    %v1351 = vld [vmem:[#allocation12 + $0x158] sm:$0xff]
    %v1352 = vld [vmem:[#allocation12 + $0x160] sm:$0xff]
    %v1353 = vld [vmem:[#allocation12 + $0x168] sm:$0xff]
    %v1354 = vld [vmem:[#allocation12 + $0x170] sm:$0xff]
    %v1355 = vld [vmem:[#allocation12 + $0x178] sm:$0xff]
    %v1356 = vld [vmem:[#allocation12 + $0x180] sm:$0xff]
    %v1357 = vld [vmem:[#allocation12 + $0x188] sm:$0xff]
    %v1358 = vld [vmem:[#allocation12 + $0x190] sm:$0xff]
    %v1359 = vld [vmem:[#allocation12 + $0x198] sm:$0xff]
    %v1360 = vld [vmem:[#allocation12 + $0x1a0] sm:$0xff]
    %v1361 = vld [vmem:[#allocation12 + $0x1a8] sm:$0xff]
    %v1362 = vld [vmem:[#allocation12 + $0x1b0] sm:$0xff]
    %v1363 = vld [vmem:[#allocation12 + $0x1b8] sm:$0xff]
    %v1364 = vld [vmem:[#allocation12 + $0x1c0] sm:$0xff]
    %v1365 = vld [vmem:[#allocation12 + $0x1c8] sm:$0xff]
    %v1366 = vld [vmem:[#allocation12 + $0x1d0] sm:$0xff]
    %v1367 = vld [vmem:[#allocation12 + $0x1d8] sm:$0xff]
    %v1368 = vld [vmem:[#allocation12 + $0x1e0] sm:$0xff]
    %v1369 = vld [vmem:[#allocation12 + $0x1e8] sm:$0xff]
    %v1370 = vld [vmem:[#allocation12 + $0x1f0] sm:$0xff]
    %v1371 = vld [vmem:[#allocation12 + $0x1f8] sm:$0xff]
    %v1436 = vunpack.c.l.b16 %v1308
    %v1437 = vunpack.c.h.b16 %v1308
    %v1438 = vunpack.c.l.b16 %v1309
    %v1439 = vunpack.c.h.b16 %v1309
    %v1440 = vunpack.c.l.b16 %v1310
    %v1441 = vunpack.c.h.b16 %v1310
    %v1442 = vunpack.c.l.b16 %v1311
    %v1443 = vunpack.c.h.b16 %v1311
    %v1444 = vunpack.c.l.b16 %v1312
    %v1445 = vunpack.c.h.b16 %v1312
    %v1446 = vunpack.c.l.b16 %v1313
    %v1447 = vunpack.c.h.b16 %v1313
    %v1448 = vunpack.c.l.b16 %v1314
    %v1449 = vunpack.c.h.b16 %v1314
    %v1450 = vunpack.c.l.b16 %v1315
    %v1451 = vunpack.c.h.b16 %v1315
    %v1452 = vunpack.c.l.b16 %v1316
    %v1453 = vunpack.c.h.b16 %v1316
    %v1454 = vunpack.c.l.b16 %v1317
    %v1455 = vunpack.c.h.b16 %v1317
    %v1456 = vunpack.c.l.b16 %v1318
    %v1457 = vunpack.c.h.b16 %v1318
    %v1458 = vunpack.c.l.b16 %v1319
    %v1459 = vunpack.c.h.b16 %v1319
    %v1460 = vunpack.c.l.b16 %v1320
    %v1461 = vunpack.c.h.b16 %v1320
    %v1462 = vunpack.c.l.b16 %v1321
    %v1463 = vunpack.c.h.b16 %v1321
    %v1464 = vunpack.c.l.b16 %v1322
    %v1465 = vunpack.c.h.b16 %v1322
    %v1466 = vunpack.c.l.b16 %v1323
    %v1467 = vunpack.c.h.b16 %v1323
    %v1468 = vunpack.c.l.b16 %v1324
    %v1469 = vunpack.c.h.b16 %v1324
    %v1470 = vunpack.c.l.b16 %v1325
    %v1471 = vunpack.c.h.b16 %v1325
    %v1472 = vunpack.c.l.b16 %v1326
    %v1473 = vunpack.c.h.b16 %v1326
    %v1474 = vunpack.c.l.b16 %v1327
    %v1475 = vunpack.c.h.b16 %v1327
    %v1476 = vunpack.c.l.b16 %v1328
    %v1477 = vunpack.c.h.b16 %v1328
    %v1478 = vunpack.c.l.b16 %v1329
    %v1479 = vunpack.c.h.b16 %v1329
    %v1480 = vunpack.c.l.b16 %v1330
    %v1481 = vunpack.c.h.b16 %v1330
    %v1482 = vunpack.c.l.b16 %v1331
    %v1483 = vunpack.c.h.b16 %v1331
    %v1484 = vunpack.c.l.b16 %v1332
    %v1485 = vunpack.c.h.b16 %v1332
    %v1486 = vunpack.c.l.b16 %v1333
    %v1487 = vunpack.c.h.b16 %v1333
    %v1488 = vunpack.c.l.b16 %v1334
    %v1489 = vunpack.c.h.b16 %v1334
    %v1490 = vunpack.c.l.b16 %v1335
    %v1491 = vunpack.c.h.b16 %v1335
    %v1492 = vunpack.c.l.b16 %v1336
    %v1493 = vunpack.c.h.b16 %v1336
    %v1494 = vunpack.c.l.b16 %v1337
    %v1495 = vunpack.c.h.b16 %v1337
    %v1496 = vunpack.c.l.b16 %v1338
    %v1497 = vunpack.c.h.b16 %v1338
    %v1498 = vunpack.c.l.b16 %v1339
    %v1499 = vunpack.c.h.b16 %v1339
    %v1500 = vunpack.c.l.b16 %v1340
    %v1501 = vunpack.c.h.b16 %v1340
    %v1502 = vunpack.c.l.b16 %v1341
    %v1503 = vunpack.c.h.b16 %v1341
    %v1504 = vunpack.c.l.b16 %v1342
    %v1505 = vunpack.c.h.b16 %v1342
    %v1506 = vunpack.c.l.b16 %v1343
    %v1507 = vunpack.c.h.b16 %v1343
    %v1508 = vunpack.c.l.b16 %v1344
    %v1509 = vunpack.c.h.b16 %v1344
    %v1510 = vunpack.c.l.b16 %v1345
    %v1511 = vunpack.c.h.b16 %v1345
    %v1512 = vunpack.c.l.b16 %v1346
    %v1513 = vunpack.c.h.b16 %v1346
    %v1514 = vunpack.c.l.b16 %v1347
    %v1515 = vunpack.c.h.b16 %v1347
    %v1516 = vunpack.c.l.b16 %v1348
    %v1517 = vunpack.c.h.b16 %v1348
    %v1518 = vunpack.c.l.b16 %v1349
    %v1519 = vunpack.c.h.b16 %v1349
    %v1520 = vunpack.c.l.b16 %v1350
    %v1521 = vunpack.c.h.b16 %v1350
    %v1522 = vunpack.c.l.b16 %v1351
    %v1523 = vunpack.c.h.b16 %v1351
    %v1524 = vunpack.c.l.b16 %v1352
    %v1525 = vunpack.c.h.b16 %v1352
    %v1526 = vunpack.c.l.b16 %v1353
    %v1527 = vunpack.c.h.b16 %v1353
    %v1528 = vunpack.c.l.b16 %v1354
    %v1529 = vunpack.c.h.b16 %v1354
    %v1530 = vunpack.c.l.b16 %v1355
    %v1531 = vunpack.c.h.b16 %v1355
    %v1532 = vunpack.c.l.b16 %v1356
    %v1533 = vunpack.c.h.b16 %v1356
    %v1534 = vunpack.c.l.b16 %v1357
    %v1535 = vunpack.c.h.b16 %v1357
    %v1536 = vunpack.c.l.b16 %v1358
    %v1537 = vunpack.c.h.b16 %v1358
    %v1538 = vunpack.c.l.b16 %v1359
    %v1539 = vunpack.c.h.b16 %v1359
    %v1540 = vunpack.c.l.b16 %v1360
    %v1541 = vunpack.c.h.b16 %v1360
    %v1542 = vunpack.c.l.b16 %v1361
    %v1543 = vunpack.c.h.b16 %v1361
    %v1544 = vunpack.c.l.b16 %v1362
    %v1545 = vunpack.c.h.b16 %v1362
    %v1546 = vunpack.c.l.b16 %v1363
    %v1547 = vunpack.c.h.b16 %v1363
    %v1548 = vunpack.c.l.b16 %v1364
    %v1549 = vunpack.c.h.b16 %v1364
    %v1550 = vunpack.c.l.b16 %v1365
    %v1551 = vunpack.c.h.b16 %v1365
    %v1552 = vunpack.c.l.b16 %v1366
    %v1553 = vunpack.c.h.b16 %v1366
    %v1554 = vunpack.c.l.b16 %v1367
    %v1555 = vunpack.c.h.b16 %v1367
    %v1556 = vunpack.c.l.b16 %v1368
    %v1557 = vunpack.c.h.b16 %v1368
    %v1558 = vunpack.c.l.b16 %v1369
    %v1559 = vunpack.c.h.b16 %v1369
    %v1560 = vunpack.c.l.b16 %v1370
    %v1561 = vunpack.c.h.b16 %v1370
    %v1562 = vunpack.c.l.b16 %v1371
    %v1563 = vunpack.c.h.b16 %v1371
    %v1564 = vpack.c.b16 %v1438, %v1436
    %v1565 = vpack.c.b16 %v1439, %v1437
    %v1566 = vpack.c.b16 %v1442, %v1440
    %v1567 = vpack.c.b16 %v1443, %v1441
    %v1568 = vpack.c.b16 %v1446, %v1444
    %v1569 = vpack.c.b16 %v1447, %v1445
    %v1570 = vpack.c.b16 %v1450, %v1448
    %v1571 = vpack.c.b16 %v1451, %v1449
    %v1572 = vpack.c.b16 %v1454, %v1452
    %v1573 = vpack.c.b16 %v1455, %v1453
    %v1574 = vpack.c.b16 %v1458, %v1456
    %v1575 = vpack.c.b16 %v1459, %v1457
    %v1576 = vpack.c.b16 %v1462, %v1460
    %v1577 = vpack.c.b16 %v1463, %v1461
    %v1578 = vpack.c.b16 %v1466, %v1464
    %v1579 = vpack.c.b16 %v1467, %v1465
    %v1580 = vpack.c.b16 %v1470, %v1468
    %v1581 = vpack.c.b16 %v1471, %v1469
    %v1582 = vpack.c.b16 %v1474, %v1472
    %v1583 = vpack.c.b16 %v1475, %v1473
    %v1584 = vpack.c.b16 %v1478, %v1476
    %v1585 = vpack.c.b16 %v1479, %v1477
    %v1586 = vpack.c.b16 %v1482, %v1480
    %v1587 = vpack.c.b16 %v1483, %v1481
    %v1588 = vpack.c.b16 %v1486, %v1484
    %v1589 = vpack.c.b16 %v1487, %v1485
    %v1590 = vpack.c.b16 %v1490, %v1488
    %v1591 = vpack.c.b16 %v1491, %v1489
    %v1592 = vpack.c.b16 %v1494, %v1492
    %v1593 = vpack.c.b16 %v1495, %v1493
    %v1594 = vpack.c.b16 %v1498, %v1496
    %v1595 = vpack.c.b16 %v1499, %v1497
    %v1596 = vpack.c.b16 %v1502, %v1500
    %v1597 = vpack.c.b16 %v1503, %v1501
    %v1598 = vpack.c.b16 %v1506, %v1504
    %v1599 = vpack.c.b16 %v1507, %v1505
    %v1600 = vpack.c.b16 %v1510, %v1508
    %v1601 = vpack.c.b16 %v1511, %v1509
    %v1602 = vpack.c.b16 %v1514, %v1512
    %v1603 = vpack.c.b16 %v1515, %v1513
    %v1604 = vpack.c.b16 %v1518, %v1516
    %v1605 = vpack.c.b16 %v1519, %v1517
    %v1606 = vpack.c.b16 %v1522, %v1520
    %v1607 = vpack.c.b16 %v1523, %v1521
    %v1608 = vpack.c.b16 %v1526, %v1524
    %v1609 = vpack.c.b16 %v1527, %v1525
    %v1610 = vpack.c.b16 %v1530, %v1528
    %v1611 = vpack.c.b16 %v1531, %v1529
    %v1612 = vpack.c.b16 %v1534, %v1532
    %v1613 = vpack.c.b16 %v1535, %v1533
    %v1614 = vpack.c.b16 %v1538, %v1536
    %v1615 = vpack.c.b16 %v1539, %v1537
    %v1616 = vpack.c.b16 %v1542, %v1540
    %v1617 = vpack.c.b16 %v1543, %v1541
    %v1618 = vpack.c.b16 %v1546, %v1544
    %v1619 = vpack.c.b16 %v1547, %v1545
    %v1620 = vpack.c.b16 %v1550, %v1548
    %v1621 = vpack.c.b16 %v1551, %v1549
    %v1622 = vpack.c.b16 %v1554, %v1552
    %v1623 = vpack.c.b16 %v1555, %v1553
    %v1624 = vpack.c.b16 %v1558, %v1556
    %v1625 = vpack.c.b16 %v1559, %v1557
    %v1626 = vpack.c.b16 %v1562, %v1560
    %v1627 = vpack.c.b16 %v1563, %v1561
    %1692 = vmatprep.subr.bf16.mxu0 %v1565
    %1693 = vmatpush1.bf16.msra.mxu0 %v1564
    %1694 = vmatprep.subr.bf16.mxu0 %v1567
    %1695 = vmatpush1.bf16.msra.mxu0 %v1566
    %1696 = vmatprep.subr.bf16.mxu0 %v1569
    %1697 = vmatpush1.bf16.msra.mxu0 %v1568
    %1698 = vmatprep.subr.bf16.mxu0 %v1571
    %1699 = vmatpush1.bf16.msra.mxu0 %v1570
    %1700 = vmatprep.subr.bf16.mxu0 %v1573
    %1701 = vmatpush1.bf16.msra.mxu0 %v1572
    %1702 = vmatprep.subr.bf16.mxu0 %v1575
    %1703 = vmatpush1.bf16.msra.mxu0 %v1574
    %1704 = vmatprep.subr.bf16.mxu0 %v1577
    %1705 = vmatpush1.bf16.msra.mxu0 %v1576
    %1706 = vmatprep.subr.bf16.mxu0 %v1579
    %1707 = vmatpush1.bf16.msra.mxu0 %v1578
    %1708 = vmatprep.subr.bf16.mxu0 %v1581
    %1709 = vmatpush1.bf16.msra.mxu0 %v1580
    %1710 = vmatprep.subr.bf16.mxu0 %v1583
    %1711 = vmatpush1.bf16.msra.mxu0 %v1582
    %1712 = vmatprep.subr.bf16.mxu0 %v1585
    %1713 = vmatpush1.bf16.msra.mxu0 %v1584
    %1714 = vmatprep.subr.bf16.mxu0 %v1587
    %1715 = vmatpush1.bf16.msra.mxu0 %v1586
    %1716 = vmatprep.subr.bf16.mxu0 %v1589
    %1717 = vmatpush1.bf16.msra.mxu0 %v1588
    %1718 = vmatprep.subr.bf16.mxu0 %v1591
    %1719 = vmatpush1.bf16.msra.mxu0 %v1590
    %1720 = vmatprep.subr.bf16.mxu0 %v1593
    %1721 = vmatpush1.bf16.msra.mxu0 %v1592
    %1722 = vmatprep.subr.bf16.mxu0 %v1595
    %1723 = vmatpush1.bf16.msra.mxu0 %v1594
    %1724 = vmatprep.mubr.bf16.mxu0 %v1293
    %1725 = vmatmul.mubr.bf16.gmra.mrb[0].mxu0 %v1292
    %v1726 = vpop.f32.mrb[0].mxu0
    %v1727 = vadd.f32 0.0, %v1726
    %v1728 = vpop.f32.mrb[0].mxu0
    %v1729 = vadd.f32 0.0, %v1728
    %v1730 = vpop.f32.mrb[0].mxu0
    %v1731 = vadd.f32 0.0, %v1730
    %v1732 = vpop.f32.mrb[0].mxu0
    %v1733 = vadd.f32 0.0, %v1732
    %1734 = vmatprep.mubr.bf16.mxu0 %v1297
    %1735 = vmatmul.mubr.bf16.gmra.mrb[0].mxu0 %v1296
    %v1736 = vpop.f32.mrb[0].mxu0
    %v1737 = vadd.f32 0.0, %v1736
    %v1738 = vpop.f32.mrb[0].mxu0
    %v1739 = vadd.f32 0.0, %v1738
    %v1740 = vpop.f32.mrb[0].mxu0
    %v1741 = vadd.f32 0.0, %v1740
    %v1742 = vpop.f32.mrb[0].mxu0
    %v1743 = vadd.f32 0.0, %v1742
    %1744 = vdwg.mxu0
    %1745 = vmatprep.subr.bf16.mxu0 %v1597
    %1746 = vmatpush1.bf16.msra.mxu0 %v1596
    %1747 = vmatprep.subr.bf16.mxu0 %v1599
    %1748 = vmatpush1.bf16.msra.mxu0 %v1598
    %1749 = vmatprep.subr.bf16.mxu0 %v1601
    %1750 = vmatpush1.bf16.msra.mxu0 %v1600
    %1751 = vmatprep.subr.bf16.mxu0 %v1603
    %1752 = vmatpush1.bf16.msra.mxu0 %v1602
    %1753 = vmatprep.subr.bf16.mxu0 %v1605
    %1754 = vmatpush1.bf16.msra.mxu0 %v1604
    %1755 = vmatprep.subr.bf16.mxu0 %v1607
    %1756 = vmatpush1.bf16.msra.mxu0 %v1606
    %1757 = vmatprep.subr.bf16.mxu0 %v1609
    %1758 = vmatpush1.bf16.msra.mxu0 %v1608
    %1759 = vmatprep.subr.bf16.mxu0 %v1611
    %1760 = vmatpush1.bf16.msra.mxu0 %v1610
    %1761 = vmatprep.subr.bf16.mxu0 %v1613
    %1762 = vmatpush1.bf16.msra.mxu0 %v1612
    %1763 = vmatprep.subr.bf16.mxu0 %v1615
    %1764 = vmatpush1.bf16.msra.mxu0 %v1614
    %1765 = vmatprep.subr.bf16.mxu0 %v1617
    %1766 = vmatpush1.bf16.msra.mxu0 %v1616
    %1767 = vmatprep.subr.bf16.mxu0 %v1619
    %1768 = vmatpush1.bf16.msra.mxu0 %v1618
    %1769 = vmatprep.subr.bf16.mxu0 %v1621
    %1770 = vmatpush1.bf16.msra.mxu0 %v1620
    %1771 = vmatprep.subr.bf16.mxu0 %v1623
    %1772 = vmatpush1.bf16.msra.mxu0 %v1622
    %1773 = vmatprep.subr.bf16.mxu0 %v1625
    %1774 = vmatpush1.bf16.msra.mxu0 %v1624
    %1775 = vmatprep.subr.bf16.mxu0 %v1627
    %1776 = vmatpush1.bf16.msra.mxu0 %v1626
    %1777 = vmatprep.mubr.bf16.mxu0 %v1295
    %1778 = vmatmul.mubr.bf16.gmra.mrb[0].mxu0 %v1294
    %v1779 = vpop.f32.mrb[0].mxu0
    %v1780 = vadd.f32 %v1727, %v1779
    %v1781 = vpop.f32.mrb[0].mxu0
    %v1782 = vadd.f32 %v1729, %v1781
    %v1783 = vpop.f32.mrb[0].mxu0
    %v1784 = vadd.f32 %v1731, %v1783
    %v1785 = vpop.f32.mrb[0].mxu0
    %v1786 = vadd.f32 %v1733, %v1785
    %1787 = vmatprep.mubr.bf16.mxu0 %v1299
    %1788 = vmatmul.mubr.bf16.gmra.mrb[0].mxu0 %v1298
    %v1789 = vpop.f32.mrb[0].mxu0
    %v1790 = vadd.f32 %v1737, %v1789
    %v1791 = vpop.f32.mrb[0].mxu0
    %v1792 = vadd.f32 %v1739, %v1791
    %v1793 = vpop.f32.mrb[0].mxu0
    %v1794 = vadd.f32 %v1741, %v1793
    %v1795 = vpop.f32.mrb[0].mxu0
    %v1796 = vadd.f32 %v1743, %v1795
    %1797 = vdwg.mxu0
    %v1798 = vadd.f32 %v1300, %v1780
    %v1799 = vadd.f32 %v1301, %v1782
    %v1800 = vadd.f32 %v1302, %v1784
    %v1801 = vadd.f32 %v1303, %v1786
    %v1802 = vadd.f32 %v1304, %v1790
    %v1803 = vadd.f32 %v1305, %v1792
    %v1804 = vadd.f32 %v1306, %v1794
    %v1805 = vadd.f32 %v1307, %v1796
    %1806 = vst [vmem:[#allocation3] sm:$0xff] %v1798
    %1807 = vst [vmem:[#allocation3 + $0x8] sm:$0xff] %v1799
    %1808 = vst [vmem:[#allocation3 + $0x10] sm:$0xff] %v1800
    %1809 = vst [vmem:[#allocation3 + $0x18] sm:$0xff] %v1801
    %1810 = vst [vmem:[#allocation3 + $0x20] sm:$0xff] %v1802
    %1811 = vst [vmem:[#allocation3 + $0x28] sm:$0xff] %v1803
    %1812 = vst [vmem:[#allocation3 + $0x30] sm:$0xff] %v1804
    %1813 = vst [vmem:[#allocation3 + $0x38] sm:$0xff] %v1805
    // Predicated region
    $region46: #{llama_like_forward.12} parent=1 // pred_check
      %p1814 = pneg %p87
    $region47: #{llama_like_forward.12} parent=1 // pred_check_branch
      %1816 = sbr.rel (%p1814) target = $region49
    $region48: #{llama_like_forward.12} parent=1 // pred_region
      %v1817 = vld [vmem:[#allocation3] sm:$0xff]
      %v1818 = vld [vmem:[#allocation3 + $0x8] sm:$0xff]
      %v1819 = vld [vmem:[#allocation3 + $0x10] sm:$0xff]
      %v1820 = vld [vmem:[#allocation3 + $0x18] sm:$0xff]
      %v1821 = vld [vmem:[#allocation3 + $0x20] sm:$0xff]
      %v1822 = vld [vmem:[#allocation3 + $0x28] sm:$0xff]
      %v1823 = vld [vmem:[#allocation3 + $0x30] sm:$0xff]
      %v1824 = vld [vmem:[#allocation3 + $0x38] sm:$0xff]
      %v1825 = vld [vmem:[#allocation4] sm:$0xff]
      %v1826 = vld [vmem:[#allocation4 + $0x8] sm:$0xff]
      %v1827 = vld [vmem:[#allocation4 + $0x10] sm:$0xff]
      %v1828 = vld [vmem:[#allocation4 + $0x18] sm:$0xff]
      %v1829 = vunpack.c.l.bf16 %v1825
      %v1830 = vunpack.c.h.bf16 %v1825
      %v1831 = vunpack.c.l.bf16 %v1826
      %v1832 = vunpack.c.h.bf16 %v1826
      %v1833 = vunpack.c.l.bf16 %v1827
      %v1834 = vunpack.c.h.bf16 %v1827
      %v1835 = vunpack.c.l.bf16 %v1828
      %v1836 = vunpack.c.h.bf16 %v1828
      %v1837 = vadd.f32 %v1817, %v1829
      %v1838 = vadd.f32 %v1818, %v1830
      %v1839 = vadd.f32 %v1819, %v1831
      %v1840 = vadd.f32 %v1820, %v1832
      %v1841 = vadd.f32 %v1821, %v1833
      %v1842 = vadd.f32 %v1822, %v1834
      %v1843 = vadd.f32 %v1823, %v1835
      %v1844 = vadd.f32 %v1824, %v1836
      %v1845 = vpack.c.bf16 %v1839, %v1837
      %v1846 = vpack.c.bf16 %v1840, %v1838
      %v1847 = vpack.c.bf16 %v1843, %v1841
      %v1848 = vpack.c.bf16 %v1844, %v1842
      %v1853 = vunpack.c.l.b16 %v1845
      %v1854 = vunpack.c.l.b16 %v1846
      %v1855 = vunpack.c.h.b16 %v1845
      %v1856 = vunpack.c.h.b16 %v1846
      %v1857 = vunpack.c.l.b16 %v1847
      %v1858 = vunpack.c.l.b16 %v1848
      %v1859 = vunpack.c.h.b16 %v1847
      %v1860 = vunpack.c.h.b16 %v1848
      %v1861 = vpack.c.b16 %v1854, %v1853
      %v1862 = vpack.c.b16 %v1856, %v1855
      %v1863 = vpack.c.b16 %v1858, %v1857
      %v1864 = vpack.c.b16 %v1860, %v1859
      %1869 = vst [vmem:[#allocation13] sm:$0xff] %v1861
      %1870 = vst [vmem:[#allocation13 + $0x8] sm:$0xff] %v1862
      %1871 = vst [vmem:[#allocation13 + $0x10] sm:$0xff] %v1863
      %1872 = vst [vmem:[#allocation13 + $0x18] sm:$0xff] %v1864
    $region49: #{llama_like_forward.12} parent=1 // pred_fallthru
      _
    // Predicated region
    $region50: #{llama_like_forward.12} parent=1 // pred_check
      _
    $region51: #{llama_like_forward.12} parent=1 // pred_check_branch
      %1874 = sbr.rel (0) target = $region53
    $region52: #{llama_like_forward.12} parent=1 // pred_region
      %s1876 = ssub.s32 512, 512
      %1877 = vsyncadd [#allocation6], %s1876
      %s1878 = sshll.u32 [#allocation13], 4
      %s1879 = int_to_ptr.vmem [resolvable:$true] %s1878
      %1884 = dma.vmem_to_hbm [thread:$0]  %s1879, 512, %s5, [#allocation6], 128, 128, 8
    $region53: #{llama_like_forward.12} parent=1 // pred_fallthru
      _
    // Predicated region
    $region54: #{llama_like_forward.12} parent=1 // pred_check
      _
    $region55: #{llama_like_forward.12} parent=1 // pred_check_branch
      %1886 = sbr.rel (0) target = $region57
    $region56: #{llama_like_forward.12} parent=1 // pred_region
      %1887 = dma.done [#allocation6], 512
    $region57: #{llama_like_forward.12} parent=1 // pred_fallthru
      _
    %1888 = vsyncpa [#allocation5], 1
    %1889 = vsyncpa [#allocation8], 1
    %1890 = vsyncpa [#allocation11], 1
    %1891 = vsyncpa [#allocation6], 1

</llo_original>
